<compile_context>
chip_gen: v7x
topology: tpu7x:2x2x1
jax: 0.10.0
libtpu: 0.0.40
codegen_flags: <defaults>
</compile_context>

<pallas_src>
import functools

import jax
import jax.numpy as jnp
from jax import lax
from jax.experimental import pallas as pl
from jax.experimental.pallas import tpu as pltpu


def _layernorm(h, w, b, eps=1e-5):
    mu = jnp.mean(h, axis=-1, keepdims=True)
    var = jnp.mean((h - mu) ** 2, axis=-1, keepdims=True)
    return (h - mu) * lax.rsqrt(var + eps) * w + b


def _erf(z):
    # Abramowitz & Stegun 7.1.26 (|abs err| <= 1.5e-7): keeps PyTorch's exact
    # erf-GELU semantics while using only exp + VPU elementwise ops.
    a1, a2, a3, a4, a5 = (0.254829592, -0.284496736, 1.421413741,
                          -1.453152027, 1.061405429)
    p = 0.3275911
    sgn = jnp.where(z >= 0.0, 1.0, -1.0)
    za = jnp.abs(z)
    t = 1.0 / (1.0 + p * za)
    poly = ((((a5 * t + a4) * t + a3) * t + a2) * t + a1) * t
    return sgn * (1.0 - poly * jnp.exp(-za * za))


def _gelu_exact(h):
    # PyTorch nn.GELU() default = exact erf formulation.
    return 0.5 * h * (1.0 + _erf(h * 0.7071067811865476))


def _decoder_block2_kernel(num_heads, tile_rows,
                           x_ref,
                           ln1_w_ref, ln1_b_ref,
                           wq_h_ref, wkv_r_ref,
                           wproj_h_ref, bproj_ref,
                           ln2_w_ref, ln2_b_ref,
                           w1_ref, b1_ref,
                           w2_ref, b2_ref,
                           o_ref,
                           kT_ref, vT_ref):
    N, D = x_ref.shape[1], x_ref.shape[2]
    H = num_heads
    hd = D // H
    TQ = tile_rows
    cdt = kT_ref.dtype                      # bf16 matmul operand dtype

    ln1_w = ln1_w_ref[...]
    ln1_b = ln1_b_ref[...]
    ln2_w = ln2_w_ref[...]
    ln2_b = ln2_b_ref[...]
    bproj = bproj_ref[...]
    b1 = b1_ref[...]
    b2 = b2_ref[...]

    # ---- K / V for the whole sequence, directly in transposed per-head ----
    # layout (H, hd, N).  kvT = Wkv_rows @ LN1(x)^T is expressed as a single
    # rhs-transposed dot_general so no explicit transpose op is emitted, and
    # the scratch stores below are lane-dense (last dim = N).
    x_all = x_ref[0].astype(jnp.float32)                     # (N, D)
    h_all = _layernorm(x_all, ln1_w, ln1_b).astype(cdt)      # (N, D) bf16
    kvt = lax.dot_general(wkv_r_ref[...], h_all,
                          dimension_numbers=(((1,), (1,)), ((), ())),
                          preferred_element_type=jnp.float32)          # (2D, N)
    kT_ref[...] = kvt[:D].reshape(H, hd, N).astype(cdt)      # K^T (H, hd, N)
    vT_ref[...] = kvt[D:].reshape(H, hd, N).astype(cdt)      # V^T (H, hd, N)

    n_tiles = N // TQ

    # ---- fused attention + MLP over sequence-row tiles ---------------------
    def tile_body(t, carry):
        r0 = pl.multiple_of(t * TQ, TQ)
        x_t = x_ref[0, pl.ds(r0, TQ), :].astype(jnp.float32)           # (TQ, D)
        h_t = _layernorm(x_t, ln1_w, ln1_b).astype(cdt)

        # Per-head Q for this row tile (attention scale folded into wq_h);
        # batched over heads so no per-head matmuls / masked stores.
        q_t = jnp.einsum("htd,hdk->htk",
                         jnp.broadcast_to(h_t[None], (H, TQ, D)),
                         wq_h_ref[...],
                         preferred_element_type=jnp.float32).astype(cdt)

        # scores (H, TQ, N) -> softmax over keys -> context (H, TQ, hd)
        s = jnp.einsum("htd,hdk->htk", q_t, kT_ref[...],
                       preferred_element_type=jnp.float32)
        s = s - jnp.max(s, axis=-1, keepdims=True)
        p = jnp.exp(s)
        p = p * pl.reciprocal(jnp.sum(p, axis=-1, keepdims=True), approx=True)
        ctx = jnp.einsum("htk,hdk->htd", p.astype(cdt), vT_ref[...],
                         preferred_element_type=jnp.float32)

        # Head merge folded into the output projection (batched, sum over h).
        pr = jnp.einsum("htd,hdc->htc", ctx.astype(cdt), wproj_h_ref[...],
                        preferred_element_type=jnp.float32)            # (H,TQ,D)
        proj = jnp.sum(pr, axis=0) + bproj                             # (TQ, D)

        y = x_t + proj                      # first residual, kept in f32

        # MLP branch on the same row tile.
        z = _layernorm(y, ln2_w, ln2_b)
        z = jnp.dot(z.astype(cdt), w1_ref[...],
                    preferred_element_type=jnp.float32) + b1
        z = _gelu_exact(z)
        z = jnp.dot(z.astype(cdt), w2_ref[...],
                    preferred_element_type=jnp.float32) + b2

        o_ref[0, pl.ds(r0, TQ), :] = (y + z).astype(o_ref.dtype)
        return carry

    lax.fori_loop(0, n_tiles, tile_body, 0, unroll=n_tiles <= 8)


def prepare_kernel_params(params, *, num_heads, matmul_dtype=jnp.bfloat16):
    """One-time parameter transform.

    * Folds head_dim**-0.5 into the per-head q weight.
    * wq_h:    (H, D, hd)  per-head q projection (bf16).
    * wkv_r:   (2D, D)     row-major [k; v] projection for the transposed
                           K^T/V^T matmul (bf16).
    * wproj_h: (H, hd, D)  per-head slices of the output projection (bf16).
    * MLP matmul weights cast to bf16; LN params / biases stay f32.
    """
    wqkv_t = params["wqkv_t"]                         # (D, 3D) cols = [q|k|v]
    D = wqkv_t.shape[0]
    hd = D // num_heads
    scale = hd ** (-0.5)
    wq_t = wqkv_t[:, :D] * scale
    wq_h = wq_t.reshape(D, num_heads, hd).transpose(1, 0, 2)      # (H, D, hd)
    wkv_r = wqkv_t[:, D:].T                                       # (2D, D)
    wproj_h = params["wproj_t"].reshape(num_heads, hd, D)         # (H, hd, D)
    return {
        "ln1_w": params["ln1_w"], "ln1_b": params["ln1_b"],
        "wq_h": wq_h.astype(matmul_dtype),
        "wkv_r": wkv_r.astype(matmul_dtype),
        "wproj_h": wproj_h.astype(matmul_dtype),
        "bproj": params["bproj"],
        "ln2_w": params["ln2_w"], "ln2_b": params["ln2_b"],
        "w1_t": params["w1_t"].astype(matmul_dtype),
        "b1": params["b1"],
        "w2_t": params["w2_t"].astype(matmul_dtype),
        "b2": params["b2"],
    }


def decoder_block2(x, context, params, *, num_heads=8, tile_rows=None,
                   single_buffer_weights=False):
    """Pallas implementation of DecoderBlock2.forward (skip=False, eval mode).

    `context` is accepted for signature parity but unused (this forward has no
    cross-attention).  `params` must come from prepare_kernel_params().
    `single_buffer_weights=True` (pl.Buffered(1) on the grid-invariant weight
    blocks) is recommended on v7x / large-D deployments.
    """
    del context
    B, N, D = x.shape
    H = num_heads
    assert D % H == 0
    hd = D // H
    Hm = params["w1_t"].shape[1]
    cdt = params["wq_h"].dtype

    # Per-chip VMEM budget (v7x has 64 MiB / TC, v5e/v6e 128 MiB).
    try:
        phys = int(getattr(pltpu.get_tpu_info(), "vmem_capacity_bytes",
                           64 << 20))
    except Exception:  # CPU / interpret fallbacks
        phys = 64 << 20

    if tile_rows is None:
        target = 128 if phys <= (64 << 20) else 256     # smaller tiles on v7x
        tile_rows = N
        if N > target:
            for c in (target, target // 2, 64, 32, 16, 8):
                if N % c == 0:
                    tile_rows = c
                    break
    assert N % tile_rows == 0
    TQ = tile_rows

    def full(shape):
        kw = {}
        if single_buffer_weights:
            # Grid-invariant blocks: one VMEM buffer is enough.
            kw["pipeline_mode"] = pl.Buffered(1)
        return pl.BlockSpec(shape, lambda *_: (0,) * len(shape), **kw)

    weight_keys = ("ln1_w", "ln1_b", "wq_h", "wkv_r", "wproj_h", "bproj",
                   "ln2_w", "ln2_b", "w1_t", "b1", "w2_t", "b2")
    weight_bytes = sum(int(params[k].size) * params[k].dtype.itemsize
                       for k in weight_keys)
    wmul = 1 if single_buffer_weights else 2
    io_bytes = 2 * 2 * N * D * x.dtype.itemsize                 # in + out blocks
    scratch_bytes = 2 * H * hd * N * params["wq_h"].dtype.itemsize
    transient = (2 * N * D * 4                                  # kvT f32 + LN1
                 + 2 * H * TQ * N * 4                           # scores + exp
                 + H * TQ * D * (2 + 4)                         # q bcast + proj heads
                 + TQ * Hm * (4 + 2)                            # MLP hidden
                 + 4 * TQ * D * 4)                              # misc f32 row temps
    est = wmul * weight_bytes + io_bytes + scratch_bytes + 2 * transient + (4 << 20)
    vmem_limit = int(min(max(est, 32 << 20), phys - (8 << 20)))

    kernel = functools.partial(_decoder_block2_kernel, H, TQ)
    return pl.pallas_call(
        kernel,
        out_shape=jax.ShapeDtypeStruct((B, N, D), x.dtype),
        grid_spec=pltpu.PrefetchScalarGridSpec(
            num_scalar_prefetch=0,
            grid=(B,),
            in_specs=[
                pl.BlockSpec((1, N, D), lambda b: (b, 0, 0)),   # x
                full((1, D)), full((1, D)),                     # ln1 w, b
                full((H, D, hd)),                               # per-head Wq (scaled)
                full((2 * D, D)),                               # [Wk; Wv] row-major
                full((H, hd, D)),                               # per-head Wproj
                full((1, D)),                                   # bproj
                full((1, D)), full((1, D)),                     # ln2 w, b
                full((D, Hm)), full((1, Hm)),                   # fc1^T, b1
                full((Hm, D)), full((1, D)),                    # fc2^T, b2
            ],
            out_specs=pl.BlockSpec((1, N, D), lambda b: (b, 0, 0)),
            scratch_shapes=[
                pltpu.VMEM((H, hd, N), cdt),                    # K^T
                pltpu.VMEM((H, hd, N), cdt),                    # V^T
            ]),
        compiler_params=pltpu.CompilerParams(
            dimension_semantics=("parallel",),
            vmem_limit_bytes=vmem_limit),
    )(x,
      params["ln1_w"], params["ln1_b"],
      params["wq_h"], params["wkv_r"],
      params["wproj_h"], params["bproj"],
      params["ln2_w"], params["ln2_b"],
      params["w1_t"], params["b1"],
      params["w2_t"], params["b2"])


# ---------------- plain-JAX reference (for verification only) ----------------
def decoder_block2_ref(x, params, num_heads):
    B, N, D = x.shape
    hd = D // num_heads

    def ln(h, w, b):
        mu = jnp.mean(h, axis=-1, keepdims=True)
        var = jnp.mean((h - mu) ** 2, axis=-1, keepdims=True)
        return (h - mu) / jnp.sqrt(var + 1e-5) * w + b

    h = ln(x, params["ln1_w"][0], params["ln1_b"][0])
    qkv = h @ params["wqkv_t"]                              # (B, N, 3D)
    qkv = qkv.reshape(B, N, 3, num_heads, hd).transpose(2, 0, 3, 1, 4)
    q, k, v = qkv[0], qkv[1], qkv[2]                        # (B, H, N, hd)
    s = jnp.einsum("bhnd,bhmd->bhnm", q, k) * (hd ** -0.5)
    p = jax.nn.softmax(s, axis=-1)
    o = jnp.einsum("bhnm,bhmd->bhnd", p, v)
    o = o.transpose(0, 2, 1, 3).reshape(B, N, D)
    o = o @ params["wproj_t"] + params["bproj"][0]
    x = x + o
    h2 = ln(x, params["ln2_w"][0], params["ln2_b"][0])
    h2 = h2 @ params["w1_t"] + params["b1"][0]
    h2 = jax.nn.gelu(h2, approximate=False)
    h2 = h2 @ params["w2_t"] + params["b2"][0]
    return x + h2


def make_params(key, dim, num_heads, mlp_ratio=4.0):
    Hm = int(dim * mlp_ratio)
    ks = jax.random.split(key, 8)
    std = 0.02
    # PyTorch Linear stores (out, in); pre-transpose to (in, out).
    wqkv = jax.random.normal(ks[0], (3 * dim, dim), jnp.float32) * std
    wproj = jax.random.normal(ks[1], (dim, dim), jnp.float32) * std
    bproj = jax.random.normal(ks[2], (dim,), jnp.float32) * std
    w1 = jax.random.normal(ks[3], (Hm, dim), jnp.float32) * std
    b1 = jax.random.normal(ks[4], (Hm,), jnp.float32) * std
    w2 = jax.random.normal(ks[5], (dim, Hm), jnp.float32) * std
    b2 = jax.random.normal(ks[6], (dim,), jnp.float32) * std
    return {
        "ln1_w": jnp.ones((1, dim), jnp.float32),
        "ln1_b": jnp.zeros((1, dim), jnp.float32),
        "wqkv_t": wqkv.T,                       # (D, 3D), qkv_bias=False
        "wproj_t": wproj.T,                     # (D, D)
        "bproj": bproj.reshape(1, dim),
        "ln2_w": jnp.ones((1, dim), jnp.float32),
        "ln2_b": jnp.zeros((1, dim), jnp.float32),
        "w1_t": w1.T,                           # (D, Hm)
        "b1": b1.reshape(1, Hm),
        "w2_t": w2.T,                           # (Hm, D)
        "b2": b2.reshape(1, dim),
    }


if __name__ == "__main__":
    # D = 128 so residual/output writes are lane-dense (review item on small D).
    B, N, D, H = 2, 8, 128, 8                  # head_dim = 16
    key = jax.random.PRNGKey(0)
    kx, kc, kp = jax.random.split(key, 3)
    x = jax.random.normal(kx, (B, N, D), jnp.float32)
    context = jax.random.normal(kc, (B, N, D), jnp.float32)   # unused by forward
    params = make_params(kp, D, H)
    kparams = prepare_kernel_params(params, num_heads=H)      # one-time prep

    ref = decoder_block2_ref(x, params, H)                    # f32 exact reference

    out = decoder_block2(x, context, kparams, num_heads=H)
    out = jax.block_until_ready(out)

    assert out.shape == (B, N, D)
    # bf16 matmul operands + EUP-approx softmax reciprocal give ~1e-3-level
    # deviations from the f32 reference.
    assert jnp.allclose(out, ref, rtol=1e-2, atol=5e-3), "mismatch vs reference"
    print("KERNEL_OK")
</pallas_src>

<mosaic_0001>
module attributes {stable_mosaic.version = 11 : i64} {
  func.func @_decoder_block2_kernel(%arg0: i32, %arg1: memref<1x8x128xf32, #tpu.memory_space<vmem>>, %arg2: memref<1x128xf32, #tpu.memory_space<vmem>>, %arg3: memref<1x128xf32, #tpu.memory_space<vmem>>, %arg4: memref<8x128x16xbf16, #tpu.memory_space<vmem>>, %arg5: memref<256x128xbf16, #tpu.memory_space<vmem>>, %arg6: memref<8x16x128xbf16, #tpu.memory_space<vmem>>, %arg7: memref<1x128xf32, #tpu.memory_space<vmem>>, %arg8: memref<1x128xf32, #tpu.memory_space<vmem>>, %arg9: memref<1x128xf32, #tpu.memory_space<vmem>>, %arg10: memref<128x512xbf16, #tpu.memory_space<vmem>>, %arg11: memref<1x512xf32, #tpu.memory_space<vmem>>, %arg12: memref<512x128xbf16, #tpu.memory_space<vmem>>, %arg13: memref<1x128xf32, #tpu.memory_space<vmem>>, %arg14: memref<1x8x128xf32, #tpu.memory_space<vmem>>, %arg15: memref<8x16x8xbf16, #tpu.memory_space<vmem>>, %arg16: memref<8x16x8xbf16, #tpu.memory_space<vmem>>) attributes {dimension_semantics = [#tpu.dimension_semantics<parallel>], iteration_bounds = array<i64: 2>, scalar_prefetch = 0 : i64, scratch_operands = 2 : i64, tpu.core_type = #tpu.core_type<tc>, window_params = [{transform_indices = @transform_0, window_bounds = array<i64: 1, 8, 128>}, {pipeline_mode = #tpu.pipeline_mode<synchronous>, transform_indices = @transform_1, window_bounds = array<i64: 1, 128>}, {pipeline_mode = #tpu.pipeline_mode<synchronous>, transform_indices = @transform_2, window_bounds = array<i64: 1, 128>}, {pipeline_mode = #tpu.pipeline_mode<synchronous>, transform_indices = @transform_3, window_bounds = array<i64: 8, 128, 16>}, {pipeline_mode = #tpu.pipeline_mode<synchronous>, transform_indices = @transform_4, window_bounds = array<i64: 256, 128>}, {pipeline_mode = #tpu.pipeline_mode<synchronous>, transform_indices = @transform_5, window_bounds = array<i64: 8, 16, 128>}, {pipeline_mode = #tpu.pipeline_mode<synchronous>, transform_indices = @transform_6, window_bounds = array<i64: 1, 128>}, {pipeline_mode = #tpu.pipeline_mode<synchronous>, transform_indices = @transform_7, window_bounds = array<i64: 1, 128>}, {pipeline_mode = #tpu.pipeline_mode<synchronous>, transform_indices = @transform_8, window_bounds = array<i64: 1, 128>}, {pipeline_mode = #tpu.pipeline_mode<synchronous>, transform_indices = @transform_9, window_bounds = array<i64: 128, 512>}, {pipeline_mode = #tpu.pipeline_mode<synchronous>, transform_indices = @transform_10, window_bounds = array<i64: 1, 512>}, {pipeline_mode = #tpu.pipeline_mode<synchronous>, transform_indices = @transform_11, window_bounds = array<i64: 512, 128>}, {pipeline_mode = #tpu.pipeline_mode<synchronous>, transform_indices = @transform_12, window_bounds = array<i64: 1, 128>}, {transform_indices = @transform_13, window_bounds = array<i64: 1, 8, 128>}]} {
    %c0 = arith.constant 0 : index
    %c0_0 = arith.constant 0 : index
    %0 = vector.load %arg2[%c0, %c0_0] : memref<1x128xf32, #tpu.memory_space<vmem>>, vector<1x128xf32>
    %c0_1 = arith.constant 0 : index
    %c0_2 = arith.constant 0 : index
    %1 = vector.load %arg3[%c0_1, %c0_2] : memref<1x128xf32, #tpu.memory_space<vmem>>, vector<1x128xf32>
    %c0_3 = arith.constant 0 : index
    %c0_4 = arith.constant 0 : index
    %2 = vector.load %arg8[%c0_3, %c0_4] : memref<1x128xf32, #tpu.memory_space<vmem>>, vector<1x128xf32>
    %c0_5 = arith.constant 0 : index
    %c0_6 = arith.constant 0 : index
    %3 = vector.load %arg9[%c0_5, %c0_6] : memref<1x128xf32, #tpu.memory_space<vmem>>, vector<1x128xf32>
    %c0_7 = arith.constant 0 : index
    %c0_8 = arith.constant 0 : index
    %4 = vector.load %arg7[%c0_7, %c0_8] : memref<1x128xf32, #tpu.memory_space<vmem>>, vector<1x128xf32>
    %c0_9 = arith.constant 0 : index
    %c0_10 = arith.constant 0 : index
    %5 = vector.load %arg11[%c0_9, %c0_10] : memref<1x512xf32, #tpu.memory_space<vmem>>, vector<1x512xf32>
    %c0_11 = arith.constant 0 : index
    %c0_12 = arith.constant 0 : index
    %6 = vector.load %arg13[%c0_11, %c0_12] : memref<1x128xf32, #tpu.memory_space<vmem>>, vector<1x128xf32>
    %c0_13 = arith.constant 0 : index
    %c0_14 = arith.constant 0 : index
    %c0_15 = arith.constant 0 : index
    %7 = vector.load %arg1[%c0_13, %c0_14, %c0_15] : memref<1x8x128xf32, #tpu.memory_space<vmem>>, vector<1x8x128xf32>
    %8 = vector.shape_cast %7 : vector<1x8x128xf32> to vector<8x128xf32>
    %cst = arith.constant dense<0.000000e+00> : vector<8xf32>
    %9 = vector.multi_reduction <add>, %8, %cst [1] : vector<8x128xf32> to vector<8xf32>
    %10 = vector.shape_cast %9 : vector<8xf32> to vector<8x1xf32>
    %cst_16 = arith.constant 1.280000e+02 : f32
    %11 = vector.broadcast %cst_16 : f32 to vector<8x1xf32>
    %12 = arith.divf %10, %11 : vector<8x1xf32>
    %13 = vector.broadcast %12 : vector<8x1xf32> to vector<8x128xf32>
    %14 = arith.subf %8, %13 : vector<8x128xf32>
    %15 = arith.mulf %14, %14 : vector<8x128xf32>
    %cst_17 = arith.constant dense<0.000000e+00> : vector<8xf32>
    %16 = vector.multi_reduction <add>, %15, %cst_17 [1] : vector<8x128xf32> to vector<8xf32>
    %17 = vector.shape_cast %16 : vector<8xf32> to vector<8x1xf32>
    %cst_18 = arith.constant 1.280000e+02 : f32
    %18 = vector.broadcast %cst_18 : f32 to vector<8x1xf32>
    %19 = arith.divf %17, %18 : vector<8x1xf32>
    %20 = vector.broadcast %12 : vector<8x1xf32> to vector<8x128xf32>
    %21 = arith.subf %8, %20 : vector<8x128xf32>
    %cst_19 = arith.constant 9.99999974E-6 : f32
    %22 = vector.broadcast %cst_19 : f32 to vector<8x1xf32>
    %23 = arith.addf %19, %22 : vector<8x1xf32>
    %24 = math.rsqrt %23 : vector<8x1xf32>
    %25 = vector.broadcast %24 : vector<8x1xf32> to vector<8x128xf32>
    %26 = arith.mulf %21, %25 : vector<8x128xf32>
    %27 = vector.broadcast %0 : vector<1x128xf32> to vector<8x128xf32>
    %28 = arith.mulf %26, %27 : vector<8x128xf32>
    %29 = vector.broadcast %1 : vector<1x128xf32> to vector<8x128xf32>
    %30 = arith.addf %28, %29 : vector<8x128xf32>
    %31 = arith.truncf %30 : vector<8x128xf32> to vector<8x128xbf16>
    %c0_20 = arith.constant 0 : index
    %c0_21 = arith.constant 0 : index
    %32 = vector.load %arg5[%c0_20, %c0_21] : memref<256x128xbf16, #tpu.memory_space<vmem>>, vector<256x128xbf16>
    %cst_22 = arith.constant dense<0.000000e+00> : vector<256x8xf32>
    %33 = tpu.matmul %32, %31, %cst_22 {dimension_numbers = #tpu.dot_dimension_numbers<[1], [1], [0], [0], [0, 0, 1, 0], [], []>} : vector<256x128xbf16>, vector<8x128xbf16>, vector<256x8xf32> -> vector<256x8xf32>
    %34 = vector.extract_strided_slice %33 {offsets = [0, 0], sizes = [128, 8], strides = [1, 1]} : vector<256x8xf32> to vector<128x8xf32>
    %35 = vector.shape_cast %34 : vector<128x8xf32> to vector<8x16x8xf32>
    %36 = arith.truncf %35 : vector<8x16x8xf32> to vector<8x16x8xbf16>
    %c0_23 = arith.constant 0 : index
    %c0_24 = arith.constant 0 : index
    %c0_25 = arith.constant 0 : index
    %37 = vector.load %arg15[%c0_23, %c0_24, %c0_25] : memref<8x16x8xbf16, #tpu.memory_space<vmem>>, vector<8x16x8xbf16>
    tpu.vector_store %arg15[%c0_23, %c0_24, %c0_25], %36 {strides = array<i32>} : memref<8x16x8xbf16, #tpu.memory_space<vmem>>, vector<8x16x8xbf16>,
    %38 = vector.extract_strided_slice %33 {offsets = [128, 0], sizes = [128, 8], strides = [1, 1]} : vector<256x8xf32> to vector<128x8xf32>
    %39 = vector.shape_cast %38 : vector<128x8xf32> to vector<8x16x8xf32>
    %40 = arith.truncf %39 : vector<8x16x8xf32> to vector<8x16x8xbf16>
    %c0_26 = arith.constant 0 : index
    %c0_27 = arith.constant 0 : index
    %c0_28 = arith.constant 0 : index
    %41 = vector.load %arg16[%c0_26, %c0_27, %c0_28] : memref<8x16x8xbf16, #tpu.memory_space<vmem>>, vector<8x16x8xbf16>
    tpu.vector_store %arg16[%c0_26, %c0_27, %c0_28], %40 {strides = array<i32>} : memref<8x16x8xbf16, #tpu.memory_space<vmem>>, vector<8x16x8xbf16>,
    %c0_i32 = arith.constant 0 : i32
    %c8_i32 = arith.constant 8 : i32
    %42 = arith.muli %c0_i32, %c8_i32 : i32
    %43 = tpu.assume_multiple %42, 8 : i32
    %c0_29 = arith.constant 0 : index
    %44 = arith.index_cast %43 : i32 to index
    %c0_30 = arith.constant 0 : index
    %45 = vector.load %arg1[%c0_29, %44, %c0_30] : memref<1x8x128xf32, #tpu.memory_space<vmem>>, vector<1x8x128xf32>
    %46 = vector.shape_cast %45 : vector<1x8x128xf32> to vector<8x128xf32>
    %cst_31 = arith.constant dense<0.000000e+00> : vector<8xf32>
    %47 = vector.multi_reduction <add>, %46, %cst_31 [1] : vector<8x128xf32> to vector<8xf32>
    %48 = vector.shape_cast %47 : vector<8xf32> to vector<8x1xf32>
    %cst_32 = arith.constant 1.280000e+02 : f32
    %49 = vector.broadcast %cst_32 : f32 to vector<8x1xf32>
    %50 = arith.divf %48, %49 : vector<8x1xf32>
    %51 = vector.broadcast %50 : vector<8x1xf32> to vector<8x128xf32>
    %52 = arith.subf %46, %51 : vector<8x128xf32>
    %53 = arith.mulf %52, %52 : vector<8x128xf32>
    %cst_33 = arith.constant dense<0.000000e+00> : vector<8xf32>
    %54 = vector.multi_reduction <add>, %53, %cst_33 [1] : vector<8x128xf32> to vector<8xf32>
    %55 = vector.shape_cast %54 : vector<8xf32> to vector<8x1xf32>
    %cst_34 = arith.constant 1.280000e+02 : f32
    %56 = vector.broadcast %cst_34 : f32 to vector<8x1xf32>
    %57 = arith.divf %55, %56 : vector<8x1xf32>
    %58 = vector.broadcast %50 : vector<8x1xf32> to vector<8x128xf32>
    %59 = arith.subf %46, %58 : vector<8x128xf32>
    %cst_35 = arith.constant 9.99999974E-6 : f32
    %60 = vector.broadcast %cst_35 : f32 to vector<8x1xf32>
    %61 = arith.addf %57, %60 : vector<8x1xf32>
    %62 = math.rsqrt %61 : vector<8x1xf32>
    %63 = vector.broadcast %62 : vector<8x1xf32> to vector<8x128xf32>
    %64 = arith.mulf %59, %63 : vector<8x128xf32>
    %65 = vector.broadcast %0 : vector<1x128xf32> to vector<8x128xf32>
    %66 = arith.mulf %64, %65 : vector<8x128xf32>
    %67 = vector.broadcast %1 : vector<1x128xf32> to vector<8x128xf32>
    %68 = arith.addf %66, %67 : vector<8x128xf32>
    %69 = arith.truncf %68 : vector<8x128xf32> to vector<8x128xbf16>
    %70 = vector.shape_cast %69 : vector<8x128xbf16> to vector<1x8x128xbf16>
    %71 = vector.shape_cast %70 : vector<1x8x128xbf16> to vector<1x8x128xbf16>
    %72 = vector.broadcast %71 : vector<1x8x128xbf16> to vector<8x8x128xbf16>
    %c0_36 = arith.constant 0 : index
    %c0_37 = arith.constant 0 : index
    %c0_38 = arith.constant 0 : index
    %73 = vector.load %arg4[%c0_36, %c0_37, %c0_38] : memref<8x128x16xbf16, #tpu.memory_space<vmem>>, vector<8x128x16xbf16>
    "tpu.trace_start"() <{level = 10 : i32, message = "htd,hdk->htk"}> : () -> ()
    %cst_39 = arith.constant dense<0.000000e+00> : vector<8x8x16xf32>
    %74 = tpu.matmul %72, %73, %cst_39 {dimension_numbers = #tpu.dot_dimension_numbers<[2], [1], [1], [2], [0, 0, 0, 1, 1, 2], [0], [0]>} : vector<8x8x128xbf16>, vector<8x128x16xbf16>, vector<8x8x16xf32> -> vector<8x8x16xf32>
    "tpu.trace_stop"() : () -> ()
    %75 = arith.truncf %74 : vector<8x8x16xf32> to vector<8x8x16xbf16>
    %c0_40 = arith.constant 0 : index
    %c0_41 = arith.constant 0 : index
    %c0_42 = arith.constant 0 : index
    %76 = vector.load %arg15[%c0_40, %c0_41, %c0_42] : memref<8x16x8xbf16, #tpu.memory_space<vmem>>, vector<8x16x8xbf16>
    "tpu.trace_start"() <{level = 10 : i32, message = "htd,hdk->htk"}> : () -> ()
    %cst_43 = arith.constant dense<0.000000e+00> : vector<8x8x8xf32>
    %77 = tpu.matmul %75, %76, %cst_43 {dimension_numbers = #tpu.dot_dimension_numbers<[2], [1], [1], [2], [0, 0, 0, 1, 1, 2], [0], [0]>} : vector<8x8x16xbf16>, vector<8x16x8xbf16>, vector<8x8x8xf32> -> vector<8x8x8xf32>
    "tpu.trace_stop"() : () -> ()
    %cst_44 = arith.constant dense<0xFF800000> : vector<8x8xf32>
    %78 = vector.multi_reduction <maximumf>, %77, %cst_44 [2] : vector<8x8x8xf32> to vector<8x8xf32>
    %79 = vector.shape_cast %78 : vector<8x8xf32> to vector<8x8x1xf32>
    %80 = vector.broadcast %79 : vector<8x8x1xf32> to vector<8x8x8xf32>
    %81 = arith.subf %77, %80 : vector<8x8x8xf32>
    %82 = math.exp %81 : vector<8x8x8xf32>
    %cst_45 = arith.constant dense<0.000000e+00> : vector<8x8xf32>
    %83 = vector.multi_reduction <add>, %82, %cst_45 [2] : vector<8x8x8xf32> to vector<8x8xf32>
    %84 = vector.shape_cast %83 : vector<8x8xf32> to vector<8x8x1xf32>
    %85 = tpu.reciprocal %84 {approx = true} : vector<8x8x1xf32> -> vector<8x8x1xf32>
    %86 = vector.broadcast %85 : vector<8x8x1xf32> to vector<8x8x8xf32>
    %87 = arith.mulf %82, %86 : vector<8x8x8xf32>
    %88 = arith.truncf %87 : vector<8x8x8xf32> to vector<8x8x8xbf16>
    %c0_46 = arith.constant 0 : index
    %c0_47 = arith.constant 0 : index
    %c0_48 = arith.constant 0 : index
    %89 = vector.load %arg16[%c0_46, %c0_47, %c0_48] : memref<8x16x8xbf16, #tpu.memory_space<vmem>>, vector<8x16x8xbf16>
    "tpu.trace_start"() <{level = 10 : i32, message = "htk,hdk->htd"}> : () -> ()
    %cst_49 = arith.constant dense<0.000000e+00> : vector<8x8x16xf32>
    %90 = tpu.matmul %88, %89, %cst_49 {dimension_numbers = #tpu.dot_dimension_numbers<[2], [2], [1], [1], [0, 0, 0, 1, 1, 1], [0], [0]>} : vector<8x8x8xbf16>, vector<8x16x8xbf16>, vector<8x8x16xf32> -> vector<8x8x16xf32>
    "tpu.trace_stop"() : () -> ()
    %91 = arith.truncf %90 : vector<8x8x16xf32> to vector<8x8x16xbf16>
    %c0_50 = arith.constant 0 : index
    %c0_51 = arith.constant 0 : index
    %c0_52 = arith.constant 0 : index
    %92 = vector.load %arg6[%c0_50, %c0_51, %c0_52] : memref<8x16x128xbf16, #tpu.memory_space<vmem>>, vector<8x16x128xbf16>
    "tpu.trace_start"() <{level = 10 : i32, message = "htd,hdc->htc"}> : () -> ()
    %cst_53 = arith.constant dense<0.000000e+00> : vector<8x8x128xf32>
    %93 = tpu.matmul %91, %92, %cst_53 {dimension_numbers = #tpu.dot_dimension_numbers<[2], [1], [1], [2], [0, 0, 0, 1, 1, 2], [0], [0]>} : vector<8x8x16xbf16>, vector<8x16x128xbf16>, vector<8x8x128xf32> -> vector<8x8x128xf32>
    "tpu.trace_stop"() : () -> ()
    %cst_54 = arith.constant dense<0.000000e+00> : vector<8x128xf32>
    %94 = vector.multi_reduction <add>, %93, %cst_54 [0] : vector<8x8x128xf32> to vector<8x128xf32>
    %95 = vector.broadcast %4 : vector<1x128xf32> to vector<8x128xf32>
    %96 = arith.addf %94, %95 : vector<8x128xf32>
    %97 = arith.addf %46, %96 : vector<8x128xf32>
    %cst_55 = arith.constant dense<0.000000e+00> : vector<8xf32>
    %98 = vector.multi_reduction <add>, %97, %cst_55 [1] : vector<8x128xf32> to vector<8xf32>
    %99 = vector.shape_cast %98 : vector<8xf32> to vector<8x1xf32>
    %cst_56 = arith.constant 1.280000e+02 : f32
    %100 = vector.broadcast %cst_56 : f32 to vector<8x1xf32>
    %101 = arith.divf %99, %100 : vector<8x1xf32>
    %102 = vector.broadcast %101 : vector<8x1xf32> to vector<8x128xf32>
    %103 = arith.subf %97, %102 : vector<8x128xf32>
    %104 = arith.mulf %103, %103 : vector<8x128xf32>
    %cst_57 = arith.constant dense<0.000000e+00> : vector<8xf32>
    %105 = vector.multi_reduction <add>, %104, %cst_57 [1] : vector<8x128xf32> to vector<8xf32>
    %106 = vector.shape_cast %105 : vector<8xf32> to vector<8x1xf32>
    %cst_58 = arith.constant 1.280000e+02 : f32
    %107 = vector.broadcast %cst_58 : f32 to vector<8x1xf32>
    %108 = arith.divf %106, %107 : vector<8x1xf32>
    %109 = vector.broadcast %101 : vector<8x1xf32> to vector<8x128xf32>
    %110 = arith.subf %97, %109 : vector<8x128xf32>
    %cst_59 = arith.constant 9.99999974E-6 : f32
    %111 = vector.broadcast %cst_59 : f32 to vector<8x1xf32>
    %112 = arith.addf %108, %111 : vector<8x1xf32>
    %113 = math.rsqrt %112 : vector<8x1xf32>
    %114 = vector.broadcast %113 : vector<8x1xf32> to vector<8x128xf32>
    %115 = arith.mulf %110, %114 : vector<8x128xf32>
    %116 = vector.broadcast %2 : vector<1x128xf32> to vector<8x128xf32>
    %117 = arith.mulf %115, %116 : vector<8x128xf32>
    %118 = vector.broadcast %3 : vector<1x128xf32> to vector<8x128xf32>
    %119 = arith.addf %117, %118 : vector<8x128xf32>
    %120 = arith.truncf %119 : vector<8x128xf32> to vector<8x128xbf16>
    %c0_60 = arith.constant 0 : index
    %c0_61 = arith.constant 0 : index
    %121 = vector.load %arg10[%c0_60, %c0_61] : memref<128x512xbf16, #tpu.memory_space<vmem>>, vector<128x512xbf16>
    %cst_62 = arith.constant dense<0.000000e+00> : vector<8x512xf32>
    %122 = tpu.matmul %120, %121, %cst_62 {dimension_numbers = #tpu.dot_dimension_numbers<[1], [0], [0], [1], [0, 0, 1, 1], [], []>} : vector<8x128xbf16>, vector<128x512xbf16>, vector<8x512xf32> -> vector<8x512xf32>
    %123 = vector.broadcast %5 : vector<1x512xf32> to vector<8x512xf32>
    %124 = arith.addf %122, %123 : vector<8x512xf32>
    %cst_63 = arith.constant 5.000000e-01 : f32
    %125 = vector.broadcast %cst_63 : f32 to vector<8x512xf32>
    %126 = arith.mulf %125, %124 : vector<8x512xf32>
    %cst_64 = arith.constant 0.707106769 : f32
    %127 = vector.broadcast %cst_64 : f32 to vector<8x512xf32>
    %128 = arith.mulf %124, %127 : vector<8x512xf32>
    %cst_65 = arith.constant 0.000000e+00 : f32
    %129 = vector.broadcast %cst_65 : f32 to vector<8x512xf32>
    %130 = arith.cmpf oge, %128, %129 : vector<8x512xf32>
    %cst_66 = arith.constant 1.000000e+00 : f32
    %cst_67 = arith.constant -1.000000e+00 : f32
    %131 = vector.broadcast %cst_66 : f32 to vector<8x512xf32>
    %132 = vector.broadcast %cst_67 : f32 to vector<8x512xf32>
    %133 = arith.select %130, %131, %132 : vector<8x512xi1>, vector<8x512xf32>
    %134 = math.absf %128 : vector<8x512xf32>
    %cst_68 = arith.constant 0.327591091 : f32
    %135 = vector.broadcast %cst_68 : f32 to vector<8x512xf32>
    %136 = arith.mulf %135, %134 : vector<8x512xf32>
    %cst_69 = arith.constant 1.000000e+00 : f32
    %137 = vector.broadcast %cst_69 : f32 to vector<8x512xf32>
    %138 = arith.addf %137, %136 : vector<8x512xf32>
    %cst_70 = arith.constant 1.000000e+00 : f32
    %139 = vector.broadcast %cst_70 : f32 to vector<8x512xf32>
    %140 = arith.divf %139, %138 : vector<8x512xf32>
    %cst_71 = arith.constant 1.06140542 : f32
    %141 = vector.broadcast %cst_71 : f32 to vector<8x512xf32>
    %142 = arith.mulf %141, %140 : vector<8x512xf32>
    %cst_72 = arith.constant -1.45315206 : f32
    %143 = vector.broadcast %cst_72 : f32 to vector<8x512xf32>
    %144 = arith.addf %142, %143 : vector<8x512xf32>
    %145 = arith.mulf %144, %140 : vector<8x512xf32>
    %cst_73 = arith.constant 1.42141378 : f32
    %146 = vector.broadcast %cst_73 : f32 to vector<8x512xf32>
    %147 = arith.addf %145, %146 : vector<8x512xf32>
    %148 = arith.mulf %147, %140 : vector<8x512xf32>
    %cst_74 = arith.constant -0.284496725 : f32
    %149 = vector.broadcast %cst_74 : f32 to vector<8x512xf32>
    %150 = arith.addf %148, %149 : vector<8x512xf32>
    %151 = arith.mulf %150, %140 : vector<8x512xf32>
    %cst_75 = arith.constant 0.254829586 : f32
    %152 = vector.broadcast %cst_75 : f32 to vector<8x512xf32>
    %153 = arith.addf %151, %152 : vector<8x512xf32>
    %154 = arith.mulf %153, %140 : vector<8x512xf32>
    %cst_76 = arith.constant 0.000000e+00 : f32
    %155 = vector.broadcast %cst_76 : f32 to vector<8x512xf32>
    %156 = arith.subf %155, %134 : vector<8x512xf32>
    %157 = arith.mulf %156, %134 : vector<8x512xf32>
    %158 = math.exp %157 : vector<8x512xf32>
    %159 = arith.mulf %154, %158 : vector<8x512xf32>
    %cst_77 = arith.constant 1.000000e+00 : f32
    %160 = vector.broadcast %cst_77 : f32 to vector<8x512xf32>
    %161 = arith.subf %160, %159 : vector<8x512xf32>
    %162 = arith.mulf %133, %161 : vector<8x512xf32>
    %cst_78 = arith.constant 1.000000e+00 : f32
    %163 = vector.broadcast %cst_78 : f32 to vector<8x512xf32>
    %164 = arith.addf %163, %162 : vector<8x512xf32>
    %165 = arith.mulf %126, %164 : vector<8x512xf32>
    %166 = arith.truncf %165 : vector<8x512xf32> to vector<8x512xbf16>
    %c0_79 = arith.constant 0 : index
    %c0_80 = arith.constant 0 : index
    %167 = vector.load %arg12[%c0_79, %c0_80] : memref<512x128xbf16, #tpu.memory_space<vmem>>, vector<512x128xbf16>
    %cst_81 = arith.constant dense<0.000000e+00> : vector<8x128xf32>
    %168 = tpu.matmul %166, %167, %cst_81 {dimension_numbers = #tpu.dot_dimension_numbers<[1], [0], [0], [1], [0, 0, 1, 1], [], []>} : vector<8x512xbf16>, vector<512x128xbf16>, vector<8x128xf32> -> vector<8x128xf32>
    %169 = vector.broadcast %6 : vector<1x128xf32> to vector<8x128xf32>
    %170 = arith.addf %168, %169 : vector<8x128xf32>
    %171 = arith.addf %97, %170 : vector<8x128xf32>
    %c0_82 = arith.constant 0 : index
    %172 = arith.index_cast %43 : i32 to index
    %c0_83 = arith.constant 0 : index
    %173 = vector.load %arg14[%c0_82, %172, %c0_83] : memref<1x8x128xf32, #tpu.memory_space<vmem>>, vector<1x8x128xf32>
    %174 = vector.shape_cast %173 : vector<1x8x128xf32> to vector<8x128xf32>
    %175 = vector.shape_cast %171 : vector<8x128xf32> to vector<1x8x128xf32>
    tpu.vector_store %arg14[%c0_82, %172, %c0_83], %175 {strides = array<i32>} : memref<1x8x128xf32, #tpu.memory_space<vmem>>, vector<1x8x128xf32>,
    %c1_i32 = arith.constant 1 : i32
    return
  }
  func.func @transform_0(%arg0: i32) -> (i32, i32, i32) {
    %c0_i32 = arith.constant 0 : i32
    %c0_i32_0 = arith.constant 0 : i32
    %c0_i32_1 = arith.constant 0 : i32
    return %arg0, %c0_i32, %c0_i32_0 : i32, i32, i32
  }
  func.func @transform_1(%arg0: i32) -> (i32, i32) {
    %c0_i32 = arith.constant 0 : i32
    %c0_i32_0 = arith.constant 0 : i32
    %c0_i32_1 = arith.constant 0 : i32
    return %c0_i32, %c0_i32_0 : i32, i32
  }
  func.func @transform_2(%arg0: i32) -> (i32, i32) {
    %c0_i32 = arith.constant 0 : i32
    %c0_i32_0 = arith.constant 0 : i32
    %c0_i32_1 = arith.constant 0 : i32
    return %c0_i32, %c0_i32_0 : i32, i32
  }
  func.func @transform_3(%arg0: i32) -> (i32, i32, i32) {
    %c0_i32 = arith.constant 0 : i32
    %c0_i32_0 = arith.constant 0 : i32
    %c0_i32_1 = arith.constant 0 : i32
    %c0_i32_2 = arith.constant 0 : i32
    return %c0_i32, %c0_i32_0, %c0_i32_1 : i32, i32, i32
  }
  func.func @transform_4(%arg0: i32) -> (i32, i32) {
    %c0_i32 = arith.constant 0 : i32
    %c0_i32_0 = arith.constant 0 : i32
    %c0_i32_1 = arith.constant 0 : i32
    return %c0_i32, %c0_i32_0 : i32, i32
  }
  func.func @transform_5(%arg0: i32) -> (i32, i32, i32) {
    %c0_i32 = arith.constant 0 : i32
    %c0_i32_0 = arith.constant 0 : i32
    %c0_i32_1 = arith.constant 0 : i32
    %c0_i32_2 = arith.constant 0 : i32
    return %c0_i32, %c0_i32_0, %c0_i32_1 : i32, i32, i32
  }
  func.func @transform_6(%arg0: i32) -> (i32, i32) {
    %c0_i32 = arith.constant 0 : i32
    %c0_i32_0 = arith.constant 0 : i32
    %c0_i32_1 = arith.constant 0 : i32
    return %c0_i32, %c0_i32_0 : i32, i32
  }
  func.func @transform_7(%arg0: i32) -> (i32, i32) {
    %c0_i32 = arith.constant 0 : i32
    %c0_i32_0 = arith.constant 0 : i32
    %c0_i32_1 = arith.constant 0 : i32
    return %c0_i32, %c0_i32_0 : i32, i32
  }
  func.func @transform_8(%arg0: i32) -> (i32, i32) {
    %c0_i32 = arith.constant 0 : i32
    %c0_i32_0 = arith.constant 0 : i32
    %c0_i32_1 = arith.constant 0 : i32
    return %c0_i32, %c0_i32_0 : i32, i32
  }
  func.func @transform_9(%arg0: i32) -> (i32, i32) {
    %c0_i32 = arith.constant 0 : i32
    %c0_i32_0 = arith.constant 0 : i32
    %c0_i32_1 = arith.constant 0 : i32
    return %c0_i32, %c0_i32_0 : i32, i32
  }
  func.func @transform_10(%arg0: i32) -> (i32, i32) {
    %c0_i32 = arith.constant 0 : i32
    %c0_i32_0 = arith.constant 0 : i32
    %c0_i32_1 = arith.constant 0 : i32
    return %c0_i32, %c0_i32_0 : i32, i32
  }
  func.func @transform_11(%arg0: i32) -> (i32, i32) {
    %c0_i32 = arith.constant 0 : i32
    %c0_i32_0 = arith.constant 0 : i32
    %c0_i32_1 = arith.constant 0 : i32
    return %c0_i32, %c0_i32_0 : i32, i32
  }
  func.func @transform_12(%arg0: i32) -> (i32, i32) {
    %c0_i32 = arith.constant 0 : i32
    %c0_i32_0 = arith.constant 0 : i32
    %c0_i32_1 = arith.constant 0 : i32
    return %c0_i32, %c0_i32_0 : i32, i32
  }
  func.func @transform_13(%arg0: i32) -> (i32, i32, i32) {
    %c0_i32 = arith.constant 0 : i32
    %c0_i32_0 = arith.constant 0 : i32
    %c0_i32_1 = arith.constant 0 : i32
    return %arg0, %c0_i32, %c0_i32_0 : i32, i32, i32
  }
}

</mosaic_0001>

<llo_original>
// kernel: tpu_custom_call.1
$region0: #{tpu_custom_call.1}
  #allocation0 [shape = 'u32[]', space=smem, size = 0x4, offset = 0x4, fixed_abs, tag = 'smem constant byte address 0x4 - core index']
  #allocation1 [shape = 'u32[144,128]{1,0:T(1,128)}', space=vmem, size = 0x12000, scoped, tag = 'internal scratch']
  #allocation2 [shape = 'bf16[8,16,8]{2,1,0:T(16,128)(2,1)}', space=vmem, size = 0x8000, scoped, tag = 'scratch operand']
  #allocation3 [shape = 'bf16[8,16,8]{2,1,0:T(16,128)(2,1)}', space=vmem, size = 0x8000, scoped, tag = 'scratch operand']
  %s0 = inlined_call_operand.hbm [shape: f32[2,8,128], index: 0, kind: input, shape index: {}]
  %s1 = inlined_call_operand.hbm [shape: f32[1,128], index: 1, kind: input, shape index: {}]
  %s2 = inlined_call_operand.vmem [shape: f32[1,128], index: 2, kind: input, shape index: {}]
  %s3 = inlined_call_operand.vmem [shape: bf16[8,128,16], index: 3, kind: input, shape index: {}]
  %s4 = inlined_call_operand.hbm [shape: bf16[256,128], index: 4, kind: input, shape index: {}]
  %s5 = inlined_call_operand.vmem [shape: bf16[8,16,128], index: 5, kind: input, shape index: {}]
  %s6 = inlined_call_operand.vmem [shape: f32[1,128], index: 6, kind: input, shape index: {}]
  %s7 = inlined_call_operand.vmem [shape: f32[1,128], index: 7, kind: input, shape index: {}]
  %s8 = inlined_call_operand.vmem [shape: f32[1,128], index: 8, kind: input, shape index: {}]
  %s9 = inlined_call_operand.vmem [shape: bf16[128,512], index: 9, kind: input, shape index: {}]
  %s10 = inlined_call_operand.vmem [shape: f32[1,512], index: 10, kind: input, shape index: {}]
  %s11 = inlined_call_operand.vmem [shape: bf16[512,128], index: 11, kind: input, shape index: {}]
  %s12 = inlined_call_operand.vmem [shape: f32[1,128], index: 12, kind: input, shape index: {}]
  %s13 = inlined_call_operand.hbm [shape: f32[2,8,128], index: 13, kind: output, shape index: {}]
  %s14 = sld [smem:[#allocation0]]
  $region97: #{tpu_custom_call.1} parent=0
    _
  %s16 = ssub.s32 1, %s14
  %s17 = scalar_select 0, %s16, %s14
  $region1: #{tpu_custom_call.1} parent=0
    #allocation4 [shape = 'u8[8192]{0}', space=vmem, size = 0x2000, scoped, tag = 'input window, operand 0']
    #allocation5 [shape = 's32[2]{0}', space=sflag, size = 0x8, scoped, tag = 'scoped memory for tpu_custom_call.1']
    #allocation6 [shape = 's32[2]{0}', space=sflag, size = 0x8, scoped, tag = 'scoped memory for tpu_custom_call.1']
    #allocation7 [shape = 'u8[512]{0}', space=vmem, size = 0x400, scoped, tag = 'input window, operand 1, single buffered']
    #allocation8 [shape = 's32[1]{0}', space=sflag, size = 0x4, scoped, tag = 'scoped memory for tpu_custom_call.1']
    #allocation9 [shape = 'u8[65536]{0}', space=vmem, size = 0x10000, scoped, tag = 'input window, operand 4, single buffered']
    #allocation10 [shape = 'u8[8192]{0}', space=vmem, size = 0x2000, scoped, tag = 'output window, operand 0']
    %18 = vsyncpa [#allocation5], 0
    %s19 = scalar_lea.sflag [#allocation5], 1
    %20 = vsyncpa %s19, 0
    %21 = vsyncpa [#allocation8], 0
    %22 = vsyncpa [#allocation6], 0
    %s23 = scalar_lea.sflag [#allocation6], 1
    %24 = vsyncpa %s23, 0
    loop: start=0, step=1, limit=4
    $region2: #{tpu_custom_call.1} parent=1 // loop_pre_header
      _
    $region3: #{tpu_custom_call.1} parent=1 // loop_header
      %s26 = sphi 0, %s30
      %p27 = scmp.ge.s32.totalorder %s26, 4
      %s36 = sphi 0, %s38
      %s39 = sphi 0, %s36
      %s40 = sphi 0, %s39
      %s56 = sphi 0, %s40
      %s60 = sphi 0, %s60
      %s62 = sphi 0, %s60
      %s63 = sphi 0, %s62
      %s77 = sphi 0, %s63
      %s81 = sphi 0, %s81
      %s83 = sphi 0, %s81
      %s84 = sphi 0, %s83
      %s98 = sphi 0, %s84
      %s102 = sphi 0, %s102
      %s104 = sphi 0, %s102
      %s105 = sphi 0, %s104
      %s119 = sphi 0, %s105
      %s123 = sphi 0, %s123
      %s125 = sphi 0, %s123
      %s126 = sphi 0, %s125
      %s140 = sphi 0, %s126
      %s144 = sphi 0, %s144
      %s146 = sphi 0, %s144
      %s147 = sphi 0, %s146
      %s161 = sphi 0, %s147
      %s165 = sphi 0, %s165
      %s167 = sphi 0, %s165
      %s168 = sphi 0, %s167
      %s182 = sphi 0, %s168
      %s186 = sphi 0, %s186
      %s188 = sphi 0, %s186
      %s189 = sphi 0, %s188
      %s203 = sphi 0, %s189
      %s207 = sphi 0, %s207
      %s209 = sphi 0, %s207
      %s210 = sphi 0, %s209
      %s224 = sphi 0, %s210
      %s228 = sphi 0, %s228
      %s230 = sphi 0, %s228
      %s231 = sphi 0, %s230
      %s245 = sphi 0, %s231
      %s249 = sphi 0, %s249
      %s251 = sphi 0, %s249
      %s252 = sphi 0, %s251
      %s266 = sphi 0, %s252
      %s270 = sphi 0, %s270
      %s272 = sphi 0, %s270
      %s273 = sphi 0, %s272
      %s287 = sphi 0, %s273
      %s291 = sphi 0, %s291
      %s293 = sphi 0, %s291
      %s294 = sphi 0, %s293
      %s308 = sphi 0, %s294
      %s314 = sphi 0, %s316
      %s317 = sphi 0, %s314
      %s318 = sphi 0, %s317
      %s334 = sphi 0, %s318
    $region4: #{tpu_custom_call.1} parent=1 // loop_header_branch
      %29 = sbr.rel (%p27) target = $region8
    $region5: #{tpu_custom_call.1} parent=1 // loop_body
      %s31 = ssub.s32 %s26, 1
      %s32 = ssub.s32 %s26, 2
      %s33 = sadd.s32 %s26, 1
      %s34 = ssub.s32 %s26, %s33
      %p35 = scmp.eq.s32.totalorder %s34, 0
      %s37 = sadd.s32 %s36, 1
      %s38 = scalar_select %p35, %s36, %s37
      %p41 = pneg %p35
      %p42 = scmp.eq.s32.totalorder %s26, 1
      %p43 = por %p41, %p42
      %p44 = scmp.ne.s32.totalorder %s36, %s39
      %p45 = scmp.eq.s32.totalorder %s26, 0
      %p46 = por %p44, %p45
      %p47 = scmp.ne.s32.totalorder %s36, %s39
      %p48 = scmp.eq.s32.totalorder %s31, 1
      %p49 = por %p47, %p48
      %p50 = scmp.ne.s32.totalorder %s39, %s40
      %p51 = scmp.eq.s32.totalorder %s31, 0
      %p52 = por %p50, %p51
      %p53 = scmp.ne.s32.totalorder %s39, %s40
      %p54 = scmp.eq.s32.totalorder %s32, 1
      %p55 = por %p53, %p54
      %p57 = scmp.ne.s32.totalorder %s40, %s56
      %p58 = scmp.eq.s32.totalorder %s32, 0
      %p59 = por %p57, %p58
      %s61 = sadd.s32 %s60, 1
      %p64 = scmp.eq.s32.totalorder %s26, 1
      %p65 = scmp.ne.s32.totalorder %s60, %s62
      %p66 = scmp.eq.s32.totalorder %s26, 0
      %p67 = por %p65, %p66
      %p68 = scmp.ne.s32.totalorder %s60, %s62
      %p69 = scmp.eq.s32.totalorder %s31, 1
      %p70 = por %p68, %p69
      %p71 = scmp.ne.s32.totalorder %s62, %s63
      %p72 = scmp.eq.s32.totalorder %s31, 0
      %p73 = por %p71, %p72
      %p74 = scmp.ne.s32.totalorder %s62, %s63
      %p75 = scmp.eq.s32.totalorder %s32, 1
      %p76 = por %p74, %p75
      %p78 = scmp.ne.s32.totalorder %s63, %s77
      %p79 = scmp.eq.s32.totalorder %s32, 0
      %p80 = por %p78, %p79
      %s82 = sadd.s32 %s81, 1
      %p85 = scmp.eq.s32.totalorder %s26, 1
      %p86 = scmp.ne.s32.totalorder %s81, %s83
      %p87 = scmp.eq.s32.totalorder %s26, 0
      %p88 = por %p86, %p87
      %p89 = scmp.ne.s32.totalorder %s81, %s83
      %p90 = scmp.eq.s32.totalorder %s31, 1
      %p91 = por %p89, %p90
      %p92 = scmp.ne.s32.totalorder %s83, %s84
      %p93 = scmp.eq.s32.totalorder %s31, 0
      %p94 = por %p92, %p93
      %p95 = scmp.ne.s32.totalorder %s83, %s84
      %p96 = scmp.eq.s32.totalorder %s32, 1
      %p97 = por %p95, %p96
      %p99 = scmp.ne.s32.totalorder %s84, %s98
      %p100 = scmp.eq.s32.totalorder %s32, 0
      %p101 = por %p99, %p100
      %s103 = sadd.s32 %s102, 1
      %p106 = scmp.eq.s32.totalorder %s26, 1
      %p107 = scmp.ne.s32.totalorder %s102, %s104
      %p108 = scmp.eq.s32.totalorder %s26, 0
      %p109 = por %p107, %p108
      %p110 = scmp.ne.s32.totalorder %s102, %s104
      %p111 = scmp.eq.s32.totalorder %s31, 1
      %p112 = por %p110, %p111
      %p113 = scmp.ne.s32.totalorder %s104, %s105
      %p114 = scmp.eq.s32.totalorder %s31, 0
      %p115 = por %p113, %p114
      %p116 = scmp.ne.s32.totalorder %s104, %s105
      %p117 = scmp.eq.s32.totalorder %s32, 1
      %p118 = por %p116, %p117
      %p120 = scmp.ne.s32.totalorder %s105, %s119
      %p121 = scmp.eq.s32.totalorder %s32, 0
      %p122 = por %p120, %p121
      %s124 = sadd.s32 %s123, 1
      %p127 = scmp.eq.s32.totalorder %s26, 1
      %p128 = scmp.ne.s32.totalorder %s123, %s125
      %p129 = scmp.eq.s32.totalorder %s26, 0
      %p130 = por %p128, %p129
      %p131 = scmp.ne.s32.totalorder %s123, %s125
      %p132 = scmp.eq.s32.totalorder %s31, 1
      %p133 = por %p131, %p132
      %p134 = scmp.ne.s32.totalorder %s125, %s126
      %p135 = scmp.eq.s32.totalorder %s31, 0
      %p136 = por %p134, %p135
      %p137 = scmp.ne.s32.totalorder %s125, %s126
      %p138 = scmp.eq.s32.totalorder %s32, 1
      %p139 = por %p137, %p138
      %p141 = scmp.ne.s32.totalorder %s126, %s140
      %p142 = scmp.eq.s32.totalorder %s32, 0
      %p143 = por %p141, %p142
      %s145 = sadd.s32 %s144, 1
      %p148 = scmp.eq.s32.totalorder %s26, 1
      %p149 = scmp.ne.s32.totalorder %s144, %s146
      %p150 = scmp.eq.s32.totalorder %s26, 0
      %p151 = por %p149, %p150
      %p152 = scmp.ne.s32.totalorder %s144, %s146
      %p153 = scmp.eq.s32.totalorder %s31, 1
      %p154 = por %p152, %p153
      %p155 = scmp.ne.s32.totalorder %s146, %s147
      %p156 = scmp.eq.s32.totalorder %s31, 0
      %p157 = por %p155, %p156
      %p158 = scmp.ne.s32.totalorder %s146, %s147
      %p159 = scmp.eq.s32.totalorder %s32, 1
      %p160 = por %p158, %p159
      %p162 = scmp.ne.s32.totalorder %s147, %s161
      %p163 = scmp.eq.s32.totalorder %s32, 0
      %p164 = por %p162, %p163
      %s166 = sadd.s32 %s165, 1
      %p169 = scmp.eq.s32.totalorder %s26, 1
      %p170 = scmp.ne.s32.totalorder %s165, %s167
      %p171 = scmp.eq.s32.totalorder %s26, 0
      %p172 = por %p170, %p171
      %p173 = scmp.ne.s32.totalorder %s165, %s167
      %p174 = scmp.eq.s32.totalorder %s31, 1
      %p175 = por %p173, %p174
      %p176 = scmp.ne.s32.totalorder %s167, %s168
      %p177 = scmp.eq.s32.totalorder %s31, 0
      %p178 = por %p176, %p177
      %p179 = scmp.ne.s32.totalorder %s167, %s168
      %p180 = scmp.eq.s32.totalorder %s32, 1
      %p181 = por %p179, %p180
      %p183 = scmp.ne.s32.totalorder %s168, %s182
      %p184 = scmp.eq.s32.totalorder %s32, 0
      %p185 = por %p183, %p184
      %s187 = sadd.s32 %s186, 1
      %p190 = scmp.eq.s32.totalorder %s26, 1
      %p191 = scmp.ne.s32.totalorder %s186, %s188
      %p192 = scmp.eq.s32.totalorder %s26, 0
      %p193 = por %p191, %p192
      %p194 = scmp.ne.s32.totalorder %s186, %s188
      %p195 = scmp.eq.s32.totalorder %s31, 1
      %p196 = por %p194, %p195
      %p197 = scmp.ne.s32.totalorder %s188, %s189
      %p198 = scmp.eq.s32.totalorder %s31, 0
      %p199 = por %p197, %p198
      %p200 = scmp.ne.s32.totalorder %s188, %s189
      %p201 = scmp.eq.s32.totalorder %s32, 1
      %p202 = por %p200, %p201
      %p204 = scmp.ne.s32.totalorder %s189, %s203
      %p205 = scmp.eq.s32.totalorder %s32, 0
      %p206 = por %p204, %p205
      %s208 = sadd.s32 %s207, 1
      %p211 = scmp.eq.s32.totalorder %s26, 1
      %p212 = scmp.ne.s32.totalorder %s207, %s209
      %p213 = scmp.eq.s32.totalorder %s26, 0
      %p214 = por %p212, %p213
      %p215 = scmp.ne.s32.totalorder %s207, %s209
      %p216 = scmp.eq.s32.totalorder %s31, 1
      %p217 = por %p215, %p216
      %p218 = scmp.ne.s32.totalorder %s209, %s210
      %p219 = scmp.eq.s32.totalorder %s31, 0
      %p220 = por %p218, %p219
      %p221 = scmp.ne.s32.totalorder %s209, %s210
      %p222 = scmp.eq.s32.totalorder %s32, 1
      %p223 = por %p221, %p222
      %p225 = scmp.ne.s32.totalorder %s210, %s224
      %p226 = scmp.eq.s32.totalorder %s32, 0
      %p227 = por %p225, %p226
      %s229 = sadd.s32 %s228, 1
      %p232 = scmp.eq.s32.totalorder %s26, 1
      %p233 = scmp.ne.s32.totalorder %s228, %s230
      %p234 = scmp.eq.s32.totalorder %s26, 0
      %p235 = por %p233, %p234
      %p236 = scmp.ne.s32.totalorder %s228, %s230
      %p237 = scmp.eq.s32.totalorder %s31, 1
      %p238 = por %p236, %p237
      %p239 = scmp.ne.s32.totalorder %s230, %s231
      %p240 = scmp.eq.s32.totalorder %s31, 0
      %p241 = por %p239, %p240
      %p242 = scmp.ne.s32.totalorder %s230, %s231
      %p243 = scmp.eq.s32.totalorder %s32, 1
      %p244 = por %p242, %p243
      %p246 = scmp.ne.s32.totalorder %s231, %s245
      %p247 = scmp.eq.s32.totalorder %s32, 0
      %p248 = por %p246, %p247
      %s250 = sadd.s32 %s249, 1
      %p253 = scmp.eq.s32.totalorder %s26, 1
      %p254 = scmp.ne.s32.totalorder %s249, %s251
      %p255 = scmp.eq.s32.totalorder %s26, 0
      %p256 = por %p254, %p255
      %p257 = scmp.ne.s32.totalorder %s249, %s251
      %p258 = scmp.eq.s32.totalorder %s31, 1
      %p259 = por %p257, %p258
      %p260 = scmp.ne.s32.totalorder %s251, %s252
      %p261 = scmp.eq.s32.totalorder %s31, 0
      %p262 = por %p260, %p261
      %p263 = scmp.ne.s32.totalorder %s251, %s252
      %p264 = scmp.eq.s32.totalorder %s32, 1
      %p265 = por %p263, %p264
      %p267 = scmp.ne.s32.totalorder %s252, %s266
      %p268 = scmp.eq.s32.totalorder %s32, 0
      %p269 = por %p267, %p268
      %s271 = sadd.s32 %s270, 1
      %p274 = scmp.eq.s32.totalorder %s26, 1
      %p275 = scmp.ne.s32.totalorder %s270, %s272
      %p276 = scmp.eq.s32.totalorder %s26, 0
      %p277 = por %p275, %p276
      %p278 = scmp.ne.s32.totalorder %s270, %s272
      %p279 = scmp.eq.s32.totalorder %s31, 1
      %p280 = por %p278, %p279
      %p281 = scmp.ne.s32.totalorder %s272, %s273
      %p282 = scmp.eq.s32.totalorder %s31, 0
      %p283 = por %p281, %p282
      %p284 = scmp.ne.s32.totalorder %s272, %s273
      %p285 = scmp.eq.s32.totalorder %s32, 1
      %p286 = por %p284, %p285
      %p288 = scmp.ne.s32.totalorder %s273, %s287
      %p289 = scmp.eq.s32.totalorder %s32, 0
      %p290 = por %p288, %p289
      %s292 = sadd.s32 %s291, 1
      %p295 = scmp.eq.s32.totalorder %s26, 1
      %p296 = scmp.ne.s32.totalorder %s291, %s293
      %p297 = scmp.eq.s32.totalorder %s26, 0
      %p298 = por %p296, %p297
      %p299 = scmp.ne.s32.totalorder %s291, %s293
      %p300 = scmp.eq.s32.totalorder %s31, 1
      %p301 = por %p299, %p300
      %p302 = scmp.ne.s32.totalorder %s293, %s294
      %p303 = scmp.eq.s32.totalorder %s31, 0
      %p304 = por %p302, %p303
      %p305 = scmp.ne.s32.totalorder %s293, %s294
      %p306 = scmp.eq.s32.totalorder %s32, 1
      %p307 = por %p305, %p306
      %p309 = scmp.ne.s32.totalorder %s294, %s308
      %p310 = scmp.eq.s32.totalorder %s32, 0
      %p311 = por %p309, %p310
      %s312 = ssub.s32 %s26, %s33
      %p313 = scmp.eq.s32.totalorder %s312, 0
      %s315 = sadd.s32 %s314, 1
      %s316 = scalar_select %p313, %s314, %s315
      %p319 = pneg %p313
      %p320 = scmp.eq.s32.totalorder %s26, 1
      %p321 = por %p319, %p320
      %p322 = scmp.ne.s32.totalorder %s314, %s317
      %p323 = scmp.eq.s32.totalorder %s26, 0
      %p324 = por %p322, %p323
      %p325 = scmp.ne.s32.totalorder %s314, %s317
      %p326 = scmp.eq.s32.totalorder %s31, 1
      %p327 = por %p325, %p326
      %p328 = scmp.ne.s32.totalorder %s317, %s318
      %p329 = scmp.eq.s32.totalorder %s31, 0
      %p330 = por %p328, %p329
      %p331 = scmp.ne.s32.totalorder %s317, %s318
      %p332 = scmp.eq.s32.totalorder %s32, 1
      %p333 = por %p331, %p332
      %p335 = scmp.ne.s32.totalorder %s318, %s334
      %p336 = scmp.eq.s32.totalorder %s32, 0
      %p337 = por %p335, %p336
      %p338 = scmp.le.s32.totalorder 1, %s26
      %p339 = scmp.lt.s32.totalorder %s26, 3
      %p340 = pnand %p338, %p339
      %p341 = pneg %p340
      // Predicated region
      $region9: #{tpu_custom_call.1} parent=5 // pred_check
        _
      $region10: #{tpu_custom_call.1} parent=5 // pred_check_branch
        %343 = sbr.rel (%p340) target = $region12
      $region11: #{tpu_custom_call.1} parent=5 // pred_region
        %s344 = ssub.s32 %s26, 1
        // Predicated region
        $region13: #{tpu_custom_call.1} parent=11 // pred_check
          %p345 = pneg %p73
        $region14: #{tpu_custom_call.1} parent=11 // pred_check_branch
          %347 = sbr.rel (%p345) target = $region16
        $region15: #{tpu_custom_call.1} parent=11 // pred_region
          %s349 = ssub.s32 16, 16
          %350 = vsyncadd [#allocation8], %s349
          %s352 = sshll.u32 [#allocation7], 4
          %s353 = int_to_ptr.vmem [resolvable:$true] %s352
          %355 = dma.hbm_to_vmem [thread:$0]  %s1, 16, %s353, [#allocation8]
        $region16: #{tpu_custom_call.1} parent=11 // pred_fallthru
          _
        // Predicated region
        $region17: #{tpu_custom_call.1} parent=11 // pred_check
          %p356 = pneg %p94
        $region18: #{tpu_custom_call.1} parent=11 // pred_check_branch
          %358 = sbr.rel (%p356) target = $region20
        $region19: #{tpu_custom_call.1} parent=11 // pred_region
          _
        $region20: #{tpu_custom_call.1} parent=11 // pred_fallthru
          _
        // Predicated region
        $region21: #{tpu_custom_call.1} parent=11 // pred_check
          %p359 = pneg %p115
        $region22: #{tpu_custom_call.1} parent=11 // pred_check_branch
          %361 = sbr.rel (%p359) target = $region24
        $region23: #{tpu_custom_call.1} parent=11 // pred_region
          _
        $region24: #{tpu_custom_call.1} parent=11 // pred_fallthru
          _
        // Predicated region
        $region25: #{tpu_custom_call.1} parent=11 // pred_check
          %p362 = pneg %p136
        $region26: #{tpu_custom_call.1} parent=11 // pred_check_branch
          %364 = sbr.rel (%p362) target = $region28
        $region27: #{tpu_custom_call.1} parent=11 // pred_region
          %s366 = ssub.s32 2048, 2048
          %367 = vsyncadd [#allocation8], %s366
          %s368 = sshll.u32 [#allocation9], 4
          %s369 = int_to_ptr.vmem [resolvable:$true] %s368
          %374 = dma.hbm_to_vmem [thread:$0]  %s4, 2048, %s369, [#allocation8], 64, 64, 4
        $region28: #{tpu_custom_call.1} parent=11 // pred_fallthru
          _
        // Predicated region
        $region29: #{tpu_custom_call.1} parent=11 // pred_check
          %p375 = pneg %p157
        $region30: #{tpu_custom_call.1} parent=11 // pred_check_branch
          %377 = sbr.rel (%p375) target = $region32
        $region31: #{tpu_custom_call.1} parent=11 // pred_region
          _
        $region32: #{tpu_custom_call.1} parent=11 // pred_fallthru
          _
        // Predicated region
        $region33: #{tpu_custom_call.1} parent=11 // pred_check
          %p378 = pneg %p178
        $region34: #{tpu_custom_call.1} parent=11 // pred_check_branch
          %380 = sbr.rel (%p378) target = $region36
        $region35: #{tpu_custom_call.1} parent=11 // pred_region
          _
        $region36: #{tpu_custom_call.1} parent=11 // pred_fallthru
          _
        // Predicated region
        $region37: #{tpu_custom_call.1} parent=11 // pred_check
          %p381 = pneg %p199
        $region38: #{tpu_custom_call.1} parent=11 // pred_check_branch
          %383 = sbr.rel (%p381) target = $region40
        $region39: #{tpu_custom_call.1} parent=11 // pred_region
          _
        $region40: #{tpu_custom_call.1} parent=11 // pred_fallthru
          _
        // Predicated region
        $region41: #{tpu_custom_call.1} parent=11 // pred_check
          %p384 = pneg %p220
        $region42: #{tpu_custom_call.1} parent=11 // pred_check_branch
          %386 = sbr.rel (%p384) target = $region44
        $region43: #{tpu_custom_call.1} parent=11 // pred_region
          _
        $region44: #{tpu_custom_call.1} parent=11 // pred_fallthru
          _
        // Predicated region
        $region45: #{tpu_custom_call.1} parent=11 // pred_check
          %p387 = pneg %p241
        $region46: #{tpu_custom_call.1} parent=11 // pred_check_branch
          %389 = sbr.rel (%p387) target = $region48
        $region47: #{tpu_custom_call.1} parent=11 // pred_region
          _
        $region48: #{tpu_custom_call.1} parent=11 // pred_fallthru
          _
        // Predicated region
        $region49: #{tpu_custom_call.1} parent=11 // pred_check
          %p390 = pneg %p262
        $region50: #{tpu_custom_call.1} parent=11 // pred_check_branch
          %392 = sbr.rel (%p390) target = $region52
        $region51: #{tpu_custom_call.1} parent=11 // pred_region
          _
        $region52: #{tpu_custom_call.1} parent=11 // pred_fallthru
          _
        // Predicated region
        $region53: #{tpu_custom_call.1} parent=11 // pred_check
          %p393 = pneg %p283
        $region54: #{tpu_custom_call.1} parent=11 // pred_check_branch
          %395 = sbr.rel (%p393) target = $region56
        $region55: #{tpu_custom_call.1} parent=11 // pred_region
          _
        $region56: #{tpu_custom_call.1} parent=11 // pred_fallthru
          _
        // Predicated region
        $region57: #{tpu_custom_call.1} parent=11 // pred_check
          %p396 = pneg %p304
        $region58: #{tpu_custom_call.1} parent=11 // pred_check_branch
          %398 = sbr.rel (%p396) target = $region60
        $region59: #{tpu_custom_call.1} parent=11 // pred_region
          _
        $region60: #{tpu_custom_call.1} parent=11 // pred_fallthru
          _
      $region12: #{tpu_custom_call.1} parent=5 // pred_fallthru
        _
      %p399 = scmp.lt.s32.totalorder %s26, 2
      // Predicated region
      $region61: #{tpu_custom_call.1} parent=5 // pred_check
        %p400 = pneg %p399
      $region62: #{tpu_custom_call.1} parent=5 // pred_check_branch
        %402 = sbr.rel (%p400) target = $region64
      $region63: #{tpu_custom_call.1} parent=5 // pred_region
        // Predicated region
        $region65: #{tpu_custom_call.1} parent=63 // pred_check
          %p403 = pneg %p46
        $region66: #{tpu_custom_call.1} parent=63 // pred_check_branch
          %405 = sbr.rel (%p403) target = $region68
        $region67: #{tpu_custom_call.1} parent=63 // pred_region
          %s406 = sand.u32 %s36, 1
          %s407 = scalar_lea.sflag [#allocation5], %s406
          %s408 = sand.u32 %s36, 1
          %s409 = smul.addr %s408, 8
          %s410 = scalar_lea.vmem [#allocation4], %s409
          %s412 = ssub.s32 128, 128
          %413 = vsyncadd %s407, %s412
          %s414 = smul.addr %s26, 128
          %s415 = scalar_lea.hbm %s0, %s414
          %s417 = sshll.u32 %s410, 4
          %s418 = int_to_ptr.vmem [resolvable:$true] %s417
          %420 = dma.hbm_to_vmem [thread:$0]  %s415, 128, %s418, %s407
        $region68: #{tpu_custom_call.1} parent=63 // pred_fallthru
          _
      $region64: #{tpu_custom_call.1} parent=5 // pred_fallthru
        _
      %p421 = scmp.le.s32.totalorder 1, %s26
      %p422 = scmp.lt.s32.totalorder %s26, 3
      %p423 = pnand %p421, %p422
      %p424 = pneg %p423
      // Predicated region
      $region69: #{tpu_custom_call.1} parent=5 // pred_check
        _
      $region70: #{tpu_custom_call.1} parent=5 // pred_check_branch
        %426 = sbr.rel (%p423) target = $region72
      $region71: #{tpu_custom_call.1} parent=5 // pred_region
        %s427 = ssub.s32 %s26, 1
        %s428 = sand.u32 %s39, 1
        %s429 = scalar_lea.sflag [#allocation5], %s428
        %s430 = sand.u32 %s39, 1
        %s431 = smul.addr %s430, 8
        %s432 = scalar_lea.vmem [#allocation4], %s431
        // Predicated region
        $region73: #{tpu_custom_call.1} parent=71 // pred_check
          %p433 = pneg %p52
        $region74: #{tpu_custom_call.1} parent=71 // pred_check_branch
          %435 = sbr.rel (%p433) target = $region76
        $region75: #{tpu_custom_call.1} parent=71 // pred_region
          %436 = dma.done %s429, 128
        $region76: #{tpu_custom_call.1} parent=71 // pred_fallthru
          _
        // Predicated region
        $region77: #{tpu_custom_call.1} parent=71 // pred_check
          %p437 = pneg %p73
        $region78: #{tpu_custom_call.1} parent=71 // pred_check_branch
          %439 = sbr.rel (%p437) target = $region80
        $region79: #{tpu_custom_call.1} parent=71 // pred_region
          %440 = dma.done [#allocation8], 16
        $region80: #{tpu_custom_call.1} parent=71 // pred_fallthru
          _
        // Predicated region
        $region81: #{tpu_custom_call.1} parent=71 // pred_check
          %p441 = pneg %p136
        $region82: #{tpu_custom_call.1} parent=71 // pred_check_branch
          %443 = sbr.rel (%p441) target = $region84
        $region83: #{tpu_custom_call.1} parent=71 // pred_region
          %444 = dma.done [#allocation8], 2048
        $region84: #{tpu_custom_call.1} parent=71 // pred_fallthru
          _
        %s445 = sand.u32 %s39, 1
        %s446 = scalar_lea.sflag [#allocation5], %s445
        %s447 = sand.u32 %s39, 1
        %s448 = smul.addr %s447, 8
        %s449 = scalar_lea.vmem [#allocation4], %s448
        %p450 = pneg %p52
        %p451 = pneg %p49
        %p452 = pneg %p73
        %p453 = pneg %p70
        %p454 = pneg %p94
        %p455 = pneg %p91
        %p456 = pneg %p115
        %p457 = pneg %p112
        %p458 = pneg %p136
        %p459 = pneg %p133
        %p460 = pneg %p157
        %p461 = pneg %p154
        %p462 = pneg %p178
        %p463 = pneg %p175
        %p464 = pneg %p199
        %p465 = pneg %p196
        %p466 = pneg %p220
        %p467 = pneg %p217
        %p468 = pneg %p241
        %p469 = pneg %p238
        %p470 = pneg %p262
        %p471 = pneg %p259
        %p472 = pneg %p283
        %p473 = pneg %p280
        %p474 = pneg %p304
        %p475 = pneg %p301
        %p476 = pneg %p330
        %p477 = pneg %p327
        %s478 = sand.u32 %s317, 1
        %s479 = scalar_lea.sflag [#allocation6], %s478
        %s480 = sand.u32 %s317, 1
        %s481 = smul.addr %s480, 8
        %s482 = scalar_lea.vmem [#allocation10], %s481
        %v484 = vld [vmem:[#allocation7] sm:$0x1]
        %v485 = vld [vmem:[%s2] sm:$0x1]
        %v486 = vld [vmem:[%s7] sm:$0x1]
        %v487 = vld [vmem:[%s8] sm:$0x1]
        %v488 = vld [vmem:[%s6] sm:$0x1]
        %v489 = vld [vmem:[%s10] sm:$0xf]
        %v490 = vld [vmem:[%s12] sm:$0x1]
        %v491 = vld [vmem:[%s432] sm:$0xff]
        %492 = vadd.xlane.f32.xlu0 %v491
        %v493 = vpop.xlane.xlu0 %492
        %v494 = vrcp.pop 128.0
        %v495 = vmul.f32 %v493, %v494
        %v496 = vsub.f32 %v491, %v495
        %v497 = vmul.f32 %v496, %v496
        %498 = vadd.xlane.f32.xlu0 %v497
        %v499 = vpop.xlane.xlu0 %498
        %v500 = vmul.f32 %v499, %v494
        %v501 = vadd.f32 %v500, 1e-05
        %v502 = vrsqrt.pop %v501
        %v503 = vmul.f32 %v496, %v502
        %v505 = vlaneseq
        %v506 = vshrl.u32 %v505, 7
        %v507 = vsub.s32 0, %v506
        %v508 = vrot.slane %v484, %v507
        %v510 = vmul.f32 %v503, %v508
        %v512 = vlaneseq
        %v513 = vshrl.u32 %v512, 7
        %v514 = vsub.s32 0, %v513
        %v515 = vrot.slane %v485, %v514
        %v517 = vadd.f32 %v510, %v515
        %v518 = vpack.c.bf16 %v517, %v517
        %v519 = vld [vmem:[#allocation9] sm:$0xf]
        %v520 = vld [vmem:[#allocation9 + $0x4] sm:$0xf]
        %v521 = vld [vmem:[#allocation9 + $0x8] sm:$0xf]
        %v522 = vld [vmem:[#allocation9 + $0xc] sm:$0xf]
        %v523 = vld [vmem:[#allocation9 + $0x10] sm:$0xf]
        %v524 = vld [vmem:[#allocation9 + $0x14] sm:$0xf]
        %v525 = vld [vmem:[#allocation9 + $0x18] sm:$0xf]
        %v526 = vld [vmem:[#allocation9 + $0x1c] sm:$0xf]
        %v527 = vld [vmem:[#allocation9 + $0x20] sm:$0xf]
        %v528 = vld [vmem:[#allocation9 + $0x24] sm:$0xf]
        %v529 = vld [vmem:[#allocation9 + $0x28] sm:$0xf]
        %v530 = vld [vmem:[#allocation9 + $0x2c] sm:$0xf]
        %v531 = vld [vmem:[#allocation9 + $0x30] sm:$0xf]
        %v532 = vld [vmem:[#allocation9 + $0x34] sm:$0xf]
        %v533 = vld [vmem:[#allocation9 + $0x38] sm:$0xf]
        %v534 = vld [vmem:[#allocation9 + $0x3c] sm:$0xf]
        %v535 = vld [vmem:[#allocation9 + $0x40] sm:$0xf]
        %v536 = vld [vmem:[#allocation9 + $0x44] sm:$0xf]
        %v537 = vld [vmem:[#allocation9 + $0x48] sm:$0xf]
        %v538 = vld [vmem:[#allocation9 + $0x4c] sm:$0xf]
        %v539 = vld [vmem:[#allocation9 + $0x50] sm:$0xf]
        %v540 = vld [vmem:[#allocation9 + $0x54] sm:$0xf]
        %v541 = vld [vmem:[#allocation9 + $0x58] sm:$0xf]
        %v542 = vld [vmem:[#allocation9 + $0x5c] sm:$0xf]
        %v543 = vld [vmem:[#allocation9 + $0x60] sm:$0xf]
        %v544 = vld [vmem:[#allocation9 + $0x64] sm:$0xf]
        %v545 = vld [vmem:[#allocation9 + $0x68] sm:$0xf]
        %v546 = vld [vmem:[#allocation9 + $0x6c] sm:$0xf]
        %v547 = vld [vmem:[#allocation9 + $0x70] sm:$0xf]
        %v548 = vld [vmem:[#allocation9 + $0x74] sm:$0xf]
        %v549 = vld [vmem:[#allocation9 + $0x78] sm:$0xf]
        %v550 = vld [vmem:[#allocation9 + $0x7c] sm:$0xf]
        %v583 = vunpack.c.l.b16 %v519
        %v584 = vunpack.c.l.b16 %v520
        %v585 = vunpack.c.l.b16 %v521
        %v586 = vunpack.c.l.b16 %v522
        %v587 = vunpack.c.l.b16 %v523
        %v588 = vunpack.c.l.b16 %v524
        %v589 = vunpack.c.l.b16 %v525
        %v590 = vunpack.c.l.b16 %v526
        %v591 = vunpack.c.l.b16 %v527
        %v592 = vunpack.c.l.b16 %v528
        %v593 = vunpack.c.l.b16 %v529
        %v594 = vunpack.c.l.b16 %v530
        %v595 = vunpack.c.l.b16 %v531
        %v596 = vunpack.c.l.b16 %v532
        %v597 = vunpack.c.l.b16 %v533
        %v598 = vunpack.c.l.b16 %v534
        %v599 = vunpack.c.l.b16 %v535
        %v600 = vunpack.c.l.b16 %v536
        %v601 = vunpack.c.l.b16 %v537
        %v602 = vunpack.c.l.b16 %v538
        %v603 = vunpack.c.l.b16 %v539
        %v604 = vunpack.c.l.b16 %v540
        %v605 = vunpack.c.l.b16 %v541
        %v606 = vunpack.c.l.b16 %v542
        %v607 = vunpack.c.l.b16 %v543
        %v608 = vunpack.c.l.b16 %v544
        %v609 = vunpack.c.l.b16 %v545
        %v610 = vunpack.c.l.b16 %v546
        %v611 = vunpack.c.l.b16 %v547
        %v612 = vunpack.c.l.b16 %v548
        %v613 = vunpack.c.l.b16 %v549
        %v614 = vunpack.c.l.b16 %v550
        %v615 = vpack.c.b16 %v584, %v583
        %v616 = vpack.c.b16 %v586, %v585
        %v617 = vpack.c.b16 %v588, %v587
        %v618 = vpack.c.b16 %v590, %v589
        %v619 = vpack.c.b16 %v592, %v591
        %v620 = vpack.c.b16 %v594, %v593
        %v621 = vpack.c.b16 %v596, %v595
        %v622 = vpack.c.b16 %v598, %v597
        %v623 = vpack.c.b16 %v600, %v599
        %v624 = vpack.c.b16 %v602, %v601
        %v625 = vpack.c.b16 %v604, %v603
        %v626 = vpack.c.b16 %v606, %v605
        %v627 = vpack.c.b16 %v608, %v607
        %v628 = vpack.c.b16 %v610, %v609
        %v629 = vpack.c.b16 %v612, %v611
        %v630 = vpack.c.b16 %v614, %v613
        %647 = vmatprep.subr.bf16.mxu0 0
        %648 = vmatpush1.bf16.xpose.msra.mxu0 %v518
        %649 = vmatprep.subr.bf16.mxu0 0
        %650 = vmatpush1.bf16.xpose.msra.mxu0 0
        %651 = vmatprep.subr.bf16.mxu0 0
        %652 = vmatpush1.bf16.xpose.msra.mxu0 0
        %653 = vmatprep.subr.bf16.mxu0 0
        %654 = vmatpush1.bf16.xpose.msra.mxu0 0
        %655 = vmatprep.subr.bf16.mxu0 0
        %656 = vmatpush1.bf16.xpose.msra.mxu0 0
        %657 = vmatprep.subr.bf16.mxu0 0
        %658 = vmatpush1.bf16.xpose.msra.mxu0 0
        %659 = vmatprep.subr.bf16.mxu0 0
        %660 = vmatpush1.bf16.xpose.msra.mxu0 0
        %661 = vmatprep.subr.bf16.mxu0 0
        %662 = vmatpush1.bf16.xpose.msra.mxu0 0
        %663 = vmatprep.subr.bf16.mxu0 0
        %664 = vmatpush1.bf16.xpose.msra.mxu0 0
        %665 = vmatprep.subr.bf16.mxu0 0
        %666 = vmatpush1.bf16.xpose.msra.mxu0 0
        %667 = vmatprep.subr.bf16.mxu0 0
        %668 = vmatpush1.bf16.xpose.msra.mxu0 0
        %669 = vmatprep.subr.bf16.mxu0 0
        %670 = vmatpush1.bf16.xpose.msra.mxu0 0
        %671 = vmatprep.subr.bf16.mxu0 0
        %672 = vmatpush1.bf16.xpose.msra.mxu0 0
        %673 = vmatprep.subr.bf16.mxu0 0
        %674 = vmatpush1.bf16.xpose.msra.mxu0 0
        %675 = vmatprep.subr.bf16.mxu0 0
        %676 = vmatpush1.bf16.xpose.msra.mxu0 0
        %677 = vmatprep.subr.bf16.mxu0 0
        %678 = vmatpush1.bf16.xpose.msra.mxu0 0
        %679 = vmatprep.mubr.bf16.mxu0 0
        %680 = vmatmul.mubr.bf16.gmra.mrb[0].mxu0 %v615
        %v681 = vpop.f32.mrb[0].mxu0
        %v682 = vadd.f32 0.0, %v681
        %v683 = vpop.f32.mrb[0].mxu0
        %v684 = vpop.f32.mrb[0].mxu0
        %v685 = vadd.f32 0.0, %v684
        %v686 = vpop.f32.mrb[0].mxu0
        %687 = vmatprep.mubr.bf16.mxu0 0
        %688 = vmatmul.mubr.bf16.gmra.mrb[0].mxu0 %v616
        %v689 = vpop.f32.mrb[0].mxu0
        %v690 = vadd.f32 0.0, %v689
        %v691 = vpop.f32.mrb[0].mxu0
        %v692 = vpop.f32.mrb[0].mxu0
        %v693 = vadd.f32 0.0, %v692
        %v694 = vpop.f32.mrb[0].mxu0
        %695 = vmatprep.mubr.bf16.mxu0 0
        %696 = vmatmul.mubr.bf16.gmra.mrb[0].mxu0 %v617
        %v697 = vpop.f32.mrb[0].mxu0
        %v698 = vadd.f32 0.0, %v697
        %v699 = vpop.f32.mrb[0].mxu0
        %v700 = vpop.f32.mrb[0].mxu0
        %v701 = vadd.f32 0.0, %v700
        %v702 = vpop.f32.mrb[0].mxu0
        %703 = vmatprep.mubr.bf16.mxu0 0
        %704 = vmatmul.mubr.bf16.gmra.mrb[0].mxu0 %v618
        %v705 = vpop.f32.mrb[0].mxu0
        %v706 = vadd.f32 0.0, %v705
        %v707 = vpop.f32.mrb[0].mxu0
        %v708 = vpop.f32.mrb[0].mxu0
        %v709 = vadd.f32 0.0, %v708
        %v710 = vpop.f32.mrb[0].mxu0
        %711 = vmatprep.mubr.bf16.mxu0 0
        %712 = vmatmul.mubr.bf16.gmra.mrb[0].mxu0 %v619
        %v713 = vpop.f32.mrb[0].mxu0
        %v714 = vadd.f32 0.0, %v713
        %v715 = vpop.f32.mrb[0].mxu0
        %v716 = vpop.f32.mrb[0].mxu0
        %v717 = vadd.f32 0.0, %v716
        %v718 = vpop.f32.mrb[0].mxu0
        %719 = vmatprep.mubr.bf16.mxu0 0
        %720 = vmatmul.mubr.bf16.gmra.mrb[0].mxu0 %v620
        %v721 = vpop.f32.mrb[0].mxu0
        %v722 = vadd.f32 0.0, %v721
        %v723 = vpop.f32.mrb[0].mxu0
        %v724 = vpop.f32.mrb[0].mxu0
        %v725 = vadd.f32 0.0, %v724
        %v726 = vpop.f32.mrb[0].mxu0
        %727 = vmatprep.mubr.bf16.mxu0 0
        %728 = vmatmul.mubr.bf16.gmra.mrb[0].mxu0 %v621
        %v729 = vpop.f32.mrb[0].mxu0
        %v730 = vadd.f32 0.0, %v729
        %v731 = vpop.f32.mrb[0].mxu0
        %v732 = vpop.f32.mrb[0].mxu0
        %v733 = vadd.f32 0.0, %v732
        %v734 = vpop.f32.mrb[0].mxu0
        %735 = vmatprep.mubr.bf16.mxu0 0
        %736 = vmatmul.mubr.bf16.gmra.mrb[0].mxu0 %v622
        %v737 = vpop.f32.mrb[0].mxu0
        %v738 = vadd.f32 0.0, %v737
        %v739 = vpop.f32.mrb[0].mxu0
        %v740 = vpop.f32.mrb[0].mxu0
        %v741 = vadd.f32 0.0, %v740
        %v742 = vpop.f32.mrb[0].mxu0
        %743 = vmatprep.mubr.bf16.mxu0 0
        %744 = vmatmul.mubr.bf16.gmra.mrb[0].mxu0 %v623
        %v745 = vpop.f32.mrb[0].mxu0
        %v746 = vadd.f32 0.0, %v745
        %v747 = vpop.f32.mrb[0].mxu0
        %v748 = vpop.f32.mrb[0].mxu0
        %v749 = vadd.f32 0.0, %v748
        %v750 = vpop.f32.mrb[0].mxu0
        %751 = vmatprep.mubr.bf16.mxu0 0
        %752 = vmatmul.mubr.bf16.gmra.mrb[0].mxu0 %v624
        %v753 = vpop.f32.mrb[0].mxu0
        %v754 = vadd.f32 0.0, %v753
        %v755 = vpop.f32.mrb[0].mxu0
        %v756 = vpop.f32.mrb[0].mxu0
        %v757 = vadd.f32 0.0, %v756
        %v758 = vpop.f32.mrb[0].mxu0
        %759 = vmatprep.mubr.bf16.mxu0 0
        %760 = vmatmul.mubr.bf16.gmra.mrb[0].mxu0 %v625
        %v761 = vpop.f32.mrb[0].mxu0
        %v762 = vadd.f32 0.0, %v761
        %v763 = vpop.f32.mrb[0].mxu0
        %v764 = vpop.f32.mrb[0].mxu0
        %v765 = vadd.f32 0.0, %v764
        %v766 = vpop.f32.mrb[0].mxu0
        %767 = vmatprep.mubr.bf16.mxu0 0
        %768 = vmatmul.mubr.bf16.gmra.mrb[0].mxu0 %v626
        %v769 = vpop.f32.mrb[0].mxu0
        %v770 = vadd.f32 0.0, %v769
        %v771 = vpop.f32.mrb[0].mxu0
        %v772 = vpop.f32.mrb[0].mxu0
        %v773 = vadd.f32 0.0, %v772
        %v774 = vpop.f32.mrb[0].mxu0
        %775 = vmatprep.mubr.bf16.mxu0 0
        %776 = vmatmul.mubr.bf16.gmra.mrb[0].mxu0 %v627
        %v777 = vpop.f32.mrb[0].mxu0
        %v778 = vadd.f32 0.0, %v777
        %v779 = vpop.f32.mrb[0].mxu0
        %v780 = vpop.f32.mrb[0].mxu0
        %v781 = vadd.f32 0.0, %v780
        %v782 = vpop.f32.mrb[0].mxu0
        %783 = vmatprep.mubr.bf16.mxu0 0
        %784 = vmatmul.mubr.bf16.gmra.mrb[0].mxu0 %v628
        %v785 = vpop.f32.mrb[0].mxu0
        %v786 = vadd.f32 0.0, %v785
        %v787 = vpop.f32.mrb[0].mxu0
        %v788 = vpop.f32.mrb[0].mxu0
        %v789 = vadd.f32 0.0, %v788
        %v790 = vpop.f32.mrb[0].mxu0
        %791 = vmatprep.mubr.bf16.mxu0 0
        %792 = vmatmul.mubr.bf16.gmra.mrb[0].mxu0 %v629
        %v793 = vpop.f32.mrb[0].mxu0
        %v794 = vadd.f32 0.0, %v793
        %v795 = vpop.f32.mrb[0].mxu0
        %v796 = vpop.f32.mrb[0].mxu0
        %v797 = vadd.f32 0.0, %v796
        %v798 = vpop.f32.mrb[0].mxu0
        %799 = vmatprep.mubr.bf16.mxu0 0
        %800 = vmatmul.mubr.bf16.gmra.mrb[0].mxu0 %v630
        %v801 = vpop.f32.mrb[0].mxu0
        %v802 = vadd.f32 0.0, %v801
        %v803 = vpop.f32.mrb[0].mxu0
        %v804 = vpop.f32.mrb[0].mxu0
        %v805 = vadd.f32 0.0, %v804
        %v806 = vpop.f32.mrb[0].mxu0
        %807 = vdwg.mxu0
        %v808 = vpack.c.bf16 %v685, %v682
        %v809 = vpack.c.bf16 %v693, %v690
        %v810 = vpack.c.bf16 %v701, %v698
        %v811 = vpack.c.bf16 %v709, %v706
        %v812 = vpack.c.bf16 %v717, %v714
        %v813 = vpack.c.bf16 %v725, %v722
        %v814 = vpack.c.bf16 %v733, %v730
        %v815 = vpack.c.bf16 %v741, %v738
        %vm816 = vcmask 64512
        %817 = vst.msk [vmem:[#allocation2] sm:$0xff] %vm816, %v808
        %818 = vst.msk [vmem:[#allocation2 + $0x8] sm:$0xff] %vm816, %v809
        %819 = vst.msk [vmem:[#allocation2 + $0x10] sm:$0xff] %vm816, %v810
        %820 = vst.msk [vmem:[#allocation2 + $0x18] sm:$0xff] %vm816, %v811
        %821 = vst.msk [vmem:[#allocation2 + $0x20] sm:$0xff] %vm816, %v812
        %822 = vst.msk [vmem:[#allocation2 + $0x28] sm:$0xff] %vm816, %v813
        %823 = vst.msk [vmem:[#allocation2 + $0x30] sm:$0xff] %vm816, %v814
        %824 = vst.msk [vmem:[#allocation2 + $0x38] sm:$0xff] %vm816, %v815
        %v825 = vpack.c.bf16 %v749, %v746
        %v826 = vpack.c.bf16 %v757, %v754
        %v827 = vpack.c.bf16 %v765, %v762
        %v828 = vpack.c.bf16 %v773, %v770
        %v829 = vpack.c.bf16 %v781, %v778
        %v830 = vpack.c.bf16 %v789, %v786
        %v831 = vpack.c.bf16 %v797, %v794
        %v832 = vpack.c.bf16 %v805, %v802
        %833 = vst.msk [vmem:[#allocation3] sm:$0xff] %vm816, %v825
        %834 = vst.msk [vmem:[#allocation3 + $0x8] sm:$0xff] %vm816, %v826
        %835 = vst.msk [vmem:[#allocation3 + $0x10] sm:$0xff] %vm816, %v827
        %836 = vst.msk [vmem:[#allocation3 + $0x18] sm:$0xff] %vm816, %v828
        %837 = vst.msk [vmem:[#allocation3 + $0x20] sm:$0xff] %vm816, %v829
        %838 = vst.msk [vmem:[#allocation3 + $0x28] sm:$0xff] %vm816, %v830
        %839 = vst.msk [vmem:[#allocation3 + $0x30] sm:$0xff] %vm816, %v831
        %840 = vst.msk [vmem:[#allocation3 + $0x38] sm:$0xff] %vm816, %v832
        %v841 = vld [vmem:[%s432] sm:$0xff]
        %842 = vadd.xlane.f32.xlu0 %v841
        %v843 = vpop.xlane.xlu0 %842
        %v844 = vmul.f32 %v843, %v494
        %v845 = vsub.f32 %v841, %v844
        %v846 = vmul.f32 %v845, %v845
        %847 = vadd.xlane.f32.xlu0 %v846
        %v848 = vpop.xlane.xlu0 %847
        %v849 = vmul.f32 %v848, %v494
        %v850 = vadd.f32 %v849, 1e-05
        %v851 = vrsqrt.pop %v850
        %v852 = vmul.f32 %v845, %v851
        %v853 = vmul.f32 %v852, %v508
        %v854 = vadd.f32 %v853, %v515
        %v855 = vpack.c.bf16 %v854, %v854
        %v856 = vld [vmem:[%s3] sm:$0xf]
        %v857 = vld [vmem:[%s3 + $0x4] sm:$0xf]
        %v858 = vld [vmem:[%s3 + $0x8] sm:$0xf]
        %v859 = vld [vmem:[%s3 + $0xc] sm:$0xf]
        %v860 = vld [vmem:[%s3 + $0x10] sm:$0xf]
        %v861 = vld [vmem:[%s3 + $0x14] sm:$0xf]
        %v862 = vld [vmem:[%s3 + $0x18] sm:$0xf]
        %v863 = vld [vmem:[%s3 + $0x1c] sm:$0xf]
        %v864 = vld [vmem:[%s3 + $0x20] sm:$0xf]
        %v865 = vld [vmem:[%s3 + $0x24] sm:$0xf]
        %v866 = vld [vmem:[%s3 + $0x28] sm:$0xf]
        %v867 = vld [vmem:[%s3 + $0x2c] sm:$0xf]
        %v868 = vld [vmem:[%s3 + $0x30] sm:$0xf]
        %v869 = vld [vmem:[%s3 + $0x34] sm:$0xf]
        %v870 = vld [vmem:[%s3 + $0x38] sm:$0xf]
        %v871 = vld [vmem:[%s3 + $0x3c] sm:$0xf]
        %v872 = vld [vmem:[%s3 + $0x40] sm:$0xf]
        %v873 = vld [vmem:[%s3 + $0x44] sm:$0xf]
        %v874 = vld [vmem:[%s3 + $0x48] sm:$0xf]
        %v875 = vld [vmem:[%s3 + $0x4c] sm:$0xf]
        %v876 = vld [vmem:[%s3 + $0x50] sm:$0xf]
        %v877 = vld [vmem:[%s3 + $0x54] sm:$0xf]
        %v878 = vld [vmem:[%s3 + $0x58] sm:$0xf]
        %v879 = vld [vmem:[%s3 + $0x5c] sm:$0xf]
        %v880 = vld [vmem:[%s3 + $0x60] sm:$0xf]
        %v881 = vld [vmem:[%s3 + $0x64] sm:$0xf]
        %v882 = vld [vmem:[%s3 + $0x68] sm:$0xf]
        %v883 = vld [vmem:[%s3 + $0x6c] sm:$0xf]
        %v884 = vld [vmem:[%s3 + $0x70] sm:$0xf]
        %v885 = vld [vmem:[%s3 + $0x74] sm:$0xf]
        %v886 = vld [vmem:[%s3 + $0x78] sm:$0xf]
        %v887 = vld [vmem:[%s3 + $0x7c] sm:$0xf]
        %v888 = vld [vmem:[%s3 + $0x80] sm:$0xf]
        %v889 = vld [vmem:[%s3 + $0x84] sm:$0xf]
        %v890 = vld [vmem:[%s3 + $0x88] sm:$0xf]
        %v891 = vld [vmem:[%s3 + $0x8c] sm:$0xf]
        %v892 = vld [vmem:[%s3 + $0x90] sm:$0xf]
        %v893 = vld [vmem:[%s3 + $0x94] sm:$0xf]
        %v894 = vld [vmem:[%s3 + $0x98] sm:$0xf]
        %v895 = vld [vmem:[%s3 + $0x9c] sm:$0xf]
        %v896 = vld [vmem:[%s3 + $0xa0] sm:$0xf]
        %v897 = vld [vmem:[%s3 + $0xa4] sm:$0xf]
        %v898 = vld [vmem:[%s3 + $0xa8] sm:$0xf]
        %v899 = vld [vmem:[%s3 + $0xac] sm:$0xf]
        %v900 = vld [vmem:[%s3 + $0xb0] sm:$0xf]
        %v901 = vld [vmem:[%s3 + $0xb4] sm:$0xf]
        %v902 = vld [vmem:[%s3 + $0xb8] sm:$0xf]
        %v903 = vld [vmem:[%s3 + $0xbc] sm:$0xf]
        %v904 = vld [vmem:[%s3 + $0xc0] sm:$0xf]
        %v905 = vld [vmem:[%s3 + $0xc4] sm:$0xf]
        %v906 = vld [vmem:[%s3 + $0xc8] sm:$0xf]
        %v907 = vld [vmem:[%s3 + $0xcc] sm:$0xf]
        %v908 = vld [vmem:[%s3 + $0xd0] sm:$0xf]
        %v909 = vld [vmem:[%s3 + $0xd4] sm:$0xf]
        %v910 = vld [vmem:[%s3 + $0xd8] sm:$0xf]
        %v911 = vld [vmem:[%s3 + $0xdc] sm:$0xf]
        %v912 = vld [vmem:[%s3 + $0xe0] sm:$0xf]
        %v913 = vld [vmem:[%s3 + $0xe4] sm:$0xf]
        %v914 = vld [vmem:[%s3 + $0xe8] sm:$0xf]
        %v915 = vld [vmem:[%s3 + $0xec] sm:$0xf]
        %v916 = vld [vmem:[%s3 + $0xf0] sm:$0xf]
        %v917 = vld [vmem:[%s3 + $0xf4] sm:$0xf]
        %v918 = vld [vmem:[%s3 + $0xf8] sm:$0xf]
        %v919 = vld [vmem:[%s3 + $0xfc] sm:$0xf]
        %v920 = vld [vmem:[%s3 + $0x100] sm:$0xf]
        %v921 = vld [vmem:[%s3 + $0x104] sm:$0xf]
        %v922 = vld [vmem:[%s3 + $0x108] sm:$0xf]
        %v923 = vld [vmem:[%s3 + $0x10c] sm:$0xf]
        %v924 = vld [vmem:[%s3 + $0x110] sm:$0xf]
        %v925 = vld [vmem:[%s3 + $0x114] sm:$0xf]
        %v926 = vld [vmem:[%s3 + $0x118] sm:$0xf]
        %v927 = vld [vmem:[%s3 + $0x11c] sm:$0xf]
        %v928 = vld [vmem:[%s3 + $0x120] sm:$0xf]
        %v929 = vld [vmem:[%s3 + $0x124] sm:$0xf]
        %v930 = vld [vmem:[%s3 + $0x128] sm:$0xf]
        %v931 = vld [vmem:[%s3 + $0x12c] sm:$0xf]
        %v932 = vld [vmem:[%s3 + $0x130] sm:$0xf]
        %v933 = vld [vmem:[%s3 + $0x134] sm:$0xf]
        %v934 = vld [vmem:[%s3 + $0x138] sm:$0xf]
        %v935 = vld [vmem:[%s3 + $0x13c] sm:$0xf]
        %v936 = vld [vmem:[%s3 + $0x140] sm:$0xf]
        %v937 = vld [vmem:[%s3 + $0x144] sm:$0xf]
        %v938 = vld [vmem:[%s3 + $0x148] sm:$0xf]
        %v939 = vld [vmem:[%s3 + $0x14c] sm:$0xf]
        %v940 = vld [vmem:[%s3 + $0x150] sm:$0xf]
        %v941 = vld [vmem:[%s3 + $0x154] sm:$0xf]
        %v942 = vld [vmem:[%s3 + $0x158] sm:$0xf]
        %v943 = vld [vmem:[%s3 + $0x15c] sm:$0xf]
        %v944 = vld [vmem:[%s3 + $0x160] sm:$0xf]
        %v945 = vld [vmem:[%s3 + $0x164] sm:$0xf]
        %v946 = vld [vmem:[%s3 + $0x168] sm:$0xf]
        %v947 = vld [vmem:[%s3 + $0x16c] sm:$0xf]
        %v948 = vld [vmem:[%s3 + $0x170] sm:$0xf]
        %v949 = vld [vmem:[%s3 + $0x174] sm:$0xf]
        %v950 = vld [vmem:[%s3 + $0x178] sm:$0xf]
        %v951 = vld [vmem:[%s3 + $0x17c] sm:$0xf]
        %v952 = vld [vmem:[%s3 + $0x180] sm:$0xf]
        %v953 = vld [vmem:[%s3 + $0x184] sm:$0xf]
        %v954 = vld [vmem:[%s3 + $0x188] sm:$0xf]
        %v955 = vld [vmem:[%s3 + $0x18c] sm:$0xf]
        %v956 = vld [vmem:[%s3 + $0x190] sm:$0xf]
        %v957 = vld [vmem:[%s3 + $0x194] sm:$0xf]
        %v958 = vld [vmem:[%s3 + $0x198] sm:$0xf]
        %v959 = vld [vmem:[%s3 + $0x19c] sm:$0xf]
        %v960 = vld [vmem:[%s3 + $0x1a0] sm:$0xf]
        %v961 = vld [vmem:[%s3 + $0x1a4] sm:$0xf]
        %v962 = vld [vmem:[%s3 + $0x1a8] sm:$0xf]
        %v963 = vld [vmem:[%s3 + $0x1ac] sm:$0xf]
        %v964 = vld [vmem:[%s3 + $0x1b0] sm:$0xf]
        %v965 = vld [vmem:[%s3 + $0x1b4] sm:$0xf]
        %v966 = vld [vmem:[%s3 + $0x1b8] sm:$0xf]
        %v967 = vld [vmem:[%s3 + $0x1bc] sm:$0xf]
        %v968 = vld [vmem:[%s3 + $0x1c0] sm:$0xf]
        %v969 = vld [vmem:[%s3 + $0x1c4] sm:$0xf]
        %v970 = vld [vmem:[%s3 + $0x1c8] sm:$0xf]
        %v971 = vld [vmem:[%s3 + $0x1cc] sm:$0xf]
        %v972 = vld [vmem:[%s3 + $0x1d0] sm:$0xf]
        %v973 = vld [vmem:[%s3 + $0x1d4] sm:$0xf]
        %v974 = vld [vmem:[%s3 + $0x1d8] sm:$0xf]
        %v975 = vld [vmem:[%s3 + $0x1dc] sm:$0xf]
        %v976 = vld [vmem:[%s3 + $0x1e0] sm:$0xf]
        %v977 = vld [vmem:[%s3 + $0x1e4] sm:$0xf]
        %v978 = vld [vmem:[%s3 + $0x1e8] sm:$0xf]
        %v979 = vld [vmem:[%s3 + $0x1ec] sm:$0xf]
        %v980 = vld [vmem:[%s3 + $0x1f0] sm:$0xf]
        %v981 = vld [vmem:[%s3 + $0x1f4] sm:$0xf]
        %v982 = vld [vmem:[%s3 + $0x1f8] sm:$0xf]
        %v983 = vld [vmem:[%s3 + $0x1fc] sm:$0xf]
        %v1000 = vunpack.c.l.b16 %v856
        %v1001 = vunpack.c.l.b16 %v857
        %v1002 = vunpack.c.l.b16 %v858
        %v1003 = vunpack.c.l.b16 %v859
        %v1004 = vunpack.c.l.b16 %v860
        %v1005 = vunpack.c.l.b16 %v861
        %v1006 = vunpack.c.l.b16 %v862
        %v1007 = vunpack.c.l.b16 %v863
        %v1008 = vunpack.c.l.b16 %v864
        %v1009 = vunpack.c.l.b16 %v865
        %v1010 = vunpack.c.l.b16 %v866
        %v1011 = vunpack.c.l.b16 %v867
        %v1012 = vunpack.c.l.b16 %v868
        %v1013 = vunpack.c.l.b16 %v869
        %v1014 = vunpack.c.l.b16 %v870
        %v1015 = vunpack.c.l.b16 %v871
        %v1016 = vpack.c.b16 %v1001, %v1000
        %v1017 = vpack.c.b16 %v1003, %v1002
        %v1018 = vpack.c.b16 %v1005, %v1004
        %v1019 = vpack.c.b16 %v1007, %v1006
        %v1020 = vpack.c.b16 %v1009, %v1008
        %v1021 = vpack.c.b16 %v1011, %v1010
        %v1022 = vpack.c.b16 %v1013, %v1012
        %v1023 = vpack.c.b16 %v1015, %v1014
        %1032 = vmatprep.subr.bf16.mxu0 0
        %1033 = vmatpush1.bf16.msra.mxu0 %v1016
        %1034 = vmatprep.subr.bf16.mxu0 0
        %1035 = vmatpush1.bf16.msra.mxu0 %v1017
        %1036 = vmatprep.subr.bf16.mxu0 0
        %1037 = vmatpush1.bf16.msra.mxu0 %v1018
        %1038 = vmatprep.subr.bf16.mxu0 0
        %1039 = vmatpush1.bf16.msra.mxu0 %v1019
        %1040 = vmatprep.subr.bf16.mxu0 0
        %1041 = vmatpush1.bf16.msra.mxu0 %v1020
        %1042 = vmatprep.subr.bf16.mxu0 0
        %1043 = vmatpush1.bf16.msra.mxu0 %v1021
        %1044 = vmatprep.subr.bf16.mxu0 0
        %1045 = vmatpush1.bf16.msra.mxu0 %v1022
        %1046 = vmatprep.subr.bf16.mxu0 0
        %1047 = vmatpush1.bf16.msra.mxu0 %v1023
        %1048 = vmatprep.subr.bf16.mxu0 0
        %1049 = vmatpush1.bf16.msra.mxu0 0
        %1050 = vmatprep.subr.bf16.mxu0 0
        %1051 = vmatpush1.bf16.msra.mxu0 0
        %1052 = vmatprep.subr.bf16.mxu0 0
        %1053 = vmatpush1.bf16.msra.mxu0 0
        %1054 = vmatprep.subr.bf16.mxu0 0
        %1055 = vmatpush1.bf16.msra.mxu0 0
        %1056 = vmatprep.subr.bf16.mxu0 0
        %1057 = vmatpush1.bf16.msra.mxu0 0
        %1058 = vmatprep.subr.bf16.mxu0 0
        %1059 = vmatpush1.bf16.msra.mxu0 0
        %1060 = vmatprep.subr.bf16.mxu0 0
        %1061 = vmatpush1.bf16.msra.mxu0 0
        %1062 = vmatprep.subr.bf16.mxu0 0
        %1063 = vmatpush1.bf16.msra.mxu0 0
        %1064 = vmatprep.mubr.bf16.mxu0 0
        %1065 = vmatmul.mubr.bf16.gmra.mrb[0].mxu0 %v855
        %v1066 = vpop.f32.mrb[0].mxu0
        %v1067 = vadd.f32 0.0, %v1066
        %v1068 = vpop.f32.mrb[0].mxu0
        %v1069 = vpop.f32.mrb[0].mxu0
        %v1070 = vpop.f32.mrb[0].mxu0
        %1071 = vdwg.mxu0
        %v1088 = vunpack.c.l.b16 %v872
        %v1089 = vunpack.c.l.b16 %v873
        %v1090 = vunpack.c.l.b16 %v874
        %v1091 = vunpack.c.l.b16 %v875
        %v1092 = vunpack.c.l.b16 %v876
        %v1093 = vunpack.c.l.b16 %v877
        %v1094 = vunpack.c.l.b16 %v878
        %v1095 = vunpack.c.l.b16 %v879
        %v1096 = vunpack.c.l.b16 %v880
        %v1097 = vunpack.c.l.b16 %v881
        %v1098 = vunpack.c.l.b16 %v882
        %v1099 = vunpack.c.l.b16 %v883
        %v1100 = vunpack.c.l.b16 %v884
        %v1101 = vunpack.c.l.b16 %v885
        %v1102 = vunpack.c.l.b16 %v886
        %v1103 = vunpack.c.l.b16 %v887
        %v1104 = vpack.c.b16 %v1089, %v1088
        %v1105 = vpack.c.b16 %v1091, %v1090
        %v1106 = vpack.c.b16 %v1093, %v1092
        %v1107 = vpack.c.b16 %v1095, %v1094
        %v1108 = vpack.c.b16 %v1097, %v1096
        %v1109 = vpack.c.b16 %v1099, %v1098
        %v1110 = vpack.c.b16 %v1101, %v1100
        %v1111 = vpack.c.b16 %v1103, %v1102
        %1120 = vmatprep.subr.bf16.mxu0 0
        %1121 = vmatpush1.bf16.msra.mxu0 %v1104
        %1122 = vmatprep.subr.bf16.mxu0 0
        %1123 = vmatpush1.bf16.msra.mxu0 %v1105
        %1124 = vmatprep.subr.bf16.mxu0 0
        %1125 = vmatpush1.bf16.msra.mxu0 %v1106
        %1126 = vmatprep.subr.bf16.mxu0 0
        %1127 = vmatpush1.bf16.msra.mxu0 %v1107
        %1128 = vmatprep.subr.bf16.mxu0 0
        %1129 = vmatpush1.bf16.msra.mxu0 %v1108
        %1130 = vmatprep.subr.bf16.mxu0 0
        %1131 = vmatpush1.bf16.msra.mxu0 %v1109
        %1132 = vmatprep.subr.bf16.mxu0 0
        %1133 = vmatpush1.bf16.msra.mxu0 %v1110
        %1134 = vmatprep.subr.bf16.mxu0 0
        %1135 = vmatpush1.bf16.msra.mxu0 %v1111
        %1136 = vmatprep.subr.bf16.mxu0 0
        %1137 = vmatpush1.bf16.msra.mxu0 0
        %1138 = vmatprep.subr.bf16.mxu0 0
        %1139 = vmatpush1.bf16.msra.mxu0 0
        %1140 = vmatprep.subr.bf16.mxu0 0
        %1141 = vmatpush1.bf16.msra.mxu0 0
        %1142 = vmatprep.subr.bf16.mxu0 0
        %1143 = vmatpush1.bf16.msra.mxu0 0
        %1144 = vmatprep.subr.bf16.mxu0 0
        %1145 = vmatpush1.bf16.msra.mxu0 0
        %1146 = vmatprep.subr.bf16.mxu0 0
        %1147 = vmatpush1.bf16.msra.mxu0 0
        %1148 = vmatprep.subr.bf16.mxu0 0
        %1149 = vmatpush1.bf16.msra.mxu0 0
        %1150 = vmatprep.subr.bf16.mxu0 0
        %1151 = vmatpush1.bf16.msra.mxu0 0
        %1152 = vmatprep.mubr.bf16.mxu0 0
        %1153 = vmatmul.mubr.bf16.gmra.mrb[0].mxu0 %v855
        %v1154 = vpop.f32.mrb[0].mxu0
        %v1155 = vadd.f32 0.0, %v1154
        %v1156 = vpop.f32.mrb[0].mxu0
        %v1157 = vpop.f32.mrb[0].mxu0
        %v1158 = vpop.f32.mrb[0].mxu0
        %1159 = vdwg.mxu0
        %v1176 = vunpack.c.l.b16 %v888
        %v1177 = vunpack.c.l.b16 %v889
        %v1178 = vunpack.c.l.b16 %v890
        %v1179 = vunpack.c.l.b16 %v891
        %v1180 = vunpack.c.l.b16 %v892
        %v1181 = vunpack.c.l.b16 %v893
        %v1182 = vunpack.c.l.b16 %v894
        %v1183 = vunpack.c.l.b16 %v895
        %v1184 = vunpack.c.l.b16 %v896
        %v1185 = vunpack.c.l.b16 %v897
        %v1186 = vunpack.c.l.b16 %v898
        %v1187 = vunpack.c.l.b16 %v899
        %v1188 = vunpack.c.l.b16 %v900
        %v1189 = vunpack.c.l.b16 %v901
        %v1190 = vunpack.c.l.b16 %v902
        %v1191 = vunpack.c.l.b16 %v903
        %v1192 = vpack.c.b16 %v1177, %v1176
        %v1193 = vpack.c.b16 %v1179, %v1178
        %v1194 = vpack.c.b16 %v1181, %v1180
        %v1195 = vpack.c.b16 %v1183, %v1182
        %v1196 = vpack.c.b16 %v1185, %v1184
        %v1197 = vpack.c.b16 %v1187, %v1186
        %v1198 = vpack.c.b16 %v1189, %v1188
        %v1199 = vpack.c.b16 %v1191, %v1190
        %1208 = vmatprep.subr.bf16.mxu0 0
        %1209 = vmatpush1.bf16.msra.mxu0 %v1192
        %1210 = vmatprep.subr.bf16.mxu0 0
        %1211 = vmatpush1.bf16.msra.mxu0 %v1193
        %1212 = vmatprep.subr.bf16.mxu0 0
        %1213 = vmatpush1.bf16.msra.mxu0 %v1194
        %1214 = vmatprep.subr.bf16.mxu0 0
        %1215 = vmatpush1.bf16.msra.mxu0 %v1195
        %1216 = vmatprep.subr.bf16.mxu0 0
        %1217 = vmatpush1.bf16.msra.mxu0 %v1196
        %1218 = vmatprep.subr.bf16.mxu0 0
        %1219 = vmatpush1.bf16.msra.mxu0 %v1197
        %1220 = vmatprep.subr.bf16.mxu0 0
        %1221 = vmatpush1.bf16.msra.mxu0 %v1198
        %1222 = vmatprep.subr.bf16.mxu0 0
        %1223 = vmatpush1.bf16.msra.mxu0 %v1199
        %1224 = vmatprep.subr.bf16.mxu0 0
        %1225 = vmatpush1.bf16.msra.mxu0 0
        %1226 = vmatprep.subr.bf16.mxu0 0
        %1227 = vmatpush1.bf16.msra.mxu0 0
        %1228 = vmatprep.subr.bf16.mxu0 0
        %1229 = vmatpush1.bf16.msra.mxu0 0
        %1230 = vmatprep.subr.bf16.mxu0 0
        %1231 = vmatpush1.bf16.msra.mxu0 0
        %1232 = vmatprep.subr.bf16.mxu0 0
        %1233 = vmatpush1.bf16.msra.mxu0 0
        %1234 = vmatprep.subr.bf16.mxu0 0
        %1235 = vmatpush1.bf16.msra.mxu0 0
        %1236 = vmatprep.subr.bf16.mxu0 0
        %1237 = vmatpush1.bf16.msra.mxu0 0
        %1238 = vmatprep.subr.bf16.mxu0 0
        %1239 = vmatpush1.bf16.msra.mxu0 0
        %1240 = vmatprep.mubr.bf16.mxu0 0
        %1241 = vmatmul.mubr.bf16.gmra.mrb[0].mxu0 %v855
        %v1242 = vpop.f32.mrb[0].mxu0
        %v1243 = vadd.f32 0.0, %v1242
        %v1244 = vpop.f32.mrb[0].mxu0
        %v1245 = vpop.f32.mrb[0].mxu0
        %v1246 = vpop.f32.mrb[0].mxu0
        %1247 = vdwg.mxu0
        %v1264 = vunpack.c.l.b16 %v904
        %v1265 = vunpack.c.l.b16 %v905
        %v1266 = vunpack.c.l.b16 %v906
        %v1267 = vunpack.c.l.b16 %v907
        %v1268 = vunpack.c.l.b16 %v908
        %v1269 = vunpack.c.l.b16 %v909
        %v1270 = vunpack.c.l.b16 %v910
        %v1271 = vunpack.c.l.b16 %v911
        %v1272 = vunpack.c.l.b16 %v912
        %v1273 = vunpack.c.l.b16 %v913
        %v1274 = vunpack.c.l.b16 %v914
        %v1275 = vunpack.c.l.b16 %v915
        %v1276 = vunpack.c.l.b16 %v916
        %v1277 = vunpack.c.l.b16 %v917
        %v1278 = vunpack.c.l.b16 %v918
        %v1279 = vunpack.c.l.b16 %v919
        %v1280 = vpack.c.b16 %v1265, %v1264
        %v1281 = vpack.c.b16 %v1267, %v1266
        %v1282 = vpack.c.b16 %v1269, %v1268
        %v1283 = vpack.c.b16 %v1271, %v1270
        %v1284 = vpack.c.b16 %v1273, %v1272
        %v1285 = vpack.c.b16 %v1275, %v1274
        %v1286 = vpack.c.b16 %v1277, %v1276
        %v1287 = vpack.c.b16 %v1279, %v1278
        %1296 = vmatprep.subr.bf16.mxu0 0
        %1297 = vmatpush1.bf16.msra.mxu0 %v1280
        %1298 = vmatprep.subr.bf16.mxu0 0
        %1299 = vmatpush1.bf16.msra.mxu0 %v1281
        %1300 = vmatprep.subr.bf16.mxu0 0
        %1301 = vmatpush1.bf16.msra.mxu0 %v1282
        %1302 = vmatprep.subr.bf16.mxu0 0
        %1303 = vmatpush1.bf16.msra.mxu0 %v1283
        %1304 = vmatprep.subr.bf16.mxu0 0
        %1305 = vmatpush1.bf16.msra.mxu0 %v1284
        %1306 = vmatprep.subr.bf16.mxu0 0
        %1307 = vmatpush1.bf16.msra.mxu0 %v1285
        %1308 = vmatprep.subr.bf16.mxu0 0
        %1309 = vmatpush1.bf16.msra.mxu0 %v1286
        %1310 = vmatprep.subr.bf16.mxu0 0
        %1311 = vmatpush1.bf16.msra.mxu0 %v1287
        %1312 = vmatprep.subr.bf16.mxu0 0
        %1313 = vmatpush1.bf16.msra.mxu0 0
        %1314 = vmatprep.subr.bf16.mxu0 0
        %1315 = vmatpush1.bf16.msra.mxu0 0
        %1316 = vmatprep.subr.bf16.mxu0 0
        %1317 = vmatpush1.bf16.msra.mxu0 0
        %1318 = vmatprep.subr.bf16.mxu0 0
        %1319 = vmatpush1.bf16.msra.mxu0 0
        %1320 = vmatprep.subr.bf16.mxu0 0
        %1321 = vmatpush1.bf16.msra.mxu0 0
        %1322 = vmatprep.subr.bf16.mxu0 0
        %1323 = vmatpush1.bf16.msra.mxu0 0
        %1324 = vmatprep.subr.bf16.mxu0 0
        %1325 = vmatpush1.bf16.msra.mxu0 0
        %1326 = vmatprep.subr.bf16.mxu0 0
        %1327 = vmatpush1.bf16.msra.mxu0 0
        %1328 = vmatprep.mubr.bf16.mxu0 0
        %1329 = vmatmul.mubr.bf16.gmra.mrb[0].mxu0 %v855
        %v1330 = vpop.f32.mrb[0].mxu0
        %v1331 = vadd.f32 0.0, %v1330
        %v1332 = vpop.f32.mrb[0].mxu0
        %v1333 = vpop.f32.mrb[0].mxu0
        %v1334 = vpop.f32.mrb[0].mxu0
        %1335 = vdwg.mxu0
        %v1352 = vunpack.c.l.b16 %v920
        %v1353 = vunpack.c.l.b16 %v921
        %v1354 = vunpack.c.l.b16 %v922
        %v1355 = vunpack.c.l.b16 %v923
        %v1356 = vunpack.c.l.b16 %v924
        %v1357 = vunpack.c.l.b16 %v925
        %v1358 = vunpack.c.l.b16 %v926
        %v1359 = vunpack.c.l.b16 %v927
        %v1360 = vunpack.c.l.b16 %v928
        %v1361 = vunpack.c.l.b16 %v929
        %v1362 = vunpack.c.l.b16 %v930
        %v1363 = vunpack.c.l.b16 %v931
        %v1364 = vunpack.c.l.b16 %v932
        %v1365 = vunpack.c.l.b16 %v933
        %v1366 = vunpack.c.l.b16 %v934
        %v1367 = vunpack.c.l.b16 %v935
        %v1368 = vpack.c.b16 %v1353, %v1352
        %v1369 = vpack.c.b16 %v1355, %v1354
        %v1370 = vpack.c.b16 %v1357, %v1356
        %v1371 = vpack.c.b16 %v1359, %v1358
        %v1372 = vpack.c.b16 %v1361, %v1360
        %v1373 = vpack.c.b16 %v1363, %v1362
        %v1374 = vpack.c.b16 %v1365, %v1364
        %v1375 = vpack.c.b16 %v1367, %v1366
        %1384 = vmatprep.subr.bf16.mxu0 0
        %1385 = vmatpush1.bf16.msra.mxu0 %v1368
        %1386 = vmatprep.subr.bf16.mxu0 0
        %1387 = vmatpush1.bf16.msra.mxu0 %v1369
        %1388 = vmatprep.subr.bf16.mxu0 0
        %1389 = vmatpush1.bf16.msra.mxu0 %v1370
        %1390 = vmatprep.subr.bf16.mxu0 0
        %1391 = vmatpush1.bf16.msra.mxu0 %v1371
        %1392 = vmatprep.subr.bf16.mxu0 0
        %1393 = vmatpush1.bf16.msra.mxu0 %v1372
        %1394 = vmatprep.subr.bf16.mxu0 0
        %1395 = vmatpush1.bf16.msra.mxu0 %v1373
        %1396 = vmatprep.subr.bf16.mxu0 0
        %1397 = vmatpush1.bf16.msra.mxu0 %v1374
        %1398 = vmatprep.subr.bf16.mxu0 0
        %1399 = vmatpush1.bf16.msra.mxu0 %v1375
        %1400 = vmatprep.subr.bf16.mxu0 0
        %1401 = vmatpush1.bf16.msra.mxu0 0
        %1402 = vmatprep.subr.bf16.mxu0 0
        %1403 = vmatpush1.bf16.msra.mxu0 0
        %1404 = vmatprep.subr.bf16.mxu0 0
        %1405 = vmatpush1.bf16.msra.mxu0 0
        %1406 = vmatprep.subr.bf16.mxu0 0
        %1407 = vmatpush1.bf16.msra.mxu0 0
        %1408 = vmatprep.subr.bf16.mxu0 0
        %1409 = vmatpush1.bf16.msra.mxu0 0
        %1410 = vmatprep.subr.bf16.mxu0 0
        %1411 = vmatpush1.bf16.msra.mxu0 0
        %1412 = vmatprep.subr.bf16.mxu0 0
        %1413 = vmatpush1.bf16.msra.mxu0 0
        %1414 = vmatprep.subr.bf16.mxu0 0
        %1415 = vmatpush1.bf16.msra.mxu0 0
        %1416 = vmatprep.mubr.bf16.mxu0 0
        %1417 = vmatmul.mubr.bf16.gmra.mrb[0].mxu0 %v855
        %v1418 = vpop.f32.mrb[0].mxu0
        %v1419 = vadd.f32 0.0, %v1418
        %v1420 = vpop.f32.mrb[0].mxu0
        %v1421 = vpop.f32.mrb[0].mxu0
        %v1422 = vpop.f32.mrb[0].mxu0
        %1423 = vdwg.mxu0
        %v1440 = vunpack.c.l.b16 %v936
        %v1441 = vunpack.c.l.b16 %v937
        %v1442 = vunpack.c.l.b16 %v938
        %v1443 = vunpack.c.l.b16 %v939
        %v1444 = vunpack.c.l.b16 %v940
        %v1445 = vunpack.c.l.b16 %v941
        %v1446 = vunpack.c.l.b16 %v942
        %v1447 = vunpack.c.l.b16 %v943
        %v1448 = vunpack.c.l.b16 %v944
        %v1449 = vunpack.c.l.b16 %v945
        %v1450 = vunpack.c.l.b16 %v946
        %v1451 = vunpack.c.l.b16 %v947
        %v1452 = vunpack.c.l.b16 %v948
        %v1453 = vunpack.c.l.b16 %v949
        %v1454 = vunpack.c.l.b16 %v950
        %v1455 = vunpack.c.l.b16 %v951
        %v1456 = vpack.c.b16 %v1441, %v1440
        %v1457 = vpack.c.b16 %v1443, %v1442
        %v1458 = vpack.c.b16 %v1445, %v1444
        %v1459 = vpack.c.b16 %v1447, %v1446
        %v1460 = vpack.c.b16 %v1449, %v1448
        %v1461 = vpack.c.b16 %v1451, %v1450
        %v1462 = vpack.c.b16 %v1453, %v1452
        %v1463 = vpack.c.b16 %v1455, %v1454
        %1472 = vmatprep.subr.bf16.mxu0 0
        %1473 = vmatpush1.bf16.msra.mxu0 %v1456
        %1474 = vmatprep.subr.bf16.mxu0 0
        %1475 = vmatpush1.bf16.msra.mxu0 %v1457
        %1476 = vmatprep.subr.bf16.mxu0 0
        %1477 = vmatpush1.bf16.msra.mxu0 %v1458
        %1478 = vmatprep.subr.bf16.mxu0 0
        %1479 = vmatpush1.bf16.msra.mxu0 %v1459
        %1480 = vmatprep.subr.bf16.mxu0 0
        %1481 = vmatpush1.bf16.msra.mxu0 %v1460
        %1482 = vmatprep.subr.bf16.mxu0 0
        %1483 = vmatpush1.bf16.msra.mxu0 %v1461
        %1484 = vmatprep.subr.bf16.mxu0 0
        %1485 = vmatpush1.bf16.msra.mxu0 %v1462
        %1486 = vmatprep.subr.bf16.mxu0 0
        %1487 = vmatpush1.bf16.msra.mxu0 %v1463
        %1488 = vmatprep.subr.bf16.mxu0 0
        %1489 = vmatpush1.bf16.msra.mxu0 0
        %1490 = vmatprep.subr.bf16.mxu0 0
        %1491 = vmatpush1.bf16.msra.mxu0 0
        %1492 = vmatprep.subr.bf16.mxu0 0
        %1493 = vmatpush1.bf16.msra.mxu0 0
        %1494 = vmatprep.subr.bf16.mxu0 0
        %1495 = vmatpush1.bf16.msra.mxu0 0
        %1496 = vmatprep.subr.bf16.mxu0 0
        %1497 = vmatpush1.bf16.msra.mxu0 0
        %1498 = vmatprep.subr.bf16.mxu0 0
        %1499 = vmatpush1.bf16.msra.mxu0 0
        %1500 = vmatprep.subr.bf16.mxu0 0
        %1501 = vmatpush1.bf16.msra.mxu0 0
        %1502 = vmatprep.subr.bf16.mxu0 0
        %1503 = vmatpush1.bf16.msra.mxu0 0
        %1504 = vmatprep.mubr.bf16.mxu0 0
        %1505 = vmatmul.mubr.bf16.gmra.mrb[0].mxu0 %v855
        %v1506 = vpop.f32.mrb[0].mxu0
        %v1507 = vadd.f32 0.0, %v1506
        %v1508 = vpop.f32.mrb[0].mxu0
        %v1509 = vpop.f32.mrb[0].mxu0
        %v1510 = vpop.f32.mrb[0].mxu0
        %1511 = vdwg.mxu0
        %v1528 = vunpack.c.l.b16 %v952
        %v1529 = vunpack.c.l.b16 %v953
        %v1530 = vunpack.c.l.b16 %v954
        %v1531 = vunpack.c.l.b16 %v955
        %v1532 = vunpack.c.l.b16 %v956
        %v1533 = vunpack.c.l.b16 %v957
        %v1534 = vunpack.c.l.b16 %v958
        %v1535 = vunpack.c.l.b16 %v959
        %v1536 = vunpack.c.l.b16 %v960
        %v1537 = vunpack.c.l.b16 %v961
        %v1538 = vunpack.c.l.b16 %v962
        %v1539 = vunpack.c.l.b16 %v963
        %v1540 = vunpack.c.l.b16 %v964
        %v1541 = vunpack.c.l.b16 %v965
        %v1542 = vunpack.c.l.b16 %v966
        %v1543 = vunpack.c.l.b16 %v967
        %v1544 = vpack.c.b16 %v1529, %v1528
        %v1545 = vpack.c.b16 %v1531, %v1530
        %v1546 = vpack.c.b16 %v1533, %v1532
        %v1547 = vpack.c.b16 %v1535, %v1534
        %v1548 = vpack.c.b16 %v1537, %v1536
        %v1549 = vpack.c.b16 %v1539, %v1538
        %v1550 = vpack.c.b16 %v1541, %v1540
        %v1551 = vpack.c.b16 %v1543, %v1542
        %1560 = vmatprep.subr.bf16.mxu0 0
        %1561 = vmatpush1.bf16.msra.mxu0 %v1544
        %1562 = vmatprep.subr.bf16.mxu0 0
        %1563 = vmatpush1.bf16.msra.mxu0 %v1545
        %1564 = vmatprep.subr.bf16.mxu0 0
        %1565 = vmatpush1.bf16.msra.mxu0 %v1546
        %1566 = vmatprep.subr.bf16.mxu0 0
        %1567 = vmatpush1.bf16.msra.mxu0 %v1547
        %1568 = vmatprep.subr.bf16.mxu0 0
        %1569 = vmatpush1.bf16.msra.mxu0 %v1548
        %1570 = vmatprep.subr.bf16.mxu0 0
        %1571 = vmatpush1.bf16.msra.mxu0 %v1549
        %1572 = vmatprep.subr.bf16.mxu0 0
        %1573 = vmatpush1.bf16.msra.mxu0 %v1550
        %1574 = vmatprep.subr.bf16.mxu0 0
        %1575 = vmatpush1.bf16.msra.mxu0 %v1551
        %1576 = vmatprep.subr.bf16.mxu0 0
        %1577 = vmatpush1.bf16.msra.mxu0 0
        %1578 = vmatprep.subr.bf16.mxu0 0
        %1579 = vmatpush1.bf16.msra.mxu0 0
        %1580 = vmatprep.subr.bf16.mxu0 0
        %1581 = vmatpush1.bf16.msra.mxu0 0
        %1582 = vmatprep.subr.bf16.mxu0 0
        %1583 = vmatpush1.bf16.msra.mxu0 0
        %1584 = vmatprep.subr.bf16.mxu0 0
        %1585 = vmatpush1.bf16.msra.mxu0 0
        %1586 = vmatprep.subr.bf16.mxu0 0
        %1587 = vmatpush1.bf16.msra.mxu0 0
        %1588 = vmatprep.subr.bf16.mxu0 0
        %1589 = vmatpush1.bf16.msra.mxu0 0
        %1590 = vmatprep.subr.bf16.mxu0 0
        %1591 = vmatpush1.bf16.msra.mxu0 0
        %1592 = vmatprep.mubr.bf16.mxu0 0
        %1593 = vmatmul.mubr.bf16.gmra.mrb[0].mxu0 %v855
        %v1594 = vpop.f32.mrb[0].mxu0
        %v1595 = vadd.f32 0.0, %v1594
        %v1596 = vpop.f32.mrb[0].mxu0
        %v1597 = vpop.f32.mrb[0].mxu0
        %v1598 = vpop.f32.mrb[0].mxu0
        %1599 = vdwg.mxu0
        %v1616 = vunpack.c.l.b16 %v968
        %v1617 = vunpack.c.l.b16 %v969
        %v1618 = vunpack.c.l.b16 %v970
        %v1619 = vunpack.c.l.b16 %v971
        %v1620 = vunpack.c.l.b16 %v972
        %v1621 = vunpack.c.l.b16 %v973
        %v1622 = vunpack.c.l.b16 %v974
        %v1623 = vunpack.c.l.b16 %v975
        %v1624 = vunpack.c.l.b16 %v976
        %v1625 = vunpack.c.l.b16 %v977
        %v1626 = vunpack.c.l.b16 %v978
        %v1627 = vunpack.c.l.b16 %v979
        %v1628 = vunpack.c.l.b16 %v980
        %v1629 = vunpack.c.l.b16 %v981
        %v1630 = vunpack.c.l.b16 %v982
        %v1631 = vunpack.c.l.b16 %v983
        %v1632 = vpack.c.b16 %v1617, %v1616
        %v1633 = vpack.c.b16 %v1619, %v1618
        %v1634 = vpack.c.b16 %v1621, %v1620
        %v1635 = vpack.c.b16 %v1623, %v1622
        %v1636 = vpack.c.b16 %v1625, %v1624
        %v1637 = vpack.c.b16 %v1627, %v1626
        %v1638 = vpack.c.b16 %v1629, %v1628
        %v1639 = vpack.c.b16 %v1631, %v1630
        %1648 = vmatprep.subr.bf16.mxu0 0
        %1649 = vmatpush1.bf16.msra.mxu0 %v1632
        %1650 = vmatprep.subr.bf16.mxu0 0
        %1651 = vmatpush1.bf16.msra.mxu0 %v1633
        %1652 = vmatprep.subr.bf16.mxu0 0
        %1653 = vmatpush1.bf16.msra.mxu0 %v1634
        %1654 = vmatprep.subr.bf16.mxu0 0
        %1655 = vmatpush1.bf16.msra.mxu0 %v1635
        %1656 = vmatprep.subr.bf16.mxu0 0
        %1657 = vmatpush1.bf16.msra.mxu0 %v1636
        %1658 = vmatprep.subr.bf16.mxu0 0
        %1659 = vmatpush1.bf16.msra.mxu0 %v1637
        %1660 = vmatprep.subr.bf16.mxu0 0
        %1661 = vmatpush1.bf16.msra.mxu0 %v1638
        %1662 = vmatprep.subr.bf16.mxu0 0
        %1663 = vmatpush1.bf16.msra.mxu0 %v1639
        %1664 = vmatprep.subr.bf16.mxu0 0
        %1665 = vmatpush1.bf16.msra.mxu0 0
        %1666 = vmatprep.subr.bf16.mxu0 0
        %1667 = vmatpush1.bf16.msra.mxu0 0
        %1668 = vmatprep.subr.bf16.mxu0 0
        %1669 = vmatpush1.bf16.msra.mxu0 0
        %1670 = vmatprep.subr.bf16.mxu0 0
        %1671 = vmatpush1.bf16.msra.mxu0 0
        %1672 = vmatprep.subr.bf16.mxu0 0
        %1673 = vmatpush1.bf16.msra.mxu0 0
        %1674 = vmatprep.subr.bf16.mxu0 0
        %1675 = vmatpush1.bf16.msra.mxu0 0
        %1676 = vmatprep.subr.bf16.mxu0 0
        %1677 = vmatpush1.bf16.msra.mxu0 0
        %1678 = vmatprep.subr.bf16.mxu0 0
        %1679 = vmatpush1.bf16.msra.mxu0 0
        %1680 = vmatprep.mubr.bf16.mxu0 0
        %1681 = vmatmul.mubr.bf16.gmra.mrb[0].mxu0 %v855
        %v1682 = vpop.f32.mrb[0].mxu0
        %v1683 = vadd.f32 0.0, %v1682
        %v1684 = vpop.f32.mrb[0].mxu0
        %v1685 = vpop.f32.mrb[0].mxu0
        %v1686 = vpop.f32.mrb[0].mxu0
        %1687 = vdwg.mxu0
        %v1688 = vpack.c.bf16 %v1067, %v1067
        %v1689 = vpack.c.bf16 %v1155, %v1155
        %v1690 = vpack.c.bf16 %v1243, %v1243
        %v1691 = vpack.c.bf16 %v1331, %v1331
        %v1692 = vpack.c.bf16 %v1419, %v1419
        %v1693 = vpack.c.bf16 %v1507, %v1507
        %v1694 = vpack.c.bf16 %v1595, %v1595
        %v1695 = vpack.c.bf16 %v1683, %v1683
        %v1696 = vld [vmem:[#allocation2] sm:$0xff]
        %v1697 = vld [vmem:[#allocation2 + $0x8] sm:$0xff]
        %v1698 = vld [vmem:[#allocation2 + $0x10] sm:$0xff]
        %v1699 = vld [vmem:[#allocation2 + $0x18] sm:$0xff]
        %v1700 = vld [vmem:[#allocation2 + $0x20] sm:$0xff]
        %v1701 = vld [vmem:[#allocation2 + $0x28] sm:$0xff]
        %v1702 = vld [vmem:[#allocation2 + $0x30] sm:$0xff]
        %v1703 = vld [vmem:[#allocation2 + $0x38] sm:$0xff]
        %vm1704 = vcmask 130048
        %v1706 = vsel %vm1704, %v1688, 0
        %1708 = vmatprep.subr.bf16.mxu0 0
        %1709 = vmatpush1.bf16.msra.mxu0 %v1696
        %1710 = vmatprep.subr.bf16.mxu0 0
        %1711 = vmatpush1.bf16.msra.mxu0 0
        %1712 = vmatprep.subr.bf16.mxu0 0
        %1713 = vmatpush1.bf16.msra.mxu0 0
        %1714 = vmatprep.subr.bf16.mxu0 0
        %1715 = vmatpush1.bf16.msra.mxu0 0
        %1716 = vmatprep.subr.bf16.mxu0 0
        %1717 = vmatpush1.bf16.msra.mxu0 0
        %1718 = vmatprep.subr.bf16.mxu0 0
        %1719 = vmatpush1.bf16.msra.mxu0 0
        %1720 = vmatprep.subr.bf16.mxu0 0
        %1721 = vmatpush1.bf16.msra.mxu0 0
        %1722 = vmatprep.subr.bf16.mxu0 0
        %1723 = vmatpush1.bf16.msra.mxu0 0
        %1724 = vmatprep.subr.bf16.mxu0 0
        %1725 = vmatpush1.bf16.msra.mxu0 0
        %1726 = vmatprep.subr.bf16.mxu0 0
        %1727 = vmatpush1.bf16.msra.mxu0 0
        %1728 = vmatprep.subr.bf16.mxu0 0
        %1729 = vmatpush1.bf16.msra.mxu0 0
        %1730 = vmatprep.subr.bf16.mxu0 0
        %1731 = vmatpush1.bf16.msra.mxu0 0
        %1732 = vmatprep.subr.bf16.mxu0 0
        %1733 = vmatpush1.bf16.msra.mxu0 0
        %1734 = vmatprep.subr.bf16.mxu0 0
        %1735 = vmatpush1.bf16.msra.mxu0 0
        %1736 = vmatprep.subr.bf16.mxu0 0
        %1737 = vmatpush1.bf16.msra.mxu0 0
        %1738 = vmatprep.subr.bf16.mxu0 0
        %1739 = vmatpush1.bf16.msra.mxu0 0
        %1740 = vmatprep.mubr.bf16.mxu0 0
        %1741 = vmatmul.mubr.bf16.gmra.mrb[0].mxu0 %v1706
        %v1742 = vpop.f32.mrb[0].mxu0
        %v1743 = vadd.f32 0.0, %v1742
        %v1744 = vpop.f32.mrb[0].mxu0
        %v1745 = vpop.f32.mrb[0].mxu0
        %v1746 = vpop.f32.mrb[0].mxu0
        %1747 = vdwg.mxu0
        %v1749 = vsel %vm1704, %v1689, 0
        %1751 = vmatprep.subr.bf16.mxu0 0
        %1752 = vmatpush1.bf16.msra.mxu0 %v1697
        %1753 = vmatprep.subr.bf16.mxu0 0
        %1754 = vmatpush1.bf16.msra.mxu0 0
        %1755 = vmatprep.subr.bf16.mxu0 0
        %1756 = vmatpush1.bf16.msra.mxu0 0
        %1757 = vmatprep.subr.bf16.mxu0 0
        %1758 = vmatpush1.bf16.msra.mxu0 0
        %1759 = vmatprep.subr.bf16.mxu0 0
        %1760 = vmatpush1.bf16.msra.mxu0 0
        %1761 = vmatprep.subr.bf16.mxu0 0
        %1762 = vmatpush1.bf16.msra.mxu0 0
        %1763 = vmatprep.subr.bf16.mxu0 0
        %1764 = vmatpush1.bf16.msra.mxu0 0
        %1765 = vmatprep.subr.bf16.mxu0 0
        %1766 = vmatpush1.bf16.msra.mxu0 0
        %1767 = vmatprep.subr.bf16.mxu0 0
        %1768 = vmatpush1.bf16.msra.mxu0 0
        %1769 = vmatprep.subr.bf16.mxu0 0
        %1770 = vmatpush1.bf16.msra.mxu0 0
        %1771 = vmatprep.subr.bf16.mxu0 0
        %1772 = vmatpush1.bf16.msra.mxu0 0
        %1773 = vmatprep.subr.bf16.mxu0 0
        %1774 = vmatpush1.bf16.msra.mxu0 0
        %1775 = vmatprep.subr.bf16.mxu0 0
        %1776 = vmatpush1.bf16.msra.mxu0 0
        %1777 = vmatprep.subr.bf16.mxu0 0
        %1778 = vmatpush1.bf16.msra.mxu0 0
        %1779 = vmatprep.subr.bf16.mxu0 0
        %1780 = vmatpush1.bf16.msra.mxu0 0
        %1781 = vmatprep.subr.bf16.mxu0 0
        %1782 = vmatpush1.bf16.msra.mxu0 0
        %1783 = vmatprep.mubr.bf16.mxu0 0
        %1784 = vmatmul.mubr.bf16.gmra.mrb[0].mxu0 %v1749
        %v1785 = vpop.f32.mrb[0].mxu0
        %v1786 = vadd.f32 0.0, %v1785
        %v1787 = vpop.f32.mrb[0].mxu0
        %v1788 = vpop.f32.mrb[0].mxu0
        %v1789 = vpop.f32.mrb[0].mxu0
        %1790 = vdwg.mxu0
        %v1792 = vsel %vm1704, %v1690, 0
        %1794 = vmatprep.subr.bf16.mxu0 0
        %1795 = vmatpush1.bf16.msra.mxu0 %v1698
        %1796 = vmatprep.subr.bf16.mxu0 0
        %1797 = vmatpush1.bf16.msra.mxu0 0
        %1798 = vmatprep.subr.bf16.mxu0 0
        %1799 = vmatpush1.bf16.msra.mxu0 0
        %1800 = vmatprep.subr.bf16.mxu0 0
        %1801 = vmatpush1.bf16.msra.mxu0 0
        %1802 = vmatprep.subr.bf16.mxu0 0
        %1803 = vmatpush1.bf16.msra.mxu0 0
        %1804 = vmatprep.subr.bf16.mxu0 0
        %1805 = vmatpush1.bf16.msra.mxu0 0
        %1806 = vmatprep.subr.bf16.mxu0 0
        %1807 = vmatpush1.bf16.msra.mxu0 0
        %1808 = vmatprep.subr.bf16.mxu0 0
        %1809 = vmatpush1.bf16.msra.mxu0 0
        %1810 = vmatprep.subr.bf16.mxu0 0
        %1811 = vmatpush1.bf16.msra.mxu0 0
        %1812 = vmatprep.subr.bf16.mxu0 0
        %1813 = vmatpush1.bf16.msra.mxu0 0
        %1814 = vmatprep.subr.bf16.mxu0 0
        %1815 = vmatpush1.bf16.msra.mxu0 0
        %1816 = vmatprep.subr.bf16.mxu0 0
        %1817 = vmatpush1.bf16.msra.mxu0 0
        %1818 = vmatprep.subr.bf16.mxu0 0
        %1819 = vmatpush1.bf16.msra.mxu0 0
        %1820 = vmatprep.subr.bf16.mxu0 0
        %1821 = vmatpush1.bf16.msra.mxu0 0
        %1822 = vmatprep.subr.bf16.mxu0 0
        %1823 = vmatpush1.bf16.msra.mxu0 0
        %1824 = vmatprep.subr.bf16.mxu0 0
        %1825 = vmatpush1.bf16.msra.mxu0 0
        %1826 = vmatprep.mubr.bf16.mxu0 0
        %1827 = vmatmul.mubr.bf16.gmra.mrb[0].mxu0 %v1792
        %v1828 = vpop.f32.mrb[0].mxu0
        %v1829 = vadd.f32 0.0, %v1828
        %v1830 = vpop.f32.mrb[0].mxu0
        %v1831 = vpop.f32.mrb[0].mxu0
        %v1832 = vpop.f32.mrb[0].mxu0
        %1833 = vdwg.mxu0
        %v1835 = vsel %vm1704, %v1691, 0
        %1837 = vmatprep.subr.bf16.mxu0 0
        %1838 = vmatpush1.bf16.msra.mxu0 %v1699
        %1839 = vmatprep.subr.bf16.mxu0 0
        %1840 = vmatpush1.bf16.msra.mxu0 0
        %1841 = vmatprep.subr.bf16.mxu0 0
        %1842 = vmatpush1.bf16.msra.mxu0 0
        %1843 = vmatprep.subr.bf16.mxu0 0
        %1844 = vmatpush1.bf16.msra.mxu0 0
        %1845 = vmatprep.subr.bf16.mxu0 0
        %1846 = vmatpush1.bf16.msra.mxu0 0
        %1847 = vmatprep.subr.bf16.mxu0 0
        %1848 = vmatpush1.bf16.msra.mxu0 0
        %1849 = vmatprep.subr.bf16.mxu0 0
        %1850 = vmatpush1.bf16.msra.mxu0 0
        %1851 = vmatprep.subr.bf16.mxu0 0
        %1852 = vmatpush1.bf16.msra.mxu0 0
        %1853 = vmatprep.subr.bf16.mxu0 0
        %1854 = vmatpush1.bf16.msra.mxu0 0
        %1855 = vmatprep.subr.bf16.mxu0 0
        %1856 = vmatpush1.bf16.msra.mxu0 0
        %1857 = vmatprep.subr.bf16.mxu0 0
        %1858 = vmatpush1.bf16.msra.mxu0 0
        %1859 = vmatprep.subr.bf16.mxu0 0
        %1860 = vmatpush1.bf16.msra.mxu0 0
        %1861 = vmatprep.subr.bf16.mxu0 0
        %1862 = vmatpush1.bf16.msra.mxu0 0
        %1863 = vmatprep.subr.bf16.mxu0 0
        %1864 = vmatpush1.bf16.msra.mxu0 0
        %1865 = vmatprep.subr.bf16.mxu0 0
        %1866 = vmatpush1.bf16.msra.mxu0 0
        %1867 = vmatprep.subr.bf16.mxu0 0
        %1868 = vmatpush1.bf16.msra.mxu0 0
        %1869 = vmatprep.mubr.bf16.mxu0 0
        %1870 = vmatmul.mubr.bf16.gmra.mrb[0].mxu0 %v1835
        %v1871 = vpop.f32.mrb[0].mxu0
        %v1872 = vadd.f32 0.0, %v1871
        %v1873 = vpop.f32.mrb[0].mxu0
        %v1874 = vpop.f32.mrb[0].mxu0
        %v1875 = vpop.f32.mrb[0].mxu0
        %1876 = vdwg.mxu0
        %v1878 = vsel %vm1704, %v1692, 0
        %1880 = vmatprep.subr.bf16.mxu0 0
        %1881 = vmatpush1.bf16.msra.mxu0 %v1700
        %1882 = vmatprep.subr.bf16.mxu0 0
        %1883 = vmatpush1.bf16.msra.mxu0 0
        %1884 = vmatprep.subr.bf16.mxu0 0
        %1885 = vmatpush1.bf16.msra.mxu0 0
        %1886 = vmatprep.subr.bf16.mxu0 0
        %1887 = vmatpush1.bf16.msra.mxu0 0
        %1888 = vmatprep.subr.bf16.mxu0 0
        %1889 = vmatpush1.bf16.msra.mxu0 0
        %1890 = vmatprep.subr.bf16.mxu0 0
        %1891 = vmatpush1.bf16.msra.mxu0 0
        %1892 = vmatprep.subr.bf16.mxu0 0
        %1893 = vmatpush1.bf16.msra.mxu0 0
        %1894 = vmatprep.subr.bf16.mxu0 0
        %1895 = vmatpush1.bf16.msra.mxu0 0
        %1896 = vmatprep.subr.bf16.mxu0 0
        %1897 = vmatpush1.bf16.msra.mxu0 0
        %1898 = vmatprep.subr.bf16.mxu0 0
        %1899 = vmatpush1.bf16.msra.mxu0 0
        %1900 = vmatprep.subr.bf16.mxu0 0
        %1901 = vmatpush1.bf16.msra.mxu0 0
        %1902 = vmatprep.subr.bf16.mxu0 0
        %1903 = vmatpush1.bf16.msra.mxu0 0
        %1904 = vmatprep.subr.bf16.mxu0 0
        %1905 = vmatpush1.bf16.msra.mxu0 0
        %1906 = vmatprep.subr.bf16.mxu0 0
        %1907 = vmatpush1.bf16.msra.mxu0 0
        %1908 = vmatprep.subr.bf16.mxu0 0
        %1909 = vmatpush1.bf16.msra.mxu0 0
        %1910 = vmatprep.subr.bf16.mxu0 0
        %1911 = vmatpush1.bf16.msra.mxu0 0
        %1912 = vmatprep.mubr.bf16.mxu0 0
        %1913 = vmatmul.mubr.bf16.gmra.mrb[0].mxu0 %v1878
        %v1914 = vpop.f32.mrb[0].mxu0
        %v1915 = vadd.f32 0.0, %v1914
        %v1916 = vpop.f32.mrb[0].mxu0
        %v1917 = vpop.f32.mrb[0].mxu0
        %v1918 = vpop.f32.mrb[0].mxu0
        %1919 = vdwg.mxu0
        %v1921 = vsel %vm1704, %v1693, 0
        %1923 = vmatprep.subr.bf16.mxu0 0
        %1924 = vmatpush1.bf16.msra.mxu0 %v1701
        %1925 = vmatprep.subr.bf16.mxu0 0
        %1926 = vmatpush1.bf16.msra.mxu0 0
        %1927 = vmatprep.subr.bf16.mxu0 0
        %1928 = vmatpush1.bf16.msra.mxu0 0
        %1929 = vmatprep.subr.bf16.mxu0 0
        %1930 = vmatpush1.bf16.msra.mxu0 0
        %1931 = vmatprep.subr.bf16.mxu0 0
        %1932 = vmatpush1.bf16.msra.mxu0 0
        %1933 = vmatprep.subr.bf16.mxu0 0
        %1934 = vmatpush1.bf16.msra.mxu0 0
        %1935 = vmatprep.subr.bf16.mxu0 0
        %1936 = vmatpush1.bf16.msra.mxu0 0
        %1937 = vmatprep.subr.bf16.mxu0 0
        %1938 = vmatpush1.bf16.msra.mxu0 0
        %1939 = vmatprep.subr.bf16.mxu0 0
        %1940 = vmatpush1.bf16.msra.mxu0 0
        %1941 = vmatprep.subr.bf16.mxu0 0
        %1942 = vmatpush1.bf16.msra.mxu0 0
        %1943 = vmatprep.subr.bf16.mxu0 0
        %1944 = vmatpush1.bf16.msra.mxu0 0
        %1945 = vmatprep.subr.bf16.mxu0 0
        %1946 = vmatpush1.bf16.msra.mxu0 0
        %1947 = vmatprep.subr.bf16.mxu0 0
        %1948 = vmatpush1.bf16.msra.mxu0 0
        %1949 = vmatprep.subr.bf16.mxu0 0
        %1950 = vmatpush1.bf16.msra.mxu0 0
        %1951 = vmatprep.subr.bf16.mxu0 0
        %1952 = vmatpush1.bf16.msra.mxu0 0
        %1953 = vmatprep.subr.bf16.mxu0 0
        %1954 = vmatpush1.bf16.msra.mxu0 0
        %1955 = vmatprep.mubr.bf16.mxu0 0
        %1956 = vmatmul.mubr.bf16.gmra.mrb[0].mxu0 %v1921
        %v1957 = vpop.f32.mrb[0].mxu0
        %v1958 = vadd.f32 0.0, %v1957
        %v1959 = vpop.f32.mrb[0].mxu0
        %v1960 = vpop.f32.mrb[0].mxu0
        %v1961 = vpop.f32.mrb[0].mxu0
        %1962 = vdwg.mxu0
        %v1964 = vsel %vm1704, %v1694, 0
        %1966 = vmatprep.subr.bf16.mxu0 0
        %1967 = vmatpush1.bf16.msra.mxu0 %v1702
        %1968 = vmatprep.subr.bf16.mxu0 0
        %1969 = vmatpush1.bf16.msra.mxu0 0
        %1970 = vmatprep.subr.bf16.mxu0 0
        %1971 = vmatpush1.bf16.msra.mxu0 0
        %1972 = vmatprep.subr.bf16.mxu0 0
        %1973 = vmatpush1.bf16.msra.mxu0 0
        %1974 = vmatprep.subr.bf16.mxu0 0
        %1975 = vmatpush1.bf16.msra.mxu0 0
        %1976 = vmatprep.subr.bf16.mxu0 0
        %1977 = vmatpush1.bf16.msra.mxu0 0
        %1978 = vmatprep.subr.bf16.mxu0 0
        %1979 = vmatpush1.bf16.msra.mxu0 0
        %1980 = vmatprep.subr.bf16.mxu0 0
        %1981 = vmatpush1.bf16.msra.mxu0 0
        %1982 = vmatprep.subr.bf16.mxu0 0
        %1983 = vmatpush1.bf16.msra.mxu0 0
        %1984 = vmatprep.subr.bf16.mxu0 0
        %1985 = vmatpush1.bf16.msra.mxu0 0
        %1986 = vmatprep.subr.bf16.mxu0 0
        %1987 = vmatpush1.bf16.msra.mxu0 0
        %1988 = vmatprep.subr.bf16.mxu0 0
        %1989 = vmatpush1.bf16.msra.mxu0 0
        %1990 = vmatprep.subr.bf16.mxu0 0
        %1991 = vmatpush1.bf16.msra.mxu0 0
        %1992 = vmatprep.subr.bf16.mxu0 0
        %1993 = vmatpush1.bf16.msra.mxu0 0
        %1994 = vmatprep.subr.bf16.mxu0 0
        %1995 = vmatpush1.bf16.msra.mxu0 0
        %1996 = vmatprep.subr.bf16.mxu0 0
        %1997 = vmatpush1.bf16.msra.mxu0 0
        %1998 = vmatprep.mubr.bf16.mxu0 0
        %1999 = vmatmul.mubr.bf16.gmra.mrb[0].mxu0 %v1964
        %v2000 = vpop.f32.mrb[0].mxu0
        %v2001 = vadd.f32 0.0, %v2000
        %v2002 = vpop.f32.mrb[0].mxu0
        %v2003 = vpop.f32.mrb[0].mxu0
        %v2004 = vpop.f32.mrb[0].mxu0
        %2005 = vdwg.mxu0
        %v2007 = vsel %vm1704, %v1695, 0
        %2009 = vmatprep.subr.bf16.mxu0 0
        %2010 = vmatpush1.bf16.msra.mxu0 %v1703
        %2011 = vmatprep.subr.bf16.mxu0 0
        %2012 = vmatpush1.bf16.msra.mxu0 0
        %2013 = vmatprep.subr.bf16.mxu0 0
        %2014 = vmatpush1.bf16.msra.mxu0 0
        %2015 = vmatprep.subr.bf16.mxu0 0
        %2016 = vmatpush1.bf16.msra.mxu0 0
        %2017 = vmatprep.subr.bf16.mxu0 0
        %2018 = vmatpush1.bf16.msra.mxu0 0
        %2019 = vmatprep.subr.bf16.mxu0 0
        %2020 = vmatpush1.bf16.msra.mxu0 0
        %2021 = vmatprep.subr.bf16.mxu0 0
        %2022 = vmatpush1.bf16.msra.mxu0 0
        %2023 = vmatprep.subr.bf16.mxu0 0
        %2024 = vmatpush1.bf16.msra.mxu0 0
        %2025 = vmatprep.subr.bf16.mxu0 0
        %2026 = vmatpush1.bf16.msra.mxu0 0
        %2027 = vmatprep.subr.bf16.mxu0 0
        %2028 = vmatpush1.bf16.msra.mxu0 0
        %2029 = vmatprep.subr.bf16.mxu0 0
        %2030 = vmatpush1.bf16.msra.mxu0 0
        %2031 = vmatprep.subr.bf16.mxu0 0
        %2032 = vmatpush1.bf16.msra.mxu0 0
        %2033 = vmatprep.subr.bf16.mxu0 0
        %2034 = vmatpush1.bf16.msra.mxu0 0
        %2035 = vmatprep.subr.bf16.mxu0 0
        %2036 = vmatpush1.bf16.msra.mxu0 0
        %2037 = vmatprep.subr.bf16.mxu0 0
        %2038 = vmatpush1.bf16.msra.mxu0 0
        %2039 = vmatprep.subr.bf16.mxu0 0
        %2040 = vmatpush1.bf16.msra.mxu0 0
        %2041 = vmatprep.mubr.bf16.mxu0 0
        %2042 = vmatmul.mubr.bf16.gmra.mrb[0].mxu0 %v2007
        %v2043 = vpop.f32.mrb[0].mxu0
        %v2044 = vadd.f32 0.0, %v2043
        %v2045 = vpop.f32.mrb[0].mxu0
        %v2046 = vpop.f32.mrb[0].mxu0
        %v2047 = vpop.f32.mrb[0].mxu0
        %2048 = vdwg.mxu0
        %v2049 = vsel %vm816, %v1743, -inf
        %2050 = vmax.xlane.f32.xlu0 %v2049
        %v2051 = vpop.xlane.xlu0 %2050
        %v2052 = vsel %vm816, %v1786, -inf
        %2053 = vmax.xlane.f32.xlu0 %v2052
        %v2054 = vpop.xlane.xlu0 %2053
        %v2055 = vsel %vm816, %v1829, -inf
        %2056 = vmax.xlane.f32.xlu0 %v2055
        %v2057 = vpop.xlane.xlu0 %2056
        %v2058 = vsel %vm816, %v1872, -inf
        %2059 = vmax.xlane.f32.xlu0 %v2058
        %v2060 = vpop.xlane.xlu0 %2059
        %v2061 = vsel %vm816, %v1915, -inf
        %2062 = vmax.xlane.f32.xlu0 %v2061
        %v2063 = vpop.xlane.xlu0 %2062
        %v2064 = vsel %vm816, %v1958, -inf
        %2065 = vmax.xlane.f32.xlu0 %v2064
        %v2066 = vpop.xlane.xlu0 %2065
        %v2067 = vsel %vm816, %v2001, -inf
        %2068 = vmax.xlane.f32.xlu0 %v2067
        %v2069 = vpop.xlane.xlu0 %2068
        %v2070 = vsel %vm816, %v2044, -inf
        %2071 = vmax.xlane.f32.xlu0 %v2070
        %v2072 = vpop.xlane.xlu0 %2071
        %v2073 = vsub.f32 %v1743, %v2051
        %v2074 = vsub.f32 %v1786, %v2054
        %v2075 = vsub.f32 %v1829, %v2057
        %v2076 = vsub.f32 %v1872, %v2060
        %v2077 = vsub.f32 %v1915, %v2063
        %v2078 = vsub.f32 %v1958, %v2066
        %v2079 = vsub.f32 %v2001, %v2069
        %v2080 = vsub.f32 %v2044, %v2072
        %v2081 = vmul.f32 %v2073, 1.442695
        %v2082 = vpow.pop %v2081
        %v2083 = vmul.f32 %v2074, 1.442695
        %v2084 = vpow.pop %v2083
        %v2085 = vmul.f32 %v2075, 1.442695
        %v2086 = vpow.pop %v2085
        %v2087 = vmul.f32 %v2076, 1.442695
        %v2088 = vpow.pop %v2087
        %v2089 = vmul.f32 %v2077, 1.442695
        %v2090 = vpow.pop %v2089
        %v2091 = vmul.f32 %v2078, 1.442695
        %v2092 = vpow.pop %v2091
        %v2093 = vmul.f32 %v2079, 1.442695
        %v2094 = vpow.pop %v2093
        %v2095 = vmul.f32 %v2080, 1.442695
        %v2096 = vpow.pop %v2095
        %v2097 = vsel %vm816, %v2082, 0.0
        %2098 = vadd.xlane.f32.xlu0 %v2097
        %v2099 = vpop.xlane.xlu0 %2098
        %v2100 = vsel %vm816, %v2084, 0.0
        %2101 = vadd.xlane.f32.xlu0 %v2100
        %v2102 = vpop.xlane.xlu0 %2101
        %v2103 = vsel %vm816, %v2086, 0.0
        %2104 = vadd.xlane.f32.xlu0 %v2103
        %v2105 = vpop.xlane.xlu0 %2104
        %v2106 = vsel %vm816, %v2088, 0.0
        %2107 = vadd.xlane.f32.xlu0 %v2106
        %v2108 = vpop.xlane.xlu0 %2107
        %v2109 = vsel %vm816, %v2090, 0.0
        %2110 = vadd.xlane.f32.xlu0 %v2109
        %v2111 = vpop.xlane.xlu0 %2110
        %v2112 = vsel %vm816, %v2092, 0.0
        %2113 = vadd.xlane.f32.xlu0 %v2112
        %v2114 = vpop.xlane.xlu0 %2113
        %v2115 = vsel %vm816, %v2094, 0.0
        %2116 = vadd.xlane.f32.xlu0 %v2115
        %v2117 = vpop.xlane.xlu0 %2116
        %v2118 = vsel %vm816, %v2096, 0.0
        %2119 = vadd.xlane.f32.xlu0 %v2118
        %v2120 = vpop.xlane.xlu0 %2119
        %v2121 = vrcp.pop %v2099
        %v2122 = vrcp.pop %v2102
        %v2123 = vrcp.pop %v2105
        %v2124 = vrcp.pop %v2108
        %v2125 = vrcp.pop %v2111
        %v2126 = vrcp.pop %v2114
        %v2127 = vrcp.pop %v2117
        %v2128 = vrcp.pop %v2120
        %v2129 = vmul.f32 %v2082, %v2121
        %v2130 = vmul.f32 %v2084, %v2122
        %v2131 = vmul.f32 %v2086, %v2123
        %v2132 = vmul.f32 %v2088, %v2124
        %v2133 = vmul.f32 %v2090, %v2125
        %v2134 = vmul.f32 %v2092, %v2126
        %v2135 = vmul.f32 %v2094, %v2127
        %v2136 = vmul.f32 %v2096, %v2128
        %v2137 = vpack.c.bf16 %v2129, %v2129
        %v2138 = vpack.c.bf16 %v2130, %v2130
        %v2139 = vpack.c.bf16 %v2131, %v2131
        %v2140 = vpack.c.bf16 %v2132, %v2132
        %v2141 = vpack.c.bf16 %v2133, %v2133
        %v2142 = vpack.c.bf16 %v2134, %v2134
        %v2143 = vpack.c.bf16 %v2135, %v2135
        %v2144 = vpack.c.bf16 %v2136, %v2136
        %v2145 = vld [vmem:[#allocation3] sm:$0xff]
        %v2146 = vld [vmem:[#allocation3 + $0x8] sm:$0xff]
        %v2147 = vld [vmem:[#allocation3 + $0x10] sm:$0xff]
        %v2148 = vld [vmem:[#allocation3 + $0x18] sm:$0xff]
        %v2149 = vld [vmem:[#allocation3 + $0x20] sm:$0xff]
        %v2150 = vld [vmem:[#allocation3 + $0x28] sm:$0xff]
        %v2151 = vld [vmem:[#allocation3 + $0x30] sm:$0xff]
        %v2152 = vld [vmem:[#allocation3 + $0x38] sm:$0xff]
        %v2154 = vsel %vm816, %v2137, 0
        %v2157 = vsel %vm816, %v2145, 0
        %2159 = vmatprep.subr.bf16.mxu0 0
        %2160 = vmatpush1.bf16.xpose.msra.mxu0 %v2157
        %2161 = vmatprep.subr.bf16.mxu0 0
        %2162 = vmatpush1.bf16.xpose.msra.mxu0 0
        %2163 = vmatprep.subr.bf16.mxu0 0
        %2164 = vmatpush1.bf16.xpose.msra.mxu0 0
        %2165 = vmatprep.subr.bf16.mxu0 0
        %2166 = vmatpush1.bf16.xpose.msra.mxu0 0
        %2167 = vmatprep.subr.bf16.mxu0 0
        %2168 = vmatpush1.bf16.xpose.msra.mxu0 0
        %2169 = vmatprep.subr.bf16.mxu0 0
        %2170 = vmatpush1.bf16.xpose.msra.mxu0 0
        %2171 = vmatprep.subr.bf16.mxu0 0
        %2172 = vmatpush1.bf16.xpose.msra.mxu0 0
        %2173 = vmatprep.subr.bf16.mxu0 0
        %2174 = vmatpush1.bf16.xpose.msra.mxu0 0
        %2175 = vmatprep.subr.bf16.mxu0 0
        %2176 = vmatpush1.bf16.xpose.msra.mxu0 0
        %2177 = vmatprep.subr.bf16.mxu0 0
        %2178 = vmatpush1.bf16.xpose.msra.mxu0 0
        %2179 = vmatprep.subr.bf16.mxu0 0
        %2180 = vmatpush1.bf16.xpose.msra.mxu0 0
        %2181 = vmatprep.subr.bf16.mxu0 0
        %2182 = vmatpush1.bf16.xpose.msra.mxu0 0
        %2183 = vmatprep.subr.bf16.mxu0 0
        %2184 = vmatpush1.bf16.xpose.msra.mxu0 0
        %2185 = vmatprep.subr.bf16.mxu0 0
        %2186 = vmatpush1.bf16.xpose.msra.mxu0 0
        %2187 = vmatprep.subr.bf16.mxu0 0
        %2188 = vmatpush1.bf16.xpose.msra.mxu0 0
        %2189 = vmatprep.subr.bf16.mxu0 0
        %2190 = vmatpush1.bf16.xpose.msra.mxu0 0
        %2191 = vmatprep.mubr.bf16.mxu0 0
        %2192 = vmatmul.mubr.bf16.gmra.mrb[0].mxu0 %v2154
        %v2193 = vpop.f32.mrb[0].mxu0
        %v2194 = vadd.f32 0.0, %v2193
        %v2195 = vpop.f32.mrb[0].mxu0
        %v2196 = vpop.f32.mrb[0].mxu0
        %v2197 = vpop.f32.mrb[0].mxu0
        %2198 = vdwg.mxu0
        %v2200 = vsel %vm816, %v2138, 0
        %v2203 = vsel %vm816, %v2146, 0
        %2205 = vmatprep.subr.bf16.mxu0 0
        %2206 = vmatpush1.bf16.xpose.msra.mxu0 %v2203
        %2207 = vmatprep.subr.bf16.mxu0 0
        %2208 = vmatpush1.bf16.xpose.msra.mxu0 0
        %2209 = vmatprep.subr.bf16.mxu0 0
        %2210 = vmatpush1.bf16.xpose.msra.mxu0 0
        %2211 = vmatprep.subr.bf16.mxu0 0
        %2212 = vmatpush1.bf16.xpose.msra.mxu0 0
        %2213 = vmatprep.subr.bf16.mxu0 0
        %2214 = vmatpush1.bf16.xpose.msra.mxu0 0
        %2215 = vmatprep.subr.bf16.mxu0 0
        %2216 = vmatpush1.bf16.xpose.msra.mxu0 0
        %2217 = vmatprep.subr.bf16.mxu0 0
        %2218 = vmatpush1.bf16.xpose.msra.mxu0 0
        %2219 = vmatprep.subr.bf16.mxu0 0
        %2220 = vmatpush1.bf16.xpose.msra.mxu0 0
        %2221 = vmatprep.subr.bf16.mxu0 0
        %2222 = vmatpush1.bf16.xpose.msra.mxu0 0
        %2223 = vmatprep.subr.bf16.mxu0 0
        %2224 = vmatpush1.bf16.xpose.msra.mxu0 0
        %2225 = vmatprep.subr.bf16.mxu0 0
        %2226 = vmatpush1.bf16.xpose.msra.mxu0 0
        %2227 = vmatprep.subr.bf16.mxu0 0
        %2228 = vmatpush1.bf16.xpose.msra.mxu0 0
        %2229 = vmatprep.subr.bf16.mxu0 0
        %2230 = vmatpush1.bf16.xpose.msra.mxu0 0
        %2231 = vmatprep.subr.bf16.mxu0 0
        %2232 = vmatpush1.bf16.xpose.msra.mxu0 0
        %2233 = vmatprep.subr.bf16.mxu0 0
        %2234 = vmatpush1.bf16.xpose.msra.mxu0 0
        %2235 = vmatprep.subr.bf16.mxu0 0
        %2236 = vmatpush1.bf16.xpose.msra.mxu0 0
        %2237 = vmatprep.mubr.bf16.mxu0 0
        %2238 = vmatmul.mubr.bf16.gmra.mrb[0].mxu0 %v2200
        %v2239 = vpop.f32.mrb[0].mxu0
        %v2240 = vadd.f32 0.0, %v2239
        %v2241 = vpop.f32.mrb[0].mxu0
        %v2242 = vpop.f32.mrb[0].mxu0
        %v2243 = vpop.f32.mrb[0].mxu0
        %2244 = vdwg.mxu0
        %v2246 = vsel %vm816, %v2139, 0
        %v2249 = vsel %vm816, %v2147, 0
        %2251 = vmatprep.subr.bf16.mxu0 0
        %2252 = vmatpush1.bf16.xpose.msra.mxu0 %v2249
        %2253 = vmatprep.subr.bf16.mxu0 0
        %2254 = vmatpush1.bf16.xpose.msra.mxu0 0
        %2255 = vmatprep.subr.bf16.mxu0 0
        %2256 = vmatpush1.bf16.xpose.msra.mxu0 0
        %2257 = vmatprep.subr.bf16.mxu0 0
        %2258 = vmatpush1.bf16.xpose.msra.mxu0 0
        %2259 = vmatprep.subr.bf16.mxu0 0
        %2260 = vmatpush1.bf16.xpose.msra.mxu0 0
        %2261 = vmatprep.subr.bf16.mxu0 0
        %2262 = vmatpush1.bf16.xpose.msra.mxu0 0
        %2263 = vmatprep.subr.bf16.mxu0 0
        %2264 = vmatpush1.bf16.xpose.msra.mxu0 0
        %2265 = vmatprep.subr.bf16.mxu0 0
        %2266 = vmatpush1.bf16.xpose.msra.mxu0 0
        %2267 = vmatprep.subr.bf16.mxu0 0
        %2268 = vmatpush1.bf16.xpose.msra.mxu0 0
        %2269 = vmatprep.subr.bf16.mxu0 0
        %2270 = vmatpush1.bf16.xpose.msra.mxu0 0
        %2271 = vmatprep.subr.bf16.mxu0 0
        %2272 = vmatpush1.bf16.xpose.msra.mxu0 0
        %2273 = vmatprep.subr.bf16.mxu0 0
        %2274 = vmatpush1.bf16.xpose.msra.mxu0 0
        %2275 = vmatprep.subr.bf16.mxu0 0
        %2276 = vmatpush1.bf16.xpose.msra.mxu0 0
        %2277 = vmatprep.subr.bf16.mxu0 0
        %2278 = vmatpush1.bf16.xpose.msra.mxu0 0
        %2279 = vmatprep.subr.bf16.mxu0 0
        %2280 = vmatpush1.bf16.xpose.msra.mxu0 0
        %2281 = vmatprep.subr.bf16.mxu0 0
        %2282 = vmatpush1.bf16.xpose.msra.mxu0 0
        %2283 = vmatprep.mubr.bf16.mxu0 0
        %2284 = vmatmul.mubr.bf16.gmra.mrb[0].mxu0 %v2246
        %v2285 = vpop.f32.mrb[0].mxu0
        %v2286 = vadd.f32 0.0, %v2285
        %v2287 = vpop.f32.mrb[0].mxu0
        %v2288 = vpop.f32.mrb[0].mxu0
        %v2289 = vpop.f32.mrb[0].mxu0
        %2290 = vdwg.mxu0
        %v2292 = vsel %vm816, %v2140, 0
        %v2295 = vsel %vm816, %v2148, 0
        %2297 = vmatprep.subr.bf16.mxu0 0
        %2298 = vmatpush1.bf16.xpose.msra.mxu0 %v2295
        %2299 = vmatprep.subr.bf16.mxu0 0
        %2300 = vmatpush1.bf16.xpose.msra.mxu0 0
        %2301 = vmatprep.subr.bf16.mxu0 0
        %2302 = vmatpush1.bf16.xpose.msra.mxu0 0
        %2303 = vmatprep.subr.bf16.mxu0 0
        %2304 = vmatpush1.bf16.xpose.msra.mxu0 0
        %2305 = vmatprep.subr.bf16.mxu0 0
        %2306 = vmatpush1.bf16.xpose.msra.mxu0 0
        %2307 = vmatprep.subr.bf16.mxu0 0
        %2308 = vmatpush1.bf16.xpose.msra.mxu0 0
        %2309 = vmatprep.subr.bf16.mxu0 0
        %2310 = vmatpush1.bf16.xpose.msra.mxu0 0
        %2311 = vmatprep.subr.bf16.mxu0 0
        %2312 = vmatpush1.bf16.xpose.msra.mxu0 0
        %2313 = vmatprep.subr.bf16.mxu0 0
        %2314 = vmatpush1.bf16.xpose.msra.mxu0 0
        %2315 = vmatprep.subr.bf16.mxu0 0
        %2316 = vmatpush1.bf16.xpose.msra.mxu0 0
        %2317 = vmatprep.subr.bf16.mxu0 0
        %2318 = vmatpush1.bf16.xpose.msra.mxu0 0
        %2319 = vmatprep.subr.bf16.mxu0 0
        %2320 = vmatpush1.bf16.xpose.msra.mxu0 0
        %2321 = vmatprep.subr.bf16.mxu0 0
        %2322 = vmatpush1.bf16.xpose.msra.mxu0 0
        %2323 = vmatprep.subr.bf16.mxu0 0
        %2324 = vmatpush1.bf16.xpose.msra.mxu0 0
        %2325 = vmatprep.subr.bf16.mxu0 0
        %2326 = vmatpush1.bf16.xpose.msra.mxu0 0
        %2327 = vmatprep.subr.bf16.mxu0 0
        %2328 = vmatpush1.bf16.xpose.msra.mxu0 0
        %2329 = vmatprep.mubr.bf16.mxu0 0
        %2330 = vmatmul.mubr.bf16.gmra.mrb[0].mxu0 %v2292
        %v2331 = vpop.f32.mrb[0].mxu0
        %v2332 = vadd.f32 0.0, %v2331
        %v2333 = vpop.f32.mrb[0].mxu0
        %v2334 = vpop.f32.mrb[0].mxu0
        %v2335 = vpop.f32.mrb[0].mxu0
        %2336 = vdwg.mxu0
        %v2338 = vsel %vm816, %v2141, 0
        %v2341 = vsel %vm816, %v2149, 0
        %2343 = vmatprep.subr.bf16.mxu0 0
        %2344 = vmatpush1.bf16.xpose.msra.mxu0 %v2341
        %2345 = vmatprep.subr.bf16.mxu0 0
        %2346 = vmatpush1.bf16.xpose.msra.mxu0 0
        %2347 = vmatprep.subr.bf16.mxu0 0
        %2348 = vmatpush1.bf16.xpose.msra.mxu0 0
        %2349 = vmatprep.subr.bf16.mxu0 0
        %2350 = vmatpush1.bf16.xpose.msra.mxu0 0
        %2351 = vmatprep.subr.bf16.mxu0 0
        %2352 = vmatpush1.bf16.xpose.msra.mxu0 0
        %2353 = vmatprep.subr.bf16.mxu0 0
        %2354 = vmatpush1.bf16.xpose.msra.mxu0 0
        %2355 = vmatprep.subr.bf16.mxu0 0
        %2356 = vmatpush1.bf16.xpose.msra.mxu0 0
        %2357 = vmatprep.subr.bf16.mxu0 0
        %2358 = vmatpush1.bf16.xpose.msra.mxu0 0
        %2359 = vmatprep.subr.bf16.mxu0 0
        %2360 = vmatpush1.bf16.xpose.msra.mxu0 0
        %2361 = vmatprep.subr.bf16.mxu0 0
        %2362 = vmatpush1.bf16.xpose.msra.mxu0 0
        %2363 = vmatprep.subr.bf16.mxu0 0
        %2364 = vmatpush1.bf16.xpose.msra.mxu0 0
        %2365 = vmatprep.subr.bf16.mxu0 0
        %2366 = vmatpush1.bf16.xpose.msra.mxu0 0
        %2367 = vmatprep.subr.bf16.mxu0 0
        %2368 = vmatpush1.bf16.xpose.msra.mxu0 0
        %2369 = vmatprep.subr.bf16.mxu0 0
        %2370 = vmatpush1.bf16.xpose.msra.mxu0 0
        %2371 = vmatprep.subr.bf16.mxu0 0
        %2372 = vmatpush1.bf16.xpose.msra.mxu0 0
        %2373 = vmatprep.subr.bf16.mxu0 0
        %2374 = vmatpush1.bf16.xpose.msra.mxu0 0
        %2375 = vmatprep.mubr.bf16.mxu0 0
        %2376 = vmatmul.mubr.bf16.gmra.mrb[0].mxu0 %v2338
        %v2377 = vpop.f32.mrb[0].mxu0
        %v2378 = vadd.f32 0.0, %v2377
        %v2379 = vpop.f32.mrb[0].mxu0
        %v2380 = vpop.f32.mrb[0].mxu0
        %v2381 = vpop.f32.mrb[0].mxu0
        %2382 = vdwg.mxu0
        %v2384 = vsel %vm816, %v2142, 0
        %v2387 = vsel %vm816, %v2150, 0
        %2389 = vmatprep.subr.bf16.mxu0 0
        %2390 = vmatpush1.bf16.xpose.msra.mxu0 %v2387
        %2391 = vmatprep.subr.bf16.mxu0 0
        %2392 = vmatpush1.bf16.xpose.msra.mxu0 0
        %2393 = vmatprep.subr.bf16.mxu0 0
        %2394 = vmatpush1.bf16.xpose.msra.mxu0 0
        %2395 = vmatprep.subr.bf16.mxu0 0
        %2396 = vmatpush1.bf16.xpose.msra.mxu0 0
        %2397 = vmatprep.subr.bf16.mxu0 0
        %2398 = vmatpush1.bf16.xpose.msra.mxu0 0
        %2399 = vmatprep.subr.bf16.mxu0 0
        %2400 = vmatpush1.bf16.xpose.msra.mxu0 0
        %2401 = vmatprep.subr.bf16.mxu0 0
        %2402 = vmatpush1.bf16.xpose.msra.mxu0 0
        %2403 = vmatprep.subr.bf16.mxu0 0
        %2404 = vmatpush1.bf16.xpose.msra.mxu0 0
        %2405 = vmatprep.subr.bf16.mxu0 0
        %2406 = vmatpush1.bf16.xpose.msra.mxu0 0
        %2407 = vmatprep.subr.bf16.mxu0 0
        %2408 = vmatpush1.bf16.xpose.msra.mxu0 0
        %2409 = vmatprep.subr.bf16.mxu0 0
        %2410 = vmatpush1.bf16.xpose.msra.mxu0 0
        %2411 = vmatprep.subr.bf16.mxu0 0
        %2412 = vmatpush1.bf16.xpose.msra.mxu0 0
        %2413 = vmatprep.subr.bf16.mxu0 0
        %2414 = vmatpush1.bf16.xpose.msra.mxu0 0
        %2415 = vmatprep.subr.bf16.mxu0 0
        %2416 = vmatpush1.bf16.xpose.msra.mxu0 0
        %2417 = vmatprep.subr.bf16.mxu0 0
        %2418 = vmatpush1.bf16.xpose.msra.mxu0 0
        %2419 = vmatprep.subr.bf16.mxu0 0
        %2420 = vmatpush1.bf16.xpose.msra.mxu0 0
        %2421 = vmatprep.mubr.bf16.mxu0 0
        %2422 = vmatmul.mubr.bf16.gmra.mrb[0].mxu0 %v2384
        %v2423 = vpop.f32.mrb[0].mxu0
        %v2424 = vadd.f32 0.0, %v2423
        %v2425 = vpop.f32.mrb[0].mxu0
        %v2426 = vpop.f32.mrb[0].mxu0
        %v2427 = vpop.f32.mrb[0].mxu0
        %2428 = vdwg.mxu0
        %v2430 = vsel %vm816, %v2143, 0
        %v2433 = vsel %vm816, %v2151, 0
        %2435 = vmatprep.subr.bf16.mxu0 0
        %2436 = vmatpush1.bf16.xpose.msra.mxu0 %v2433
        %2437 = vmatprep.subr.bf16.mxu0 0
        %2438 = vmatpush1.bf16.xpose.msra.mxu0 0
        %2439 = vmatprep.subr.bf16.mxu0 0
        %2440 = vmatpush1.bf16.xpose.msra.mxu0 0
        %2441 = vmatprep.subr.bf16.mxu0 0
        %2442 = vmatpush1.bf16.xpose.msra.mxu0 0
        %2443 = vmatprep.subr.bf16.mxu0 0
        %2444 = vmatpush1.bf16.xpose.msra.mxu0 0
        %2445 = vmatprep.subr.bf16.mxu0 0
        %2446 = vmatpush1.bf16.xpose.msra.mxu0 0
        %2447 = vmatprep.subr.bf16.mxu0 0
        %2448 = vmatpush1.bf16.xpose.msra.mxu0 0
        %2449 = vmatprep.subr.bf16.mxu0 0
        %2450 = vmatpush1.bf16.xpose.msra.mxu0 0
        %2451 = vmatprep.subr.bf16.mxu0 0
        %2452 = vmatpush1.bf16.xpose.msra.mxu0 0
        %2453 = vmatprep.subr.bf16.mxu0 0
        %2454 = vmatpush1.bf16.xpose.msra.mxu0 0
        %2455 = vmatprep.subr.bf16.mxu0 0
        %2456 = vmatpush1.bf16.xpose.msra.mxu0 0
        %2457 = vmatprep.subr.bf16.mxu0 0
        %2458 = vmatpush1.bf16.xpose.msra.mxu0 0
        %2459 = vmatprep.subr.bf16.mxu0 0
        %2460 = vmatpush1.bf16.xpose.msra.mxu0 0
        %2461 = vmatprep.subr.bf16.mxu0 0
        %2462 = vmatpush1.bf16.xpose.msra.mxu0 0
        %2463 = vmatprep.subr.bf16.mxu0 0
        %2464 = vmatpush1.bf16.xpose.msra.mxu0 0
        %2465 = vmatprep.subr.bf16.mxu0 0
        %2466 = vmatpush1.bf16.xpose.msra.mxu0 0
        %2467 = vmatprep.mubr.bf16.mxu0 0
        %2468 = vmatmul.mubr.bf16.gmra.mrb[0].mxu0 %v2430
        %v2469 = vpop.f32.mrb[0].mxu0
        %v2470 = vadd.f32 0.0, %v2469
        %v2471 = vpop.f32.mrb[0].mxu0
        %v2472 = vpop.f32.mrb[0].mxu0
        %v2473 = vpop.f32.mrb[0].mxu0
        %2474 = vdwg.mxu0
        %v2476 = vsel %vm816, %v2144, 0
        %v2479 = vsel %vm816, %v2152, 0
        %2481 = vmatprep.subr.bf16.mxu0 0
        %2482 = vmatpush1.bf16.xpose.msra.mxu0 %v2479
        %2483 = vmatprep.subr.bf16.mxu0 0
        %2484 = vmatpush1.bf16.xpose.msra.mxu0 0
        %2485 = vmatprep.subr.bf16.mxu0 0
        %2486 = vmatpush1.bf16.xpose.msra.mxu0 0
        %2487 = vmatprep.subr.bf16.mxu0 0
        %2488 = vmatpush1.bf16.xpose.msra.mxu0 0
        %2489 = vmatprep.subr.bf16.mxu0 0
        %2490 = vmatpush1.bf16.xpose.msra.mxu0 0
        %2491 = vmatprep.subr.bf16.mxu0 0
        %2492 = vmatpush1.bf16.xpose.msra.mxu0 0
        %2493 = vmatprep.subr.bf16.mxu0 0
        %2494 = vmatpush1.bf16.xpose.msra.mxu0 0
        %2495 = vmatprep.subr.bf16.mxu0 0
        %2496 = vmatpush1.bf16.xpose.msra.mxu0 0
        %2497 = vmatprep.subr.bf16.mxu0 0
        %2498 = vmatpush1.bf16.xpose.msra.mxu0 0
        %2499 = vmatprep.subr.bf16.mxu0 0
        %2500 = vmatpush1.bf16.xpose.msra.mxu0 0
        %2501 = vmatprep.subr.bf16.mxu0 0
        %2502 = vmatpush1.bf16.xpose.msra.mxu0 0
        %2503 = vmatprep.subr.bf16.mxu0 0
        %2504 = vmatpush1.bf16.xpose.msra.mxu0 0
        %2505 = vmatprep.subr.bf16.mxu0 0
        %2506 = vmatpush1.bf16.xpose.msra.mxu0 0
        %2507 = vmatprep.subr.bf16.mxu0 0
        %2508 = vmatpush1.bf16.xpose.msra.mxu0 0
        %2509 = vmatprep.subr.bf16.mxu0 0
        %2510 = vmatpush1.bf16.xpose.msra.mxu0 0
        %2511 = vmatprep.subr.bf16.mxu0 0
        %2512 = vmatpush1.bf16.xpose.msra.mxu0 0
        %2513 = vmatprep.mubr.bf16.mxu0 0
        %2514 = vmatmul.mubr.bf16.gmra.mrb[0].mxu0 %v2476
        %v2515 = vpop.f32.mrb[0].mxu0
        %v2516 = vadd.f32 0.0, %v2515
        %v2517 = vpop.f32.mrb[0].mxu0
        %v2518 = vpop.f32.mrb[0].mxu0
        %v2519 = vpop.f32.mrb[0].mxu0
        %2520 = vdwg.mxu0
        %v2521 = vpack.c.bf16 %v2194, %v2194
        %v2522 = vpack.c.bf16 %v2240, %v2240
        %v2523 = vpack.c.bf16 %v2286, %v2286
        %v2524 = vpack.c.bf16 %v2332, %v2332
        %v2525 = vpack.c.bf16 %v2378, %v2378
        %v2526 = vpack.c.bf16 %v2424, %v2424
        %v2527 = vpack.c.bf16 %v2470, %v2470
        %v2528 = vpack.c.bf16 %v2516, %v2516
        %v2529 = vld [vmem:[%s5] sm:$0xf]
        %v2530 = vld [vmem:[%s5 + $0x4] sm:$0xf]
        %v2531 = vld [vmem:[%s5 + $0x8] sm:$0xf]
        %v2532 = vld [vmem:[%s5 + $0xc] sm:$0xf]
        %v2533 = vld [vmem:[%s5 + $0x10] sm:$0xf]
        %v2534 = vld [vmem:[%s5 + $0x14] sm:$0xf]
        %v2535 = vld [vmem:[%s5 + $0x18] sm:$0xf]
        %v2536 = vld [vmem:[%s5 + $0x1c] sm:$0xf]
        %v2537 = vld [vmem:[%s5 + $0x20] sm:$0xf]
        %v2538 = vld [vmem:[%s5 + $0x24] sm:$0xf]
        %v2539 = vld [vmem:[%s5 + $0x28] sm:$0xf]
        %v2540 = vld [vmem:[%s5 + $0x2c] sm:$0xf]
        %v2541 = vld [vmem:[%s5 + $0x30] sm:$0xf]
        %v2542 = vld [vmem:[%s5 + $0x34] sm:$0xf]
        %v2543 = vld [vmem:[%s5 + $0x38] sm:$0xf]
        %v2544 = vld [vmem:[%s5 + $0x3c] sm:$0xf]
        %v2547 = vunpack.c.l.b16 %v2529
        %v2548 = vunpack.c.l.b16 %v2530
        %v2549 = vpack.c.b16 %v2548, %v2547
        %v2552 = vsel %vm1704, %v2521, 0
        %2554 = vmatprep.subr.bf16.mxu0 0
        %2555 = vmatpush1.bf16.msra.mxu0 %v2549
        %2556 = vmatprep.subr.bf16.mxu0 0
        %2557 = vmatpush1.bf16.msra.mxu0 0
        %2558 = vmatprep.subr.bf16.mxu0 0
        %2559 = vmatpush1.bf16.msra.mxu0 0
        %2560 = vmatprep.subr.bf16.mxu0 0
        %2561 = vmatpush1.bf16.msra.mxu0 0
        %2562 = vmatprep.subr.bf16.mxu0 0
        %2563 = vmatpush1.bf16.msra.mxu0 0
        %2564 = vmatprep.subr.bf16.mxu0 0
        %2565 = vmatpush1.bf16.msra.mxu0 0
        %2566 = vmatprep.subr.bf16.mxu0 0
        %2567 = vmatpush1.bf16.msra.mxu0 0
        %2568 = vmatprep.subr.bf16.mxu0 0
        %2569 = vmatpush1.bf16.msra.mxu0 0
        %2570 = vmatprep.subr.bf16.mxu0 0
        %2571 = vmatpush1.bf16.msra.mxu0 0
        %2572 = vmatprep.subr.bf16.mxu0 0
        %2573 = vmatpush1.bf16.msra.mxu0 0
        %2574 = vmatprep.subr.bf16.mxu0 0
        %2575 = vmatpush1.bf16.msra.mxu0 0
        %2576 = vmatprep.subr.bf16.mxu0 0
        %2577 = vmatpush1.bf16.msra.mxu0 0
        %2578 = vmatprep.subr.bf16.mxu0 0
        %2579 = vmatpush1.bf16.msra.mxu0 0
        %2580 = vmatprep.subr.bf16.mxu0 0
        %2581 = vmatpush1.bf16.msra.mxu0 0
        %2582 = vmatprep.subr.bf16.mxu0 0
        %2583 = vmatpush1.bf16.msra.mxu0 0
        %2584 = vmatprep.subr.bf16.mxu0 0
        %2585 = vmatpush1.bf16.msra.mxu0 0
        %2586 = vmatprep.mubr.bf16.mxu0 0
        %2587 = vmatmul.mubr.bf16.gmra.mrb[0].mxu0 %v2552
        %v2588 = vpop.f32.mrb[0].mxu0
        %v2589 = vadd.f32 0.0, %v2588
        %v2590 = vpop.f32.mrb[0].mxu0
        %v2591 = vpop.f32.mrb[0].mxu0
        %v2592 = vpop.f32.mrb[0].mxu0
        %2593 = vdwg.mxu0
        %v2596 = vunpack.c.l.b16 %v2531
        %v2597 = vunpack.c.l.b16 %v2532
        %v2598 = vpack.c.b16 %v2597, %v2596
        %v2601 = vsel %vm1704, %v2522, 0
        %2603 = vmatprep.subr.bf16.mxu0 0
        %2604 = vmatpush1.bf16.msra.mxu0 %v2598
        %2605 = vmatprep.subr.bf16.mxu0 0
        %2606 = vmatpush1.bf16.msra.mxu0 0
        %2607 = vmatprep.subr.bf16.mxu0 0
        %2608 = vmatpush1.bf16.msra.mxu0 0
        %2609 = vmatprep.subr.bf16.mxu0 0
        %2610 = vmatpush1.bf16.msra.mxu0 0
        %2611 = vmatprep.subr.bf16.mxu0 0
        %2612 = vmatpush1.bf16.msra.mxu0 0
        %2613 = vmatprep.subr.bf16.mxu0 0
        %2614 = vmatpush1.bf16.msra.mxu0 0
        %2615 = vmatprep.subr.bf16.mxu0 0
        %2616 = vmatpush1.bf16.msra.mxu0 0
        %2617 = vmatprep.subr.bf16.mxu0 0
        %2618 = vmatpush1.bf16.msra.mxu0 0
        %2619 = vmatprep.subr.bf16.mxu0 0
        %2620 = vmatpush1.bf16.msra.mxu0 0
        %2621 = vmatprep.subr.bf16.mxu0 0
        %2622 = vmatpush1.bf16.msra.mxu0 0
        %2623 = vmatprep.subr.bf16.mxu0 0
        %2624 = vmatpush1.bf16.msra.mxu0 0
        %2625 = vmatprep.subr.bf16.mxu0 0
        %2626 = vmatpush1.bf16.msra.mxu0 0
        %2627 = vmatprep.subr.bf16.mxu0 0
        %2628 = vmatpush1.bf16.msra.mxu0 0
        %2629 = vmatprep.subr.bf16.mxu0 0
        %2630 = vmatpush1.bf16.msra.mxu0 0
        %2631 = vmatprep.subr.bf16.mxu0 0
        %2632 = vmatpush1.bf16.msra.mxu0 0
        %2633 = vmatprep.subr.bf16.mxu0 0
        %2634 = vmatpush1.bf16.msra.mxu0 0
        %2635 = vmatprep.mubr.bf16.mxu0 0
        %2636 = vmatmul.mubr.bf16.gmra.mrb[0].mxu0 %v2601
        %v2637 = vpop.f32.mrb[0].mxu0
        %v2638 = vadd.f32 0.0, %v2637
        %v2639 = vpop.f32.mrb[0].mxu0
        %v2640 = vpop.f32.mrb[0].mxu0
        %v2641 = vpop.f32.mrb[0].mxu0
        %2642 = vdwg.mxu0
        %v2645 = vunpack.c.l.b16 %v2533
        %v2646 = vunpack.c.l.b16 %v2534
        %v2647 = vpack.c.b16 %v2646, %v2645
        %v2650 = vsel %vm1704, %v2523, 0
        %2652 = vmatprep.subr.bf16.mxu0 0
        %2653 = vmatpush1.bf16.msra.mxu0 %v2647
        %2654 = vmatprep.subr.bf16.mxu0 0
        %2655 = vmatpush1.bf16.msra.mxu0 0
        %2656 = vmatprep.subr.bf16.mxu0 0
        %2657 = vmatpush1.bf16.msra.mxu0 0
        %2658 = vmatprep.subr.bf16.mxu0 0
        %2659 = vmatpush1.bf16.msra.mxu0 0
        %2660 = vmatprep.subr.bf16.mxu0 0
        %2661 = vmatpush1.bf16.msra.mxu0 0
        %2662 = vmatprep.subr.bf16.mxu0 0
        %2663 = vmatpush1.bf16.msra.mxu0 0
        %2664 = vmatprep.subr.bf16.mxu0 0
        %2665 = vmatpush1.bf16.msra.mxu0 0
        %2666 = vmatprep.subr.bf16.mxu0 0
        %2667 = vmatpush1.bf16.msra.mxu0 0
        %2668 = vmatprep.subr.bf16.mxu0 0
        %2669 = vmatpush1.bf16.msra.mxu0 0
        %2670 = vmatprep.subr.bf16.mxu0 0
        %2671 = vmatpush1.bf16.msra.mxu0 0
        %2672 = vmatprep.subr.bf16.mxu0 0
        %2673 = vmatpush1.bf16.msra.mxu0 0
        %2674 = vmatprep.subr.bf16.mxu0 0
        %2675 = vmatpush1.bf16.msra.mxu0 0
        %2676 = vmatprep.subr.bf16.mxu0 0
        %2677 = vmatpush1.bf16.msra.mxu0 0
        %2678 = vmatprep.subr.bf16.mxu0 0
        %2679 = vmatpush1.bf16.msra.mxu0 0
        %2680 = vmatprep.subr.bf16.mxu0 0
        %2681 = vmatpush1.bf16.msra.mxu0 0
        %2682 = vmatprep.subr.bf16.mxu0 0
        %2683 = vmatpush1.bf16.msra.mxu0 0
        %2684 = vmatprep.mubr.bf16.mxu0 0
        %2685 = vmatmul.mubr.bf16.gmra.mrb[0].mxu0 %v2650
        %v2686 = vpop.f32.mrb[0].mxu0
        %v2687 = vadd.f32 0.0, %v2686
        %v2688 = vpop.f32.mrb[0].mxu0
        %v2689 = vpop.f32.mrb[0].mxu0
        %v2690 = vpop.f32.mrb[0].mxu0
        %2691 = vdwg.mxu0
        %v2694 = vunpack.c.l.b16 %v2535
        %v2695 = vunpack.c.l.b16 %v2536
        %v2696 = vpack.c.b16 %v2695, %v2694
        %v2699 = vsel %vm1704, %v2524, 0
        %2701 = vmatprep.subr.bf16.mxu0 0
        %2702 = vmatpush1.bf16.msra.mxu0 %v2696
        %2703 = vmatprep.subr.bf16.mxu0 0
        %2704 = vmatpush1.bf16.msra.mxu0 0
        %2705 = vmatprep.subr.bf16.mxu0 0
        %2706 = vmatpush1.bf16.msra.mxu0 0
        %2707 = vmatprep.subr.bf16.mxu0 0
        %2708 = vmatpush1.bf16.msra.mxu0 0
        %2709 = vmatprep.subr.bf16.mxu0 0
        %2710 = vmatpush1.bf16.msra.mxu0 0
        %2711 = vmatprep.subr.bf16.mxu0 0
        %2712 = vmatpush1.bf16.msra.mxu0 0
        %2713 = vmatprep.subr.bf16.mxu0 0
        %2714 = vmatpush1.bf16.msra.mxu0 0
        %2715 = vmatprep.subr.bf16.mxu0 0
        %2716 = vmatpush1.bf16.msra.mxu0 0
        %2717 = vmatprep.subr.bf16.mxu0 0
        %2718 = vmatpush1.bf16.msra.mxu0 0
        %2719 = vmatprep.subr.bf16.mxu0 0
        %2720 = vmatpush1.bf16.msra.mxu0 0
        %2721 = vmatprep.subr.bf16.mxu0 0
        %2722 = vmatpush1.bf16.msra.mxu0 0
        %2723 = vmatprep.subr.bf16.mxu0 0
        %2724 = vmatpush1.bf16.msra.mxu0 0
        %2725 = vmatprep.subr.bf16.mxu0 0
        %2726 = vmatpush1.bf16.msra.mxu0 0
        %2727 = vmatprep.subr.bf16.mxu0 0
        %2728 = vmatpush1.bf16.msra.mxu0 0
        %2729 = vmatprep.subr.bf16.mxu0 0
        %2730 = vmatpush1.bf16.msra.mxu0 0
        %2731 = vmatprep.subr.bf16.mxu0 0
        %2732 = vmatpush1.bf16.msra.mxu0 0
        %2733 = vmatprep.mubr.bf16.mxu0 0
        %2734 = vmatmul.mubr.bf16.gmra.mrb[0].mxu0 %v2699
        %v2735 = vpop.f32.mrb[0].mxu0
        %v2736 = vadd.f32 0.0, %v2735
        %v2737 = vpop.f32.mrb[0].mxu0
        %v2738 = vpop.f32.mrb[0].mxu0
        %v2739 = vpop.f32.mrb[0].mxu0
        %2740 = vdwg.mxu0
        %v2743 = vunpack.c.l.b16 %v2537
        %v2744 = vunpack.c.l.b16 %v2538
        %v2745 = vpack.c.b16 %v2744, %v2743
        %v2748 = vsel %vm1704, %v2525, 0
        %2750 = vmatprep.subr.bf16.mxu0 0
        %2751 = vmatpush1.bf16.msra.mxu0 %v2745
        %2752 = vmatprep.subr.bf16.mxu0 0
        %2753 = vmatpush1.bf16.msra.mxu0 0
        %2754 = vmatprep.subr.bf16.mxu0 0
        %2755 = vmatpush1.bf16.msra.mxu0 0
        %2756 = vmatprep.subr.bf16.mxu0 0
        %2757 = vmatpush1.bf16.msra.mxu0 0
        %2758 = vmatprep.subr.bf16.mxu0 0
        %2759 = vmatpush1.bf16.msra.mxu0 0
        %2760 = vmatprep.subr.bf16.mxu0 0
        %2761 = vmatpush1.bf16.msra.mxu0 0
        %2762 = vmatprep.subr.bf16.mxu0 0
        %2763 = vmatpush1.bf16.msra.mxu0 0
        %2764 = vmatprep.subr.bf16.mxu0 0
        %2765 = vmatpush1.bf16.msra.mxu0 0
        %2766 = vmatprep.subr.bf16.mxu0 0
        %2767 = vmatpush1.bf16.msra.mxu0 0
        %2768 = vmatprep.subr.bf16.mxu0 0
        %2769 = vmatpush1.bf16.msra.mxu0 0
        %2770 = vmatprep.subr.bf16.mxu0 0
        %2771 = vmatpush1.bf16.msra.mxu0 0
        %2772 = vmatprep.subr.bf16.mxu0 0
        %2773 = vmatpush1.bf16.msra.mxu0 0
        %2774 = vmatprep.subr.bf16.mxu0 0
        %2775 = vmatpush1.bf16.msra.mxu0 0
        %2776 = vmatprep.subr.bf16.mxu0 0
        %2777 = vmatpush1.bf16.msra.mxu0 0
        %2778 = vmatprep.subr.bf16.mxu0 0
        %2779 = vmatpush1.bf16.msra.mxu0 0
        %2780 = vmatprep.subr.bf16.mxu0 0
        %2781 = vmatpush1.bf16.msra.mxu0 0
        %2782 = vmatprep.mubr.bf16.mxu0 0
        %2783 = vmatmul.mubr.bf16.gmra.mrb[0].mxu0 %v2748
        %v2784 = vpop.f32.mrb[0].mxu0
        %v2785 = vadd.f32 0.0, %v2784
        %v2786 = vpop.f32.mrb[0].mxu0
        %v2787 = vpop.f32.mrb[0].mxu0
        %v2788 = vpop.f32.mrb[0].mxu0
        %2789 = vdwg.mxu0
        %v2792 = vunpack.c.l.b16 %v2539
        %v2793 = vunpack.c.l.b16 %v2540
        %v2794 = vpack.c.b16 %v2793, %v2792
        %v2797 = vsel %vm1704, %v2526, 0
        %2799 = vmatprep.subr.bf16.mxu0 0
        %2800 = vmatpush1.bf16.msra.mxu0 %v2794
        %2801 = vmatprep.subr.bf16.mxu0 0
        %2802 = vmatpush1.bf16.msra.mxu0 0
        %2803 = vmatprep.subr.bf16.mxu0 0
        %2804 = vmatpush1.bf16.msra.mxu0 0
        %2805 = vmatprep.subr.bf16.mxu0 0
        %2806 = vmatpush1.bf16.msra.mxu0 0
        %2807 = vmatprep.subr.bf16.mxu0 0
        %2808 = vmatpush1.bf16.msra.mxu0 0
        %2809 = vmatprep.subr.bf16.mxu0 0
        %2810 = vmatpush1.bf16.msra.mxu0 0
        %2811 = vmatprep.subr.bf16.mxu0 0
        %2812 = vmatpush1.bf16.msra.mxu0 0
        %2813 = vmatprep.subr.bf16.mxu0 0
        %2814 = vmatpush1.bf16.msra.mxu0 0
        %2815 = vmatprep.subr.bf16.mxu0 0
        %2816 = vmatpush1.bf16.msra.mxu0 0
        %2817 = vmatprep.subr.bf16.mxu0 0
        %2818 = vmatpush1.bf16.msra.mxu0 0
        %2819 = vmatprep.subr.bf16.mxu0 0
        %2820 = vmatpush1.bf16.msra.mxu0 0
        %2821 = vmatprep.subr.bf16.mxu0 0
        %2822 = vmatpush1.bf16.msra.mxu0 0
        %2823 = vmatprep.subr.bf16.mxu0 0
        %2824 = vmatpush1.bf16.msra.mxu0 0
        %2825 = vmatprep.subr.bf16.mxu0 0
        %2826 = vmatpush1.bf16.msra.mxu0 0
        %2827 = vmatprep.subr.bf16.mxu0 0
        %2828 = vmatpush1.bf16.msra.mxu0 0
        %2829 = vmatprep.subr.bf16.mxu0 0
        %2830 = vmatpush1.bf16.msra.mxu0 0
        %2831 = vmatprep.mubr.bf16.mxu0 0
        %2832 = vmatmul.mubr.bf16.gmra.mrb[0].mxu0 %v2797
        %v2833 = vpop.f32.mrb[0].mxu0
        %v2834 = vadd.f32 0.0, %v2833
        %v2835 = vpop.f32.mrb[0].mxu0
        %v2836 = vpop.f32.mrb[0].mxu0
        %v2837 = vpop.f32.mrb[0].mxu0
        %2838 = vdwg.mxu0
        %v2841 = vunpack.c.l.b16 %v2541
        %v2842 = vunpack.c.l.b16 %v2542
        %v2843 = vpack.c.b16 %v2842, %v2841
        %v2846 = vsel %vm1704, %v2527, 0
        %2848 = vmatprep.subr.bf16.mxu0 0
        %2849 = vmatpush1.bf16.msra.mxu0 %v2843
        %2850 = vmatprep.subr.bf16.mxu0 0
        %2851 = vmatpush1.bf16.msra.mxu0 0
        %2852 = vmatprep.subr.bf16.mxu0 0
        %2853 = vmatpush1.bf16.msra.mxu0 0
        %2854 = vmatprep.subr.bf16.mxu0 0
        %2855 = vmatpush1.bf16.msra.mxu0 0
        %2856 = vmatprep.subr.bf16.mxu0 0
        %2857 = vmatpush1.bf16.msra.mxu0 0
        %2858 = vmatprep.subr.bf16.mxu0 0
        %2859 = vmatpush1.bf16.msra.mxu0 0
        %2860 = vmatprep.subr.bf16.mxu0 0
        %2861 = vmatpush1.bf16.msra.mxu0 0
        %2862 = vmatprep.subr.bf16.mxu0 0
        %2863 = vmatpush1.bf16.msra.mxu0 0
        %2864 = vmatprep.subr.bf16.mxu0 0
        %2865 = vmatpush1.bf16.msra.mxu0 0
        %2866 = vmatprep.subr.bf16.mxu0 0
        %2867 = vmatpush1.bf16.msra.mxu0 0
        %2868 = vmatprep.subr.bf16.mxu0 0
        %2869 = vmatpush1.bf16.msra.mxu0 0
        %2870 = vmatprep.subr.bf16.mxu0 0
        %2871 = vmatpush1.bf16.msra.mxu0 0
        %2872 = vmatprep.subr.bf16.mxu0 0
        %2873 = vmatpush1.bf16.msra.mxu0 0
        %2874 = vmatprep.subr.bf16.mxu0 0
        %2875 = vmatpush1.bf16.msra.mxu0 0
        %2876 = vmatprep.subr.bf16.mxu0 0
        %2877 = vmatpush1.bf16.msra.mxu0 0
        %2878 = vmatprep.subr.bf16.mxu0 0
        %2879 = vmatpush1.bf16.msra.mxu0 0
        %2880 = vmatprep.mubr.bf16.mxu0 0
        %2881 = vmatmul.mubr.bf16.gmra.mrb[0].mxu0 %v2846
        %v2882 = vpop.f32.mrb[0].mxu0
        %v2883 = vadd.f32 0.0, %v2882
        %v2884 = vpop.f32.mrb[0].mxu0
        %v2885 = vpop.f32.mrb[0].mxu0
        %v2886 = vpop.f32.mrb[0].mxu0
        %2887 = vdwg.mxu0
        %v2890 = vunpack.c.l.b16 %v2543
        %v2891 = vunpack.c.l.b16 %v2544
        %v2892 = vpack.c.b16 %v2891, %v2890
        %v2895 = vsel %vm1704, %v2528, 0
        %2897 = vmatprep.subr.bf16.mxu0 0
        %2898 = vmatpush1.bf16.msra.mxu0 %v2892
        %2899 = vmatprep.subr.bf16.mxu0 0
        %2900 = vmatpush1.bf16.msra.mxu0 0
        %2901 = vmatprep.subr.bf16.mxu0 0
        %2902 = vmatpush1.bf16.msra.mxu0 0
        %2903 = vmatprep.subr.bf16.mxu0 0
        %2904 = vmatpush1.bf16.msra.mxu0 0
        %2905 = vmatprep.subr.bf16.mxu0 0
        %2906 = vmatpush1.bf16.msra.mxu0 0
        %2907 = vmatprep.subr.bf16.mxu0 0
        %2908 = vmatpush1.bf16.msra.mxu0 0
        %2909 = vmatprep.subr.bf16.mxu0 0
        %2910 = vmatpush1.bf16.msra.mxu0 0
        %2911 = vmatprep.subr.bf16.mxu0 0
        %2912 = vmatpush1.bf16.msra.mxu0 0
        %2913 = vmatprep.subr.bf16.mxu0 0
        %2914 = vmatpush1.bf16.msra.mxu0 0
        %2915 = vmatprep.subr.bf16.mxu0 0
        %2916 = vmatpush1.bf16.msra.mxu0 0
        %2917 = vmatprep.subr.bf16.mxu0 0
        %2918 = vmatpush1.bf16.msra.mxu0 0
        %2919 = vmatprep.subr.bf16.mxu0 0
        %2920 = vmatpush1.bf16.msra.mxu0 0
        %2921 = vmatprep.subr.bf16.mxu0 0
        %2922 = vmatpush1.bf16.msra.mxu0 0
        %2923 = vmatprep.subr.bf16.mxu0 0
        %2924 = vmatpush1.bf16.msra.mxu0 0
        %2925 = vmatprep.subr.bf16.mxu0 0
        %2926 = vmatpush1.bf16.msra.mxu0 0
        %2927 = vmatprep.subr.bf16.mxu0 0
        %2928 = vmatpush1.bf16.msra.mxu0 0
        %2929 = vmatprep.mubr.bf16.mxu0 0
        %2930 = vmatmul.mubr.bf16.gmra.mrb[0].mxu0 %v2895
        %v2931 = vpop.f32.mrb[0].mxu0
        %v2932 = vadd.f32 0.0, %v2931
        %v2933 = vpop.f32.mrb[0].mxu0
        %v2934 = vpop.f32.mrb[0].mxu0
        %v2935 = vpop.f32.mrb[0].mxu0
        %2936 = vdwg.mxu0
        %v2937 = vadd.f32 %v2589, %v2638
        %v2938 = vadd.f32 %v2937, %v2687
        %v2939 = vadd.f32 %v2938, %v2736
        %v2940 = vadd.f32 %v2939, %v2785
        %v2941 = vadd.f32 %v2940, %v2834
        %v2942 = vadd.f32 %v2941, %v2883
        %v2943 = vadd.f32 %v2942, %v2932
        %v2945 = vlaneseq
        %v2946 = vshrl.u32 %v2945, 7
        %v2947 = vsub.s32 0, %v2946
        %v2948 = vrot.slane %v488, %v2947
        %v2950 = vadd.f32 %v2943, %v2948
        %v2951 = vadd.f32 %v841, %v2950
        %2952 = vadd.xlane.f32.xlu0 %v2951
        %v2953 = vpop.xlane.xlu0 %2952
        %v2954 = vmul.f32 %v2953, %v494
        %v2955 = vsub.f32 %v2951, %v2954
        %v2956 = vmul.f32 %v2955, %v2955
        %2957 = vadd.xlane.f32.xlu0 %v2956
        %v2958 = vpop.xlane.xlu0 %2957
        %v2959 = vmul.f32 %v2958, %v494
        %v2960 = vadd.f32 %v2959, 1e-05
        %v2961 = vrsqrt.pop %v2960
        %v2962 = vmul.f32 %v2955, %v2961
        %v2964 = vlaneseq
        %v2965 = vshrl.u32 %v2964, 7
        %v2966 = vsub.s32 0, %v2965
        %v2967 = vrot.slane %v486, %v2966
        %v2969 = vmul.f32 %v2962, %v2967
        %v2971 = vlaneseq
        %v2972 = vshrl.u32 %v2971, 7
        %v2973 = vsub.s32 0, %v2972
        %v2974 = vrot.slane %v487, %v2973
        %v2976 = vadd.f32 %v2969, %v2974
        %v2977 = vpack.c.bf16 %v2976, %v2976
        %v2978 = vld [vmem:[%s9] sm:$0xff]
        %v2979 = vld [vmem:[%s9 + $0x8] sm:$0xff]
        %v2980 = vld [vmem:[%s9 + $0x10] sm:$0xff]
        %v2981 = vld [vmem:[%s9 + $0x18] sm:$0xff]
        %v2982 = vld [vmem:[%s9 + $0x20] sm:$0xff]
        %v2983 = vld [vmem:[%s9 + $0x28] sm:$0xff]
        %v2984 = vld [vmem:[%s9 + $0x30] sm:$0xff]
        %v2985 = vld [vmem:[%s9 + $0x38] sm:$0xff]
        %v2986 = vld [vmem:[%s9 + $0x40] sm:$0xff]
        %v2987 = vld [vmem:[%s9 + $0x48] sm:$0xff]
        %v2988 = vld [vmem:[%s9 + $0x50] sm:$0xff]
        %v2989 = vld [vmem:[%s9 + $0x58] sm:$0xff]
        %v2990 = vld [vmem:[%s9 + $0x60] sm:$0xff]
        %v2991 = vld [vmem:[%s9 + $0x68] sm:$0xff]
        %v2992 = vld [vmem:[%s9 + $0x70] sm:$0xff]
        %v2993 = vld [vmem:[%s9 + $0x78] sm:$0xff]
        %v2994 = vld [vmem:[%s9 + $0x80] sm:$0xff]
        %v2995 = vld [vmem:[%s9 + $0x88] sm:$0xff]
        %v2996 = vld [vmem:[%s9 + $0x90] sm:$0xff]
        %v2997 = vld [vmem:[%s9 + $0x98] sm:$0xff]
        %v2998 = vld [vmem:[%s9 + $0xa0] sm:$0xff]
        %v2999 = vld [vmem:[%s9 + $0xa8] sm:$0xff]
        %v3000 = vld [vmem:[%s9 + $0xb0] sm:$0xff]
        %v3001 = vld [vmem:[%s9 + $0xb8] sm:$0xff]
        %v3002 = vld [vmem:[%s9 + $0xc0] sm:$0xff]
        %v3003 = vld [vmem:[%s9 + $0xc8] sm:$0xff]
        %v3004 = vld [vmem:[%s9 + $0xd0] sm:$0xff]
        %v3005 = vld [vmem:[%s9 + $0xd8] sm:$0xff]
        %v3006 = vld [vmem:[%s9 + $0xe0] sm:$0xff]
        %v3007 = vld [vmem:[%s9 + $0xe8] sm:$0xff]
        %v3008 = vld [vmem:[%s9 + $0xf0] sm:$0xff]
        %v3009 = vld [vmem:[%s9 + $0xf8] sm:$0xff]
        %v3011 = vlaneseq
        %v3012 = vshrl.u32 %v3011, 7
        %v3013 = vsub.s32 0, %v3012
        %v3014 = vrot.slane %v489, %v3013
        %v3015 = vlaneseq
        %v3016 = vshrl.u32 %v3015, 7
        %v3017 = vsub.s32 1, %v3016
        %v3018 = vrot.slane %v489, %v3017
        %v3019 = vlaneseq
        %v3020 = vshrl.u32 %v3019, 7
        %v3021 = vsub.s32 2, %v3020
        %v3022 = vrot.slane %v489, %v3021
        %v3023 = vlaneseq
        %v3024 = vshrl.u32 %v3023, 7
        %v3025 = vsub.s32 3, %v3024
        %v3026 = vrot.slane %v489, %v3025
        %v3063 = vunpack.c.l.b16 %v2978
        %v3064 = vunpack.c.h.b16 %v2978
        %v3065 = vunpack.c.l.b16 %v2979
        %v3066 = vunpack.c.h.b16 %v2979
        %v3067 = vunpack.c.l.b16 %v2980
        %v3068 = vunpack.c.h.b16 %v2980
        %v3069 = vunpack.c.l.b16 %v2981
        %v3070 = vunpack.c.h.b16 %v2981
        %v3071 = vunpack.c.l.b16 %v2982
        %v3072 = vunpack.c.h.b16 %v2982
        %v3073 = vunpack.c.l.b16 %v2983
        %v3074 = vunpack.c.h.b16 %v2983
        %v3075 = vunpack.c.l.b16 %v2984
        %v3076 = vunpack.c.h.b16 %v2984
        %v3077 = vunpack.c.l.b16 %v2985
        %v3078 = vunpack.c.h.b16 %v2985
        %v3079 = vunpack.c.l.b16 %v2986
        %v3080 = vunpack.c.h.b16 %v2986
        %v3081 = vunpack.c.l.b16 %v2987
        %v3082 = vunpack.c.h.b16 %v2987
        %v3083 = vunpack.c.l.b16 %v2988
        %v3084 = vunpack.c.h.b16 %v2988
        %v3085 = vunpack.c.l.b16 %v2989
        %v3086 = vunpack.c.h.b16 %v2989
        %v3087 = vunpack.c.l.b16 %v2990
        %v3088 = vunpack.c.h.b16 %v2990
        %v3089 = vunpack.c.l.b16 %v2991
        %v3090 = vunpack.c.h.b16 %v2991
        %v3091 = vunpack.c.l.b16 %v2992
        %v3092 = vunpack.c.h.b16 %v2992
        %v3093 = vunpack.c.l.b16 %v2993
        %v3094 = vunpack.c.h.b16 %v2993
        %v3095 = vunpack.c.l.b16 %v2994
        %v3096 = vunpack.c.h.b16 %v2994
        %v3097 = vunpack.c.l.b16 %v2995
        %v3098 = vunpack.c.h.b16 %v2995
        %v3099 = vunpack.c.l.b16 %v2996
        %v3100 = vunpack.c.h.b16 %v2996
        %v3101 = vunpack.c.l.b16 %v2997
        %v3102 = vunpack.c.h.b16 %v2997
        %v3103 = vunpack.c.l.b16 %v2998
        %v3104 = vunpack.c.h.b16 %v2998
        %v3105 = vunpack.c.l.b16 %v2999
        %v3106 = vunpack.c.h.b16 %v2999
        %v3107 = vunpack.c.l.b16 %v3000
        %v3108 = vunpack.c.h.b16 %v3000
        %v3109 = vunpack.c.l.b16 %v3001
        %v3110 = vunpack.c.h.b16 %v3001
        %v3111 = vunpack.c.l.b16 %v3002
        %v3112 = vunpack.c.h.b16 %v3002
        %v3113 = vunpack.c.l.b16 %v3003
        %v3114 = vunpack.c.h.b16 %v3003
        %v3115 = vunpack.c.l.b16 %v3004
        %v3116 = vunpack.c.h.b16 %v3004
        %v3117 = vunpack.c.l.b16 %v3005
        %v3118 = vunpack.c.h.b16 %v3005
        %v3119 = vunpack.c.l.b16 %v3006
        %v3120 = vunpack.c.h.b16 %v3006
        %v3121 = vunpack.c.l.b16 %v3007
        %v3122 = vunpack.c.h.b16 %v3007
        %v3123 = vunpack.c.l.b16 %v3008
        %v3124 = vunpack.c.h.b16 %v3008
        %v3125 = vunpack.c.l.b16 %v3009
        %v3126 = vunpack.c.h.b16 %v3009
        %v3127 = vpack.c.b16 %v3067, %v3063
        %v3128 = vpack.c.b16 %v3068, %v3064
        %v3129 = vpack.c.b16 %v3069, %v3065
        %v3130 = vpack.c.b16 %v3070, %v3066
        %v3131 = vpack.c.b16 %v3075, %v3071
        %v3132 = vpack.c.b16 %v3076, %v3072
        %v3133 = vpack.c.b16 %v3077, %v3073
        %v3134 = vpack.c.b16 %v3078, %v3074
        %v3135 = vpack.c.b16 %v3083, %v3079
        %v3136 = vpack.c.b16 %v3084, %v3080
        %v3137 = vpack.c.b16 %v3085, %v3081
        %v3138 = vpack.c.b16 %v3086, %v3082
        %v3139 = vpack.c.b16 %v3091, %v3087
        %v3140 = vpack.c.b16 %v3092, %v3088
        %v3141 = vpack.c.b16 %v3093, %v3089
        %v3142 = vpack.c.b16 %v3094, %v3090
        %v3143 = vpack.c.b16 %v3099, %v3095
        %v3144 = vpack.c.b16 %v3100, %v3096
        %v3145 = vpack.c.b16 %v3101, %v3097
        %v3146 = vpack.c.b16 %v3102, %v3098
        %v3147 = vpack.c.b16 %v3107, %v3103
        %v3148 = vpack.c.b16 %v3108, %v3104
        %v3149 = vpack.c.b16 %v3109, %v3105
        %v3150 = vpack.c.b16 %v3110, %v3106
        %v3151 = vpack.c.b16 %v3115, %v3111
        %v3152 = vpack.c.b16 %v3116, %v3112
        %v3153 = vpack.c.b16 %v3117, %v3113
        %v3154 = vpack.c.b16 %v3118, %v3114
        %v3155 = vpack.c.b16 %v3123, %v3119
        %v3156 = vpack.c.b16 %v3124, %v3120
        %v3157 = vpack.c.b16 %v3125, %v3121
        %v3158 = vpack.c.b16 %v3126, %v3122
        %3191 = vmatprep.subr.bf16.mxu0 %v3128
        %3192 = vmatpush1.bf16.msra.mxu0 %v3127
        %3193 = vmatprep.subr.bf16.mxu0 %v3132
        %3194 = vmatpush1.bf16.msra.mxu0 %v3131
        %3195 = vmatprep.subr.bf16.mxu0 %v3136
        %3196 = vmatpush1.bf16.msra.mxu0 %v3135
        %3197 = vmatprep.subr.bf16.mxu0 %v3140
        %3198 = vmatpush1.bf16.msra.mxu0 %v3139
        %3199 = vmatprep.subr.bf16.mxu0 %v3144
        %3200 = vmatpush1.bf16.msra.mxu0 %v3143
        %3201 = vmatprep.subr.bf16.mxu0 %v3148
        %3202 = vmatpush1.bf16.msra.mxu0 %v3147
        %3203 = vmatprep.subr.bf16.mxu0 %v3152
        %3204 = vmatpush1.bf16.msra.mxu0 %v3151
        %3205 = vmatprep.subr.bf16.mxu0 %v3156
        %3206 = vmatpush1.bf16.msra.mxu0 %v3155
        %3207 = vmatprep.subr.bf16.mxu0 0
        %3208 = vmatpush1.bf16.msra.mxu0 0
        %3209 = vmatprep.subr.bf16.mxu0 0
        %3210 = vmatpush1.bf16.msra.mxu0 0
        %3211 = vmatprep.subr.bf16.mxu0 0
        %3212 = vmatpush1.bf16.msra.mxu0 0
        %3213 = vmatprep.subr.bf16.mxu0 0
        %3214 = vmatpush1.bf16.msra.mxu0 0
        %3215 = vmatprep.subr.bf16.mxu0 0
        %3216 = vmatpush1.bf16.msra.mxu0 0
        %3217 = vmatprep.subr.bf16.mxu0 0
        %3218 = vmatpush1.bf16.msra.mxu0 0
        %3219 = vmatprep.subr.bf16.mxu0 0
        %3220 = vmatpush1.bf16.msra.mxu0 0
        %3221 = vmatprep.subr.bf16.mxu0 0
        %3222 = vmatpush1.bf16.msra.mxu0 0
        %3223 = vmatprep.mubr.bf16.mxu0 0
        %3224 = vmatmul.mubr.bf16.gmra.mrb[0].mxu0 %v2977
        %v3225 = vpop.f32.mrb[0].mxu0
        %v3226 = vadd.f32 %v3014, %v3225
        %v3227 = vpop.f32.mrb[0].mxu0
        %v3228 = vadd.f32 %v3018, %v3227
        %v3229 = vpop.f32.mrb[0].mxu0
        %v3230 = vpop.f32.mrb[0].mxu0
        %3231 = vdwg.mxu0
        %3232 = vmatprep.subr.bf16.mxu0 %v3130
        %3233 = vmatpush1.bf16.msra.mxu0 %v3129
        %3234 = vmatprep.subr.bf16.mxu0 %v3134
        %3235 = vmatpush1.bf16.msra.mxu0 %v3133
        %3236 = vmatprep.subr.bf16.mxu0 %v3138
        %3237 = vmatpush1.bf16.msra.mxu0 %v3137
        %3238 = vmatprep.subr.bf16.mxu0 %v3142
        %3239 = vmatpush1.bf16.msra.mxu0 %v3141
        %3240 = vmatprep.subr.bf16.mxu0 %v3146
        %3241 = vmatpush1.bf16.msra.mxu0 %v3145
        %3242 = vmatprep.subr.bf16.mxu0 %v3150
        %3243 = vmatpush1.bf16.msra.mxu0 %v3149
        %3244 = vmatprep.subr.bf16.mxu0 %v3154
        %3245 = vmatpush1.bf16.msra.mxu0 %v3153
        %3246 = vmatprep.subr.bf16.mxu0 %v3158
        %3247 = vmatpush1.bf16.msra.mxu0 %v3157
        %3248 = vmatprep.subr.bf16.mxu0 0
        %3249 = vmatpush1.bf16.msra.mxu0 0
        %3250 = vmatprep.subr.bf16.mxu0 0
        %3251 = vmatpush1.bf16.msra.mxu0 0
        %3252 = vmatprep.subr.bf16.mxu0 0
        %3253 = vmatpush1.bf16.msra.mxu0 0
        %3254 = vmatprep.subr.bf16.mxu0 0
        %3255 = vmatpush1.bf16.msra.mxu0 0
        %3256 = vmatprep.subr.bf16.mxu0 0
        %3257 = vmatpush1.bf16.msra.mxu0 0
        %3258 = vmatprep.subr.bf16.mxu0 0
        %3259 = vmatpush1.bf16.msra.mxu0 0
        %3260 = vmatprep.subr.bf16.mxu0 0
        %3261 = vmatpush1.bf16.msra.mxu0 0
        %3262 = vmatprep.subr.bf16.mxu0 0
        %3263 = vmatpush1.bf16.msra.mxu0 0
        %3264 = vmatprep.mubr.bf16.mxu0 0
        %3265 = vmatmul.mubr.bf16.gmra.mrb[0].mxu0 %v2977
        %v3266 = vpop.f32.mrb[0].mxu0
        %v3267 = vadd.f32 %v3022, %v3266
        %v3268 = vpop.f32.mrb[0].mxu0
        %v3269 = vadd.f32 %v3026, %v3268
        %v3270 = vpop.f32.mrb[0].mxu0
        %v3271 = vpop.f32.mrb[0].mxu0
        %3272 = vdwg.mxu0
        %v3273 = vmul.f32 %v3226, 0.5
        %v3274 = vmul.f32 %v3228, 0.5
        %v3275 = vmul.f32 %v3267, 0.5
        %v3276 = vmul.f32 %v3269, 0.5
        %v3277 = vmul.f32 %v3226, 0.70710677
        %v3278 = vmul.f32 %v3228, 0.70710677
        %v3279 = vmul.f32 %v3267, 0.70710677
        %v3280 = vmul.f32 %v3269, 0.70710677
        %vm3281 = vcmp.ge.f32.partialorder %v3277, 0.0
        %vm3282 = vcmp.ge.f32.partialorder %v3278, 0.0
        %vm3283 = vcmp.ge.f32.partialorder %v3279, 0.0
        %vm3284 = vcmp.ge.f32.partialorder %v3280, 0.0
        %v3285 = vsel %vm3281, 1.0, -1.0
        %v3286 = vsel %vm3282, 1.0, -1.0
        %v3287 = vsel %vm3283, 1.0, -1.0
        %v3288 = vsel %vm3284, 1.0, -1.0
        %v3289 = vand.u32 2147483647, %v3277
        %v3290 = vand.u32 2147483647, %v3278
        %v3291 = vand.u32 2147483647, %v3279
        %v3292 = vand.u32 2147483647, %v3280
        %v3293 = vmul.f32 %v3289, 0.3275911
        %v3294 = vmul.f32 %v3290, 0.3275911
        %v3295 = vmul.f32 %v3291, 0.3275911
        %v3296 = vmul.f32 %v3292, 0.3275911
        %v3297 = vadd.f32 %v3293, 1.0
        %v3298 = vadd.f32 %v3294, 1.0
        %v3299 = vadd.f32 %v3295, 1.0
        %v3300 = vadd.f32 %v3296, 1.0
        %v3301 = vrcp.pop %v3297
        %v3302 = vmul.f32 1.0, %v3301
        %v3303 = vrcp.pop %v3298
        %v3304 = vmul.f32 1.0, %v3303
        %v3305 = vrcp.pop %v3299
        %v3306 = vmul.f32 1.0, %v3305
        %v3307 = vrcp.pop %v3300
        %v3308 = vmul.f32 1.0, %v3307
        %v3309 = vmul.f32 %v3302, 1.0614054
        %v3310 = vmul.f32 %v3304, 1.0614054
        %v3311 = vmul.f32 %v3306, 1.0614054
        %v3312 = vmul.f32 %v3308, 1.0614054
        %v3313 = vadd.f32 %v3309, -1.4531521
        %v3314 = vadd.f32 %v3310, -1.4531521
        %v3315 = vadd.f32 %v3311, -1.4531521
        %v3316 = vadd.f32 %v3312, -1.4531521
        %v3317 = vmul.f32 %v3313, %v3302
        %v3318 = vmul.f32 %v3314, %v3304
        %v3319 = vmul.f32 %v3315, %v3306
        %v3320 = vmul.f32 %v3316, %v3308
        %v3321 = vadd.f32 %v3317, 1.4214138
        %v3322 = vadd.f32 %v3318, 1.4214138
        %v3323 = vadd.f32 %v3319, 1.4214138
        %v3324 = vadd.f32 %v3320, 1.4214138
        %v3325 = vmul.f32 %v3321, %v3302
        %v3326 = vmul.f32 %v3322, %v3304
        %v3327 = vmul.f32 %v3323, %v3306
        %v3328 = vmul.f32 %v3324, %v3308
        %v3329 = vadd.f32 %v3325, -0.28449672
        %v3330 = vadd.f32 %v3326, -0.28449672
        %v3331 = vadd.f32 %v3327, -0.28449672
        %v3332 = vadd.f32 %v3328, -0.28449672
        %v3333 = vmul.f32 %v3329, %v3302
        %v3334 = vmul.f32 %v3330, %v3304
        %v3335 = vmul.f32 %v3331, %v3306
        %v3336 = vmul.f32 %v3332, %v3308
        %v3337 = vadd.f32 %v3333, 0.2548296
        %v3338 = vadd.f32 %v3334, 0.2548296
        %v3339 = vadd.f32 %v3335, 0.2548296
        %v3340 = vadd.f32 %v3336, 0.2548296
        %v3341 = vmul.f32 %v3337, %v3302
        %v3342 = vmul.f32 %v3338, %v3304
        %v3343 = vmul.f32 %v3339, %v3306
        %v3344 = vmul.f32 %v3340, %v3308
        %v3345 = vsub.f32 0.0, %v3289
        %v3346 = vsub.f32 0.0, %v3290
        %v3347 = vsub.f32 0.0, %v3291
        %v3348 = vsub.f32 0.0, %v3292
        %v3349 = vmul.f32 %v3345, %v3289
        %v3350 = vmul.f32 %v3346, %v3290
        %v3351 = vmul.f32 %v3347, %v3291
        %v3352 = vmul.f32 %v3348, %v3292
        %v3353 = vmul.f32 %v3349, 1.442695
        %v3354 = vpow.pop %v3353
        %v3355 = vmul.f32 %v3350, 1.442695
        %v3356 = vpow.pop %v3355
        %v3357 = vmul.f32 %v3351, 1.442695
        %v3358 = vpow.pop %v3357
        %v3359 = vmul.f32 %v3352, 1.442695
        %v3360 = vpow.pop %v3359
        %v3361 = vmul.f32 %v3341, %v3354
        %v3362 = vmul.f32 %v3342, %v3356
        %v3363 = vmul.f32 %v3343, %v3358
        %v3364 = vmul.f32 %v3344, %v3360
        %v3365 = vsub.f32 1.0, %v3361
        %v3366 = vsub.f32 1.0, %v3362
        %v3367 = vsub.f32 1.0, %v3363
        %v3368 = vsub.f32 1.0, %v3364
        %v3369 = vmul.f32 %v3285, %v3365
        %v3370 = vmul.f32 %v3286, %v3366
        %v3371 = vmul.f32 %v3287, %v3367
        %v3372 = vmul.f32 %v3288, %v3368
        %v3373 = vadd.f32 %v3369, 1.0
        %v3374 = vadd.f32 %v3370, 1.0
        %v3375 = vadd.f32 %v3371, 1.0
        %v3376 = vadd.f32 %v3372, 1.0
        %v3377 = vmul.f32 %v3273, %v3373
        %v3378 = vmul.f32 %v3274, %v3374
        %v3379 = vmul.f32 %v3275, %v3375
        %v3380 = vmul.f32 %v3276, %v3376
        %v3381 = vpack.c.bf16 %v3377, %v3377
        %v3382 = vpack.c.bf16 %v3378, %v3378
        %v3383 = vpack.c.bf16 %v3379, %v3379
        %v3384 = vpack.c.bf16 %v3380, %v3380
        %v3385 = vld [vmem:[%s11] sm:$0xf]
        %v3386 = vld [vmem:[%s11 + $0x4] sm:$0xf]
        %v3387 = vld [vmem:[%s11 + $0x8] sm:$0xf]
        %v3388 = vld [vmem:[%s11 + $0xc] sm:$0xf]
        %v3389 = vld [vmem:[%s11 + $0x10] sm:$0xf]
        %v3390 = vld [vmem:[%s11 + $0x14] sm:$0xf]
        %v3391 = vld [vmem:[%s11 + $0x18] sm:$0xf]
        %v3392 = vld [vmem:[%s11 + $0x1c] sm:$0xf]
        %v3393 = vld [vmem:[%s11 + $0x20] sm:$0xf]
        %v3394 = vld [vmem:[%s11 + $0x24] sm:$0xf]
        %v3395 = vld [vmem:[%s11 + $0x28] sm:$0xf]
        %v3396 = vld [vmem:[%s11 + $0x2c] sm:$0xf]
        %v3397 = vld [vmem:[%s11 + $0x30] sm:$0xf]
        %v3398 = vld [vmem:[%s11 + $0x34] sm:$0xf]
        %v3399 = vld [vmem:[%s11 + $0x38] sm:$0xf]
        %v3400 = vld [vmem:[%s11 + $0x3c] sm:$0xf]
        %v3401 = vld [vmem:[%s11 + $0x40] sm:$0xf]
        %v3402 = vld [vmem:[%s11 + $0x44] sm:$0xf]
        %v3403 = vld [vmem:[%s11 + $0x48] sm:$0xf]
        %v3404 = vld [vmem:[%s11 + $0x4c] sm:$0xf]
        %v3405 = vld [vmem:[%s11 + $0x50] sm:$0xf]
        %v3406 = vld [vmem:[%s11 + $0x54] sm:$0xf]
        %v3407 = vld [vmem:[%s11 + $0x58] sm:$0xf]
        %v3408 = vld [vmem:[%s11 + $0x5c] sm:$0xf]
        %v3409 = vld [vmem:[%s11 + $0x60] sm:$0xf]
        %v3410 = vld [vmem:[%s11 + $0x64] sm:$0xf]
        %v3411 = vld [vmem:[%s11 + $0x68] sm:$0xf]
        %v3412 = vld [vmem:[%s11 + $0x6c] sm:$0xf]
        %v3413 = vld [vmem:[%s11 + $0x70] sm:$0xf]
        %v3414 = vld [vmem:[%s11 + $0x74] sm:$0xf]
        %v3415 = vld [vmem:[%s11 + $0x78] sm:$0xf]
        %v3416 = vld [vmem:[%s11 + $0x7c] sm:$0xf]
        %v3417 = vld [vmem:[%s11 + $0x80] sm:$0xf]
        %v3418 = vld [vmem:[%s11 + $0x84] sm:$0xf]
        %v3419 = vld [vmem:[%s11 + $0x88] sm:$0xf]
        %v3420 = vld [vmem:[%s11 + $0x8c] sm:$0xf]
        %v3421 = vld [vmem:[%s11 + $0x90] sm:$0xf]
        %v3422 = vld [vmem:[%s11 + $0x94] sm:$0xf]
        %v3423 = vld [vmem:[%s11 + $0x98] sm:$0xf]
        %v3424 = vld [vmem:[%s11 + $0x9c] sm:$0xf]
        %v3425 = vld [vmem:[%s11 + $0xa0] sm:$0xf]
        %v3426 = vld [vmem:[%s11 + $0xa4] sm:$0xf]
        %v3427 = vld [vmem:[%s11 + $0xa8] sm:$0xf]
        %v3428 = vld [vmem:[%s11 + $0xac] sm:$0xf]
        %v3429 = vld [vmem:[%s11 + $0xb0] sm:$0xf]
        %v3430 = vld [vmem:[%s11 + $0xb4] sm:$0xf]
        %v3431 = vld [vmem:[%s11 + $0xb8] sm:$0xf]
        %v3432 = vld [vmem:[%s11 + $0xbc] sm:$0xf]
        %v3433 = vld [vmem:[%s11 + $0xc0] sm:$0xf]
        %v3434 = vld [vmem:[%s11 + $0xc4] sm:$0xf]
        %v3435 = vld [vmem:[%s11 + $0xc8] sm:$0xf]
        %v3436 = vld [vmem:[%s11 + $0xcc] sm:$0xf]
        %v3437 = vld [vmem:[%s11 + $0xd0] sm:$0xf]
        %v3438 = vld [vmem:[%s11 + $0xd4] sm:$0xf]
        %v3439 = vld [vmem:[%s11 + $0xd8] sm:$0xf]
        %v3440 = vld [vmem:[%s11 + $0xdc] sm:$0xf]
        %v3441 = vld [vmem:[%s11 + $0xe0] sm:$0xf]
        %v3442 = vld [vmem:[%s11 + $0xe4] sm:$0xf]
        %v3443 = vld [vmem:[%s11 + $0xe8] sm:$0xf]
        %v3444 = vld [vmem:[%s11 + $0xec] sm:$0xf]
        %v3445 = vld [vmem:[%s11 + $0xf0] sm:$0xf]
        %v3446 = vld [vmem:[%s11 + $0xf4] sm:$0xf]
        %v3447 = vld [vmem:[%s11 + $0xf8] sm:$0xf]
        %v3448 = vld [vmem:[%s11 + $0xfc] sm:$0xf]
        %v3450 = vlaneseq
        %v3451 = vshrl.u32 %v3450, 7
        %v3452 = vsub.s32 0, %v3451
        %v3453 = vrot.slane %v490, %v3452
        %v3519 = vunpack.c.l.b16 %v3385
        %v3520 = vunpack.c.l.b16 %v3386
        %v3521 = vunpack.c.l.b16 %v3387
        %v3522 = vunpack.c.l.b16 %v3388
        %v3523 = vunpack.c.l.b16 %v3389
        %v3524 = vunpack.c.l.b16 %v3390
        %v3525 = vunpack.c.l.b16 %v3391
        %v3526 = vunpack.c.l.b16 %v3392
        %v3527 = vunpack.c.l.b16 %v3393
        %v3528 = vunpack.c.l.b16 %v3394
        %v3529 = vunpack.c.l.b16 %v3395
        %v3530 = vunpack.c.l.b16 %v3396
        %v3531 = vunpack.c.l.b16 %v3397
        %v3532 = vunpack.c.l.b16 %v3398
        %v3533 = vunpack.c.l.b16 %v3399
        %v3534 = vunpack.c.l.b16 %v3400
        %v3535 = vunpack.c.l.b16 %v3401
        %v3536 = vunpack.c.l.b16 %v3402
        %v3537 = vunpack.c.l.b16 %v3403
        %v3538 = vunpack.c.l.b16 %v3404
        %v3539 = vunpack.c.l.b16 %v3405
        %v3540 = vunpack.c.l.b16 %v3406
        %v3541 = vunpack.c.l.b16 %v3407
        %v3542 = vunpack.c.l.b16 %v3408
        %v3543 = vunpack.c.l.b16 %v3409
        %v3544 = vunpack.c.l.b16 %v3410
        %v3545 = vunpack.c.l.b16 %v3411
        %v3546 = vunpack.c.l.b16 %v3412
        %v3547 = vunpack.c.l.b16 %v3413
        %v3548 = vunpack.c.l.b16 %v3414
        %v3549 = vunpack.c.l.b16 %v3415
        %v3550 = vunpack.c.l.b16 %v3416
        %v3551 = vunpack.c.l.b16 %v3417
        %v3552 = vunpack.c.l.b16 %v3418
        %v3553 = vunpack.c.l.b16 %v3419
        %v3554 = vunpack.c.l.b16 %v3420
        %v3555 = vunpack.c.l.b16 %v3421
        %v3556 = vunpack.c.l.b16 %v3422
        %v3557 = vunpack.c.l.b16 %v3423
        %v3558 = vunpack.c.l.b16 %v3424
        %v3559 = vunpack.c.l.b16 %v3425
        %v3560 = vunpack.c.l.b16 %v3426
        %v3561 = vunpack.c.l.b16 %v3427
        %v3562 = vunpack.c.l.b16 %v3428
        %v3563 = vunpack.c.l.b16 %v3429
        %v3564 = vunpack.c.l.b16 %v3430
        %v3565 = vunpack.c.l.b16 %v3431
        %v3566 = vunpack.c.l.b16 %v3432
        %v3567 = vunpack.c.l.b16 %v3433
        %v3568 = vunpack.c.l.b16 %v3434
        %v3569 = vunpack.c.l.b16 %v3435
        %v3570 = vunpack.c.l.b16 %v3436
        %v3571 = vunpack.c.l.b16 %v3437
        %v3572 = vunpack.c.l.b16 %v3438
        %v3573 = vunpack.c.l.b16 %v3439
        %v3574 = vunpack.c.l.b16 %v3440
        %v3575 = vunpack.c.l.b16 %v3441
        %v3576 = vunpack.c.l.b16 %v3442
        %v3577 = vunpack.c.l.b16 %v3443
        %v3578 = vunpack.c.l.b16 %v3444
        %v3579 = vunpack.c.l.b16 %v3445
        %v3580 = vunpack.c.l.b16 %v3446
        %v3581 = vunpack.c.l.b16 %v3447
        %v3582 = vunpack.c.l.b16 %v3448
        %v3583 = vpack.c.b16 %v3520, %v3519
        %v3584 = vpack.c.b16 %v3522, %v3521
        %v3585 = vpack.c.b16 %v3524, %v3523
        %v3586 = vpack.c.b16 %v3526, %v3525
        %v3587 = vpack.c.b16 %v3528, %v3527
        %v3588 = vpack.c.b16 %v3530, %v3529
        %v3589 = vpack.c.b16 %v3532, %v3531
        %v3590 = vpack.c.b16 %v3534, %v3533
        %v3591 = vpack.c.b16 %v3536, %v3535
        %v3592 = vpack.c.b16 %v3538, %v3537
        %v3593 = vpack.c.b16 %v3540, %v3539
        %v3594 = vpack.c.b16 %v3542, %v3541
        %v3595 = vpack.c.b16 %v3544, %v3543
        %v3596 = vpack.c.b16 %v3546, %v3545
        %v3597 = vpack.c.b16 %v3548, %v3547
        %v3598 = vpack.c.b16 %v3550, %v3549
        %v3599 = vpack.c.b16 %v3552, %v3551
        %v3600 = vpack.c.b16 %v3554, %v3553
        %v3601 = vpack.c.b16 %v3556, %v3555
        %v3602 = vpack.c.b16 %v3558, %v3557
        %v3603 = vpack.c.b16 %v3560, %v3559
        %v3604 = vpack.c.b16 %v3562, %v3561
        %v3605 = vpack.c.b16 %v3564, %v3563
        %v3606 = vpack.c.b16 %v3566, %v3565
        %v3607 = vpack.c.b16 %v3568, %v3567
        %v3608 = vpack.c.b16 %v3570, %v3569
        %v3609 = vpack.c.b16 %v3572, %v3571
        %v3610 = vpack.c.b16 %v3574, %v3573
        %v3611 = vpack.c.b16 %v3576, %v3575
        %v3612 = vpack.c.b16 %v3578, %v3577
        %v3613 = vpack.c.b16 %v3580, %v3579
        %v3614 = vpack.c.b16 %v3582, %v3581
        %3647 = vmatprep.subr.bf16.mxu0 0
        %3648 = vmatpush1.bf16.msra.mxu0 %v3583
        %3649 = vmatprep.subr.bf16.mxu0 0
        %3650 = vmatpush1.bf16.msra.mxu0 %v3584
        %3651 = vmatprep.subr.bf16.mxu0 0
        %3652 = vmatpush1.bf16.msra.mxu0 %v3585
        %3653 = vmatprep.subr.bf16.mxu0 0
        %3654 = vmatpush1.bf16.msra.mxu0 %v3586
        %3655 = vmatprep.subr.bf16.mxu0 0
        %3656 = vmatpush1.bf16.msra.mxu0 %v3587
        %3657 = vmatprep.subr.bf16.mxu0 0
        %3658 = vmatpush1.bf16.msra.mxu0 %v3588
        %3659 = vmatprep.subr.bf16.mxu0 0
        %3660 = vmatpush1.bf16.msra.mxu0 %v3589
        %3661 = vmatprep.subr.bf16.mxu0 0
        %3662 = vmatpush1.bf16.msra.mxu0 %v3590
        %3663 = vmatprep.subr.bf16.mxu0 0
        %3664 = vmatpush1.bf16.msra.mxu0 %v3591
        %3665 = vmatprep.subr.bf16.mxu0 0
        %3666 = vmatpush1.bf16.msra.mxu0 %v3592
        %3667 = vmatprep.subr.bf16.mxu0 0
        %3668 = vmatpush1.bf16.msra.mxu0 %v3593
        %3669 = vmatprep.subr.bf16.mxu0 0
        %3670 = vmatpush1.bf16.msra.mxu0 %v3594
        %3671 = vmatprep.subr.bf16.mxu0 0
        %3672 = vmatpush1.bf16.msra.mxu0 %v3595
        %3673 = vmatprep.subr.bf16.mxu0 0
        %3674 = vmatpush1.bf16.msra.mxu0 %v3596
        %3675 = vmatprep.subr.bf16.mxu0 0
        %3676 = vmatpush1.bf16.msra.mxu0 %v3597
        %3677 = vmatprep.subr.bf16.mxu0 0
        %3678 = vmatpush1.bf16.msra.mxu0 %v3598
        %3679 = vmatprep.mubr.bf16.mxu0 %v3382
        %3680 = vmatmul.mubr.bf16.gmra.mrb[0].mxu0 %v3381
        %v3681 = vpop.f32.mrb[0].mxu0
        %v3682 = vadd.f32 %v3453, %v3681
        %v3683 = vpop.f32.mrb[0].mxu0
        %v3684 = vpop.f32.mrb[0].mxu0
        %v3685 = vpop.f32.mrb[0].mxu0
        %3686 = vdwg.mxu0
        %3687 = vmatprep.subr.bf16.mxu0 0
        %3688 = vmatpush1.bf16.msra.mxu0 %v3599
        %3689 = vmatprep.subr.bf16.mxu0 0
        %3690 = vmatpush1.bf16.msra.mxu0 %v3600
        %3691 = vmatprep.subr.bf16.mxu0 0
        %3692 = vmatpush1.bf16.msra.mxu0 %v3601
        %3693 = vmatprep.subr.bf16.mxu0 0
        %3694 = vmatpush1.bf16.msra.mxu0 %v3602
        %3695 = vmatprep.subr.bf16.mxu0 0
        %3696 = vmatpush1.bf16.msra.mxu0 %v3603
        %3697 = vmatprep.subr.bf16.mxu0 0
        %3698 = vmatpush1.bf16.msra.mxu0 %v3604
        %3699 = vmatprep.subr.bf16.mxu0 0
        %3700 = vmatpush1.bf16.msra.mxu0 %v3605
        %3701 = vmatprep.subr.bf16.mxu0 0
        %3702 = vmatpush1.bf16.msra.mxu0 %v3606
        %3703 = vmatprep.subr.bf16.mxu0 0
        %3704 = vmatpush1.bf16.msra.mxu0 %v3607
        %3705 = vmatprep.subr.bf16.mxu0 0
        %3706 = vmatpush1.bf16.msra.mxu0 %v3608
        %3707 = vmatprep.subr.bf16.mxu0 0
        %3708 = vmatpush1.bf16.msra.mxu0 %v3609
        %3709 = vmatprep.subr.bf16.mxu0 0
        %3710 = vmatpush1.bf16.msra.mxu0 %v3610
        %3711 = vmatprep.subr.bf16.mxu0 0
        %3712 = vmatpush1.bf16.msra.mxu0 %v3611
        %3713 = vmatprep.subr.bf16.mxu0 0
        %3714 = vmatpush1.bf16.msra.mxu0 %v3612
        %3715 = vmatprep.subr.bf16.mxu0 0
        %3716 = vmatpush1.bf16.msra.mxu0 %v3613
        %3717 = vmatprep.subr.bf16.mxu0 0
        %3718 = vmatpush1.bf16.msra.mxu0 %v3614
        %3719 = vmatprep.mubr.bf16.mxu0 %v3384
        %3720 = vmatmul.mubr.bf16.gmra.mrb[0].mxu0 %v3383
        %v3721 = vpop.f32.mrb[0].mxu0
        %v3722 = vadd.f32 %v3682, %v3721
        %v3723 = vpop.f32.mrb[0].mxu0
        %v3724 = vpop.f32.mrb[0].mxu0
        %v3725 = vpop.f32.mrb[0].mxu0
        %3726 = vdwg.mxu0
        %v3727 = vadd.f32 %v2951, %v3722
        %3728 = vst [vmem:[%s482] sm:$0xff] %v3727
        %s3729 = sand.u32 %s317, 1
        %s3730 = scalar_lea.sflag [#allocation6], %s3729
        %s3731 = sand.u32 %s317, 1
        %s3732 = smul.addr %s3731, 8
        %s3733 = scalar_lea.vmem [#allocation10], %s3732
        // Predicated region
        $region85: #{tpu_custom_call.1} parent=71 // pred_check
          %p3734 = pneg %p327
        $region86: #{tpu_custom_call.1} parent=71 // pred_check_branch
          %3736 = sbr.rel (%p3734) target = $region88
        $region87: #{tpu_custom_call.1} parent=71 // pred_region
          %s3738 = ssub.s32 128, 128
          %3739 = vsyncadd %s3730, %s3738
          %s3740 = smul.addr %s31, 128
          %s3741 = scalar_lea.hbm %s13, %s3740
          %s3743 = sshll.u32 %s3733, 4
          %s3744 = int_to_ptr.vmem [resolvable:$true] %s3743
          %3746 = dma.vmem_to_hbm [thread:$0]  %s3744, 128, %s3741, %s3730
        $region88: #{tpu_custom_call.1} parent=71 // pred_fallthru
          _
      $region72: #{tpu_custom_call.1} parent=5 // pred_fallthru
        _
      %p3747 = scmp.le.s32.totalorder 2, %s26
      // Predicated region
      $region89: #{tpu_custom_call.1} parent=5 // pred_check
        %p3748 = pneg %p3747
      $region90: #{tpu_custom_call.1} parent=5 // pred_check_branch
        %3750 = sbr.rel (%p3748) target = $region92
      $region91: #{tpu_custom_call.1} parent=5 // pred_region
        %s3751 = ssub.s32 %s26, 2
        // Predicated region
        $region93: #{tpu_custom_call.1} parent=91 // pred_check
          %p3752 = pneg %p333
        $region94: #{tpu_custom_call.1} parent=91 // pred_check_branch
          %3754 = sbr.rel (%p3752) target = $region96
        $region95: #{tpu_custom_call.1} parent=91 // pred_region
          %s3755 = sand.u32 %s318, 1
          %s3756 = scalar_lea.sflag [#allocation6], %s3755
          %s3757 = sand.u32 %s318, 1
          %s3758 = smul.addr %s3757, 8
          %s3759 = scalar_lea.vmem [#allocation10], %s3758
          %3760 = dma.done %s3756, 128
        $region96: #{tpu_custom_call.1} parent=91 // pred_fallthru
          _
      $region92: #{tpu_custom_call.1} parent=5 // pred_fallthru
        _
    $region6: #{tpu_custom_call.1} parent=1 // loop_footer
      %s30 = sadd.s32 1, %s26
    $region7: #{tpu_custom_call.1} parent=1 // loop_footer_branch
      %25 = sbr.rel target = $region3
    $region8: #{tpu_custom_call.1} parent=1 // loop_exit
      _
    %3761 = vsyncpa [#allocation5], 1
    %s3762 = scalar_lea.sflag [#allocation5], 1
    %3763 = vsyncpa %s3762, 1
    %3764 = vsyncpa [#allocation8], 1
    %3765 = vsyncpa [#allocation6], 1
    %s3766 = scalar_lea.sflag [#allocation6], 1
    %3767 = vsyncpa %s3766, 1

</llo_original>
